<compile_context>
chip_gen: v6e
topology: v6e:2x2x1
jax: 0.10.0
libtpu: 0.0.40
codegen_flags: <defaults>
</compile_context>

<pallas_src>
import functools

import jax
import jax.numpy as jnp
from jax import lax
from jax.experimental import pallas as pl
from jax.experimental.pallas import tpu as pltpu

EPS = 1e-5  # nn.LayerNorm default eps


def _layernorm_f32(x, g, b):
    # single-pass statistics: E[x] and E[x^2] are independent reductions
    mu = jnp.mean(x, axis=-1, keepdims=True)
    ms = jnp.mean(x * x, axis=-1, keepdims=True)
    var = ms - mu * mu
    return (x - mu) * lax.rsqrt(var + EPS) * g + b


def transformer_block_kernel(
    x_ref, mask_ref,
    ln1_g_ref, ln1_b_ref,
    wqkv_ref, bqkv_ref, wo_ref, bo_ref,
    ln2_g_ref, ln2_b_ref,
    w1_ref, b1_ref, w2_ref, b2_ref,
    out_ref,
    attn_scr,
    *, num_heads,
):
    f32 = jnp.float32
    bf16 = jnp.bfloat16

    Bt, T, E = x_ref.shape
    dh = E // num_heads
    scale = 1.0 / (dh ** 0.5)
    R = Bt * T  # rows per grid step

    # residual stream, flattened to lane-dense (R, E) rows (leading-dim merge: layout-free)
    x = x_ref[...].reshape(R, E)

    # --- attention on norm1(x); LN stats in f32, MXU operands in bf16 ---
    h = _layernorm_f32(x, ln1_g_ref[0, :], ln1_b_ref[0, :]).astype(bf16)

    # fused QKV projection: one (R, E) @ (E, 3E) matmul, f32 accumulation
    qkv = jnp.dot(h, wqkv_ref[...], preferred_element_type=f32) + bqkv_ref[0, :]
    qb = (qkv[:, 0:E] * scale).astype(bf16)       # fold 1/sqrt(dh) into q once
    kb = qkv[:, E:2 * E].astype(bf16)
    vb = qkv[:, 2 * E:3 * E].astype(bf16)

    # additive key-mask bias per batch element, kept (Bt, T); per-b row broadcasts in the add
    bias_all = (mask_ref[...] - 1.0) * 1e9        # (Bt, T) f32

    for b in range(Bt):                           # static unroll (small Bt)
        rows = slice(b * T, (b + 1) * T)
        bias = bias_all[b:b + 1, :]               # (1, T) -> stride-0 sublane broadcast
        for hd in range(num_heads):               # static unroll (small H)
            sl = slice(hd * dh, (hd + 1) * dh)
            # q_h . k_h^T without a transpose: contract the last dims of both operands
            scores = lax.dot_general(
                qb[rows, sl], kb[rows, sl],
                (((1,), (1,)), ((), ())),
                preferred_element_type=f32,
            ) + bias                                              # (T, T) f32
            m = jnp.max(scores, axis=-1, keepdims=True)
            p = jnp.exp(scores - m)
            p = p * pl.reciprocal(jnp.sum(p, axis=-1, keepdims=True), approx=True)
            head = jnp.dot(p.astype(bf16), vb[rows, sl],
                           preferred_element_type=f32)            # (T, dh)
            # concat-free: store the head at its static lane offset in the scratch
            attn_scr[rows, sl] = head.astype(bf16)

    # single full-K output projection: (R, E) @ (E, E)
    attn = jnp.dot(attn_scr[...], wo_ref[...], preferred_element_type=f32) + bo_ref[0, :]

    # residual 1 (dropout p=0 -> identity)
    x = x + attn

    # --- feed-forward on norm2(x) ---
    h2 = _layernorm_f32(x, ln2_g_ref[0, :], ln2_b_ref[0, :]).astype(bf16)
    ff = jnp.dot(h2, w1_ref[...], preferred_element_type=f32) + b1_ref[0, :]
    ff = jnp.maximum(ff, 0.0).astype(bf16)
    ff = jnp.dot(ff, w2_ref[...], preferred_element_type=f32) + b2_ref[0, :]

    # residual 2 (dropout p=0 -> identity)
    out_ref[...] = (x + ff).reshape(Bt, T, E).astype(out_ref.dtype)


def transformer_block(x, attention_mask, params, *, num_heads, batch_block=None):
    B, T, E = x.shape
    assert E % num_heads == 0
    FF = params["w1"].shape[1]
    Bt = B if batch_block is None else batch_block
    assert B % Bt == 0

    bf16 = jnp.bfloat16
    # Host-side: fuse Q/K/V weights into one (E, 3E) matrix and cast matmul weights to bf16
    # (native MXU rate on v5e/v6e/v7x, half the resident VMEM).  Biases / LN params stay f32.
    wqkv = jnp.concatenate([params["wq"], params["wk"], params["wv"]], axis=1).astype(bf16)
    bqkv = jnp.concatenate([params["bq"], params["bk"], params["bv"]], axis=1)  # (1, 3E) f32
    wo = params["wo"].astype(bf16)
    w1 = params["w1"].astype(bf16)
    w2 = params["w2"].astype(bf16)

    const = lambda shape: pl.BlockSpec(shape, lambda b: (0, 0))
    in_specs = [
        pl.BlockSpec((Bt, T, E), lambda b: (b, 0, 0)),   # x
        pl.BlockSpec((Bt, T), lambda b: (b, 0)),         # mask
        const((1, E)), const((1, E)),                    # ln1 gamma / beta
        const((E, 3 * E)), const((1, 3 * E)),            # fused wqkv / bqkv
        const((E, E)), const((1, E)),                    # wo / bo
        const((1, E)), const((1, E)),                    # ln2 gamma / beta
        const((E, FF)), const((1, FF)),                  # ff w1 / b1
        const((FF, E)), const((1, E)),                   # ff w2 / b2
    ]
    # Weight blocks are grid-invariant (index_map constant), so Pallas skips re-fetching them.

    # Advisory cost estimate for XLA's scheduler.
    flops = B * (2 * T * E * (3 * E) + 2 * T * E * E + 4 * T * T * E + 4 * T * E * FF)
    transcendentals = B * num_heads * T * T
    bytes_accessed = (2 * B * T * E * 4 + B * T * 4
                      + (4 * E * E + 2 * E * FF) * 2 + (8 * E + FF) * 4)

    kernel = functools.partial(transformer_block_kernel, num_heads=num_heads)
    out = pl.pallas_call(
        kernel,
        out_shape=jax.ShapeDtypeStruct((B, T, E), x.dtype),
        grid_spec=pltpu.PrefetchScalarGridSpec(
            num_scalar_prefetch=0,
            grid=(B // Bt,),
            in_specs=in_specs,
            out_specs=pl.BlockSpec((Bt, T, E), lambda b: (b, 0, 0)),
            scratch_shapes=[pltpu.VMEM((Bt * T, E), jnp.bfloat16)],   # per-head output slab
        ),
        compiler_params=pltpu.CompilerParams(
            dimension_semantics=("parallel",),        # batch steps independent -> 2 TCs on v7x
            vmem_limit_bytes=48 * 1024 * 1024,        # < v7x 64 MiB physical; raise over defaults
        ),
        cost_estimate=pl.CostEstimate(
            flops=flops, transcendentals=transcendentals, bytes_accessed=bytes_accessed),
    )(
        x, attention_mask,
        params["ln1_g"], params["ln1_b"],
        wqkv, bqkv, wo, params["bo"],
        params["ln2_g"], params["ln2_b"],
        w1, params["b1"], w2, params["b2"],
    )
    return out, None   # (x, loss) — loss is None for plain-tensor attention


def transformer_block_ref(x, mask, params, *, num_heads):
    """Pure-JAX f32 reference (same math, standard softmax / divide)."""
    B, T, E = x.shape
    dh = E // num_heads

    def ln(v, g, b):
        mu = jnp.mean(v, axis=-1, keepdims=True)
        var = jnp.mean((v - mu) ** 2, axis=-1, keepdims=True)
        return (v - mu) * lax.rsqrt(var + EPS) * g + b

    h = ln(x, params["ln1_g"][0], params["ln1_b"][0])
    q = h @ params["wq"] + params["bq"][0]
    k = h @ params["wk"] + params["bk"][0]
    v = h @ params["wv"] + params["bv"][0]
    q = q.reshape(B, T, num_heads, dh).transpose(0, 2, 1, 3)
    k = k.reshape(B, T, num_heads, dh).transpose(0, 2, 1, 3)
    v = v.reshape(B, T, num_heads, dh).transpose(0, 2, 1, 3)
    scores = jnp.einsum("bhqd,bhkd->bhqk", q, k) / (dh ** 0.5)
    scores = scores + ((mask - 1.0) * 1e9)[:, None, None, :]
    p = jax.nn.softmax(scores, axis=-1)
    attn = jnp.einsum("bhqk,bhkd->bhqd", p, v).transpose(0, 2, 1, 3).reshape(B, T, E)
    attn = attn @ params["wo"] + params["bo"][0]
    x = x + attn
    h2 = ln(x, params["ln2_g"][0], params["ln2_b"][0])
    ff = jnp.maximum(h2 @ params["w1"] + params["b1"][0], 0.0)
    ff = ff @ params["w2"] + params["b2"][0]
    return x + ff


def make_params(key, emb, ff_hidden_mult, num_heads):
    assert emb % num_heads == 0
    ff = ff_hidden_mult * emb
    ks = jax.random.split(key, 6)
    scale = 0.02
    return {
        "ln1_g": jnp.ones((1, emb), jnp.float32),
        "ln1_b": jnp.zeros((1, emb), jnp.float32),
        "wq": scale * jax.random.normal(ks[0], (emb, emb), jnp.float32),
        "bq": jnp.zeros((1, emb), jnp.float32),
        "wk": scale * jax.random.normal(ks[1], (emb, emb), jnp.float32),
        "bk": jnp.zeros((1, emb), jnp.float32),
        "wv": scale * jax.random.normal(ks[2], (emb, emb), jnp.float32),
        "bv": jnp.zeros((1, emb), jnp.float32),
        "wo": scale * jax.random.normal(ks[3], (emb, emb), jnp.float32),
        "bo": jnp.zeros((1, emb), jnp.float32),
        "ln2_g": jnp.ones((1, emb), jnp.float32),
        "ln2_b": jnp.zeros((1, emb), jnp.float32),
        "w1": scale * jax.random.normal(ks[4], (emb, ff), jnp.float32),
        "b1": jnp.zeros((1, ff), jnp.float32),
        "w2": scale * jax.random.normal(ks[5], (ff, emb), jnp.float32),
        "b2": jnp.zeros((1, emb), jnp.float32),
    }


if __name__ == "__main__":
    # Small but lane-dense shapes (E multiple of 128).
    B, T, E = 2, 16, 128
    NUM_HEADS = 4
    FF_MULT = 4

    key = jax.random.PRNGKey(0)
    kx, kp = jax.random.split(key)

    x = jax.random.normal(kx, (B, T, E), jnp.float32)
    # mask: all keys valid except the last four keys of batch element 1
    attention_mask = jnp.ones((B, T), jnp.float32).at[1, -4:].set(0.0)

    params = make_params(kp, E, FF_MULT, NUM_HEADS)

    out, loss = transformer_block(x, attention_mask, params, num_heads=NUM_HEADS)
    out = jax.block_until_ready(out)
    assert out.shape == (B, T, E)
    assert loss is None

    ref = transformer_block_ref(x, attention_mask, params, num_heads=NUM_HEADS)
    # bf16 MXU operands + approx reciprocal + single-pass LN variance -> generous tolerance.
    assert jnp.allclose(out, ref, atol=3e-2, rtol=3e-2), float(jnp.max(jnp.abs(out - ref)))
    print("KERNEL_OK")
</pallas_src>

<mosaic_0001>
module attributes {stable_mosaic.version = 11 : i64} {
  func.func @transformer_block_kernel(%arg0: i32, %arg1: memref<2x16x128xf32, #tpu.memory_space<vmem>>, %arg2: memref<2x16xf32, #tpu.memory_space<vmem>>, %arg3: memref<1x128xf32, #tpu.memory_space<vmem>>, %arg4: memref<1x128xf32, #tpu.memory_space<vmem>>, %arg5: memref<128x384xbf16, #tpu.memory_space<vmem>>, %arg6: memref<1x384xf32, #tpu.memory_space<vmem>>, %arg7: memref<128x128xbf16, #tpu.memory_space<vmem>>, %arg8: memref<1x128xf32, #tpu.memory_space<vmem>>, %arg9: memref<1x128xf32, #tpu.memory_space<vmem>>, %arg10: memref<1x128xf32, #tpu.memory_space<vmem>>, %arg11: memref<128x512xbf16, #tpu.memory_space<vmem>>, %arg12: memref<1x512xf32, #tpu.memory_space<vmem>>, %arg13: memref<512x128xbf16, #tpu.memory_space<vmem>>, %arg14: memref<1x128xf32, #tpu.memory_space<vmem>>, %arg15: memref<2x16x128xf32, #tpu.memory_space<vmem>>, %arg16: memref<32x128xbf16, #tpu.memory_space<vmem>>) attributes {dimension_semantics = [#tpu.dimension_semantics<parallel>], iteration_bounds = array<i64: 1>, scalar_prefetch = 0 : i64, scratch_operands = 1 : i64, tpu.core_type = #tpu.core_type<tc>, window_params = [{transform_indices = @transform_0, window_bounds = array<i64: 2, 16, 128>}, {transform_indices = @transform_1, window_bounds = array<i64: 2, 16>}, {pipeline_mode = #tpu.pipeline_mode<synchronous>, transform_indices = @transform_2, window_bounds = array<i64: 1, 128>}, {pipeline_mode = #tpu.pipeline_mode<synchronous>, transform_indices = @transform_3, window_bounds = array<i64: 1, 128>}, {pipeline_mode = #tpu.pipeline_mode<synchronous>, transform_indices = @transform_4, window_bounds = array<i64: 128, 384>}, {pipeline_mode = #tpu.pipeline_mode<synchronous>, transform_indices = @transform_5, window_bounds = array<i64: 1, 384>}, {pipeline_mode = #tpu.pipeline_mode<synchronous>, transform_indices = @transform_6, window_bounds = array<i64: 128, 128>}, {pipeline_mode = #tpu.pipeline_mode<synchronous>, transform_indices = @transform_7, window_bounds = array<i64: 1, 128>}, {pipeline_mode = #tpu.pipeline_mode<synchronous>, transform_indices = @transform_8, window_bounds = array<i64: 1, 128>}, {pipeline_mode = #tpu.pipeline_mode<synchronous>, transform_indices = @transform_9, window_bounds = array<i64: 1, 128>}, {pipeline_mode = #tpu.pipeline_mode<synchronous>, transform_indices = @transform_10, window_bounds = array<i64: 128, 512>}, {pipeline_mode = #tpu.pipeline_mode<synchronous>, transform_indices = @transform_11, window_bounds = array<i64: 1, 512>}, {pipeline_mode = #tpu.pipeline_mode<synchronous>, transform_indices = @transform_12, window_bounds = array<i64: 512, 128>}, {pipeline_mode = #tpu.pipeline_mode<synchronous>, transform_indices = @transform_13, window_bounds = array<i64: 1, 128>}, {transform_indices = @transform_14, window_bounds = array<i64: 2, 16, 128>}]} {
    %c0 = arith.constant 0 : index
    %c0_0 = arith.constant 0 : index
    %c0_1 = arith.constant 0 : index
    %0 = vector.load %arg1[%c0, %c0_0, %c0_1] : memref<2x16x128xf32, #tpu.memory_space<vmem>>, vector<2x16x128xf32>
    %1 = vector.shape_cast %0 : vector<2x16x128xf32> to vector<32x128xf32>
    %c0_2 = arith.constant 0 : index
    %c0_3 = arith.constant 0 : index
    %2 = vector.load %arg3[%c0_2, %c0_3] : memref<1x128xf32, #tpu.memory_space<vmem>>, vector<1x128xf32>
    %3 = vector.shape_cast %2 : vector<1x128xf32> to vector<128xf32>
    %c0_4 = arith.constant 0 : index
    %c0_5 = arith.constant 0 : index
    %4 = vector.load %arg4[%c0_4, %c0_5] : memref<1x128xf32, #tpu.memory_space<vmem>>, vector<1x128xf32>
    %5 = vector.shape_cast %4 : vector<1x128xf32> to vector<128xf32>
    %cst = arith.constant dense<0.000000e+00> : vector<32xf32>
    %6 = vector.multi_reduction <add>, %1, %cst [1] : vector<32x128xf32> to vector<32xf32>
    %7 = vector.shape_cast %6 : vector<32xf32> to vector<32x1xf32>
    %cst_6 = arith.constant 1.280000e+02 : f32
    %8 = vector.broadcast %cst_6 : f32 to vector<32x1xf32>
    %9 = arith.divf %7, %8 : vector<32x1xf32>
    %10 = arith.mulf %1, %1 : vector<32x128xf32>
    %cst_7 = arith.constant dense<0.000000e+00> : vector<32xf32>
    %11 = vector.multi_reduction <add>, %10, %cst_7 [1] : vector<32x128xf32> to vector<32xf32>
    %12 = vector.shape_cast %11 : vector<32xf32> to vector<32x1xf32>
    %cst_8 = arith.constant 1.280000e+02 : f32
    %13 = vector.broadcast %cst_8 : f32 to vector<32x1xf32>
    %14 = arith.divf %12, %13 : vector<32x1xf32>
    %15 = arith.mulf %9, %9 : vector<32x1xf32>
    %16 = arith.subf %14, %15 : vector<32x1xf32>
    %17 = vector.broadcast %9 : vector<32x1xf32> to vector<32x128xf32>
    %18 = arith.subf %1, %17 : vector<32x128xf32>
    %cst_9 = arith.constant 9.99999974E-6 : f32
    %19 = vector.broadcast %cst_9 : f32 to vector<32x1xf32>
    %20 = arith.addf %16, %19 : vector<32x1xf32>
    %21 = math.rsqrt %20 : vector<32x1xf32>
    %22 = vector.broadcast %21 : vector<32x1xf32> to vector<32x128xf32>
    %23 = arith.mulf %18, %22 : vector<32x128xf32>
    %24 = vector.shape_cast %3 : vector<128xf32> to vector<1x128xf32>
    %25 = vector.broadcast %24 : vector<1x128xf32> to vector<32x128xf32>
    %26 = arith.mulf %23, %25 : vector<32x128xf32>
    %27 = vector.shape_cast %5 : vector<128xf32> to vector<1x128xf32>
    %28 = vector.broadcast %27 : vector<1x128xf32> to vector<32x128xf32>
    %29 = arith.addf %26, %28 : vector<32x128xf32>
    %30 = arith.truncf %29 : vector<32x128xf32> to vector<32x128xbf16>
    %c0_10 = arith.constant 0 : index
    %c0_11 = arith.constant 0 : index
    %31 = vector.load %arg5[%c0_10, %c0_11] : memref<128x384xbf16, #tpu.memory_space<vmem>>, vector<128x384xbf16>
    %cst_12 = arith.constant dense<0.000000e+00> : vector<32x384xf32>
    %32 = tpu.matmul %30, %31, %cst_12 {dimension_numbers = #tpu.dot_dimension_numbers<[1], [0], [0], [1], [0, 0, 1, 1], [], []>} : vector<32x128xbf16>, vector<128x384xbf16>, vector<32x384xf32> -> vector<32x384xf32>
    %c0_13 = arith.constant 0 : index
    %c0_14 = arith.constant 0 : index
    %33 = vector.load %arg6[%c0_13, %c0_14] : memref<1x384xf32, #tpu.memory_space<vmem>>, vector<1x384xf32>
    %34 = vector.shape_cast %33 : vector<1x384xf32> to vector<384xf32>
    %35 = vector.shape_cast %34 : vector<384xf32> to vector<1x384xf32>
    %36 = vector.broadcast %35 : vector<1x384xf32> to vector<32x384xf32>
    %37 = arith.addf %32, %36 : vector<32x384xf32>
    %38 = vector.extract_strided_slice %37 {offsets = [0, 0], sizes = [32, 128], strides = [1, 1]} : vector<32x384xf32> to vector<32x128xf32>
    %cst_15 = arith.constant 0.176776692 : f32
    %39 = vector.broadcast %cst_15 : f32 to vector<32x128xf32>
    %40 = arith.mulf %38, %39 : vector<32x128xf32>
    %41 = arith.truncf %40 : vector<32x128xf32> to vector<32x128xbf16>
    %42 = vector.extract_strided_slice %37 {offsets = [0, 128], sizes = [32, 128], strides = [1, 1]} : vector<32x384xf32> to vector<32x128xf32>
    %43 = arith.truncf %42 : vector<32x128xf32> to vector<32x128xbf16>
    %44 = vector.extract_strided_slice %37 {offsets = [0, 256], sizes = [32, 128], strides = [1, 1]} : vector<32x384xf32> to vector<32x128xf32>
    %45 = arith.truncf %44 : vector<32x128xf32> to vector<32x128xbf16>
    %c0_16 = arith.constant 0 : index
    %c0_17 = arith.constant 0 : index
    %46 = vector.load %arg2[%c0_16, %c0_17] : memref<2x16xf32, #tpu.memory_space<vmem>>, vector<2x16xf32>
    %cst_18 = arith.constant 1.000000e+00 : f32
    %47 = vector.broadcast %cst_18 : f32 to vector<2x16xf32>
    %48 = arith.subf %46, %47 : vector<2x16xf32>
    %cst_19 = arith.constant 1.000000e+09 : f32
    %49 = vector.broadcast %cst_19 : f32 to vector<2x16xf32>
    %50 = arith.mulf %48, %49 : vector<2x16xf32>
    %51 = vector.extract_strided_slice %50 {offsets = [0, 0], sizes = [1, 16], strides = [1, 1]} : vector<2x16xf32> to vector<1x16xf32>
    %52 = vector.extract_strided_slice %41 {offsets = [0, 0], sizes = [16, 32], strides = [1, 1]} : vector<32x128xbf16> to vector<16x32xbf16>
    %53 = vector.extract_strided_slice %43 {offsets = [0, 0], sizes = [16, 32], strides = [1, 1]} : vector<32x128xbf16> to vector<16x32xbf16>
    %cst_20 = arith.constant dense<0.000000e+00> : vector<16x16xf32>
    %54 = tpu.matmul %52, %53, %cst_20 {dimension_numbers = #tpu.dot_dimension_numbers<[1], [1], [0], [0], [0, 0, 1, 0], [], []>} : vector<16x32xbf16>, vector<16x32xbf16>, vector<16x16xf32> -> vector<16x16xf32>
    %55 = vector.broadcast %51 : vector<1x16xf32> to vector<16x16xf32>
    %56 = arith.addf %54, %55 : vector<16x16xf32>
    %cst_21 = arith.constant dense<0xFF800000> : vector<16xf32>
    %57 = vector.multi_reduction <maximumf>, %56, %cst_21 [1] : vector<16x16xf32> to vector<16xf32>
    %58 = vector.shape_cast %57 : vector<16xf32> to vector<16x1xf32>
    %59 = vector.broadcast %58 : vector<16x1xf32> to vector<16x16xf32>
    %60 = arith.subf %56, %59 : vector<16x16xf32>
    %61 = math.exp %60 : vector<16x16xf32>
    %cst_22 = arith.constant dense<0.000000e+00> : vector<16xf32>
    %62 = vector.multi_reduction <add>, %61, %cst_22 [1] : vector<16x16xf32> to vector<16xf32>
    %63 = vector.shape_cast %62 : vector<16xf32> to vector<16x1xf32>
    %64 = tpu.reciprocal %63 {approx = true} : vector<16x1xf32> -> vector<16x1xf32>
    %65 = vector.broadcast %64 : vector<16x1xf32> to vector<16x16xf32>
    %66 = arith.mulf %61, %65 : vector<16x16xf32>
    %67 = arith.truncf %66 : vector<16x16xf32> to vector<16x16xbf16>
    %68 = vector.extract_strided_slice %45 {offsets = [0, 0], sizes = [16, 32], strides = [1, 1]} : vector<32x128xbf16> to vector<16x32xbf16>
    %cst_23 = arith.constant dense<0.000000e+00> : vector<16x32xf32>
    %69 = tpu.matmul %67, %68, %cst_23 {dimension_numbers = #tpu.dot_dimension_numbers<[1], [0], [0], [1], [0, 0, 1, 1], [], []>} : vector<16x16xbf16>, vector<16x32xbf16>, vector<16x32xf32> -> vector<16x32xf32>
    %70 = arith.truncf %69 : vector<16x32xf32> to vector<16x32xbf16>
    %c0_24 = arith.constant 0 : index
    %c0_25 = arith.constant 0 : index
    %71 = vector.load %arg16[%c0_24, %c0_25] : memref<32x128xbf16, #tpu.memory_space<vmem>>, vector<16x32xbf16>
    tpu.vector_store %arg16[%c0_24, %c0_25], %70 {strides = array<i32>} : memref<32x128xbf16, #tpu.memory_space<vmem>>, vector<16x32xbf16>,
    %72 = vector.extract_strided_slice %41 {offsets = [0, 32], sizes = [16, 32], strides = [1, 1]} : vector<32x128xbf16> to vector<16x32xbf16>
    %73 = vector.extract_strided_slice %43 {offsets = [0, 32], sizes = [16, 32], strides = [1, 1]} : vector<32x128xbf16> to vector<16x32xbf16>
    %cst_26 = arith.constant dense<0.000000e+00> : vector<16x16xf32>
    %74 = tpu.matmul %72, %73, %cst_26 {dimension_numbers = #tpu.dot_dimension_numbers<[1], [1], [0], [0], [0, 0, 1, 0], [], []>} : vector<16x32xbf16>, vector<16x32xbf16>, vector<16x16xf32> -> vector<16x16xf32>
    %75 = vector.broadcast %51 : vector<1x16xf32> to vector<16x16xf32>
    %76 = arith.addf %74, %75 : vector<16x16xf32>
    %cst_27 = arith.constant dense<0xFF800000> : vector<16xf32>
    %77 = vector.multi_reduction <maximumf>, %76, %cst_27 [1] : vector<16x16xf32> to vector<16xf32>
    %78 = vector.shape_cast %77 : vector<16xf32> to vector<16x1xf32>
    %79 = vector.broadcast %78 : vector<16x1xf32> to vector<16x16xf32>
    %80 = arith.subf %76, %79 : vector<16x16xf32>
    %81 = math.exp %80 : vector<16x16xf32>
    %cst_28 = arith.constant dense<0.000000e+00> : vector<16xf32>
    %82 = vector.multi_reduction <add>, %81, %cst_28 [1] : vector<16x16xf32> to vector<16xf32>
    %83 = vector.shape_cast %82 : vector<16xf32> to vector<16x1xf32>
    %84 = tpu.reciprocal %83 {approx = true} : vector<16x1xf32> -> vector<16x1xf32>
    %85 = vector.broadcast %84 : vector<16x1xf32> to vector<16x16xf32>
    %86 = arith.mulf %81, %85 : vector<16x16xf32>
    %87 = arith.truncf %86 : vector<16x16xf32> to vector<16x16xbf16>
    %88 = vector.extract_strided_slice %45 {offsets = [0, 32], sizes = [16, 32], strides = [1, 1]} : vector<32x128xbf16> to vector<16x32xbf16>
    %cst_29 = arith.constant dense<0.000000e+00> : vector<16x32xf32>
    %89 = tpu.matmul %87, %88, %cst_29 {dimension_numbers = #tpu.dot_dimension_numbers<[1], [0], [0], [1], [0, 0, 1, 1], [], []>} : vector<16x16xbf16>, vector<16x32xbf16>, vector<16x32xf32> -> vector<16x32xf32>
    %90 = arith.truncf %89 : vector<16x32xf32> to vector<16x32xbf16>
    %c0_30 = arith.constant 0 : index
    %c32 = arith.constant 32 : index
    %91 = vector.load %arg16[%c0_30, %c32] : memref<32x128xbf16, #tpu.memory_space<vmem>>, vector<16x32xbf16>
    tpu.vector_store %arg16[%c0_30, %c32], %90 {strides = array<i32>} : memref<32x128xbf16, #tpu.memory_space<vmem>>, vector<16x32xbf16>,
    %92 = vector.extract_strided_slice %41 {offsets = [0, 64], sizes = [16, 32], strides = [1, 1]} : vector<32x128xbf16> to vector<16x32xbf16>
    %93 = vector.extract_strided_slice %43 {offsets = [0, 64], sizes = [16, 32], strides = [1, 1]} : vector<32x128xbf16> to vector<16x32xbf16>
    %cst_31 = arith.constant dense<0.000000e+00> : vector<16x16xf32>
    %94 = tpu.matmul %92, %93, %cst_31 {dimension_numbers = #tpu.dot_dimension_numbers<[1], [1], [0], [0], [0, 0, 1, 0], [], []>} : vector<16x32xbf16>, vector<16x32xbf16>, vector<16x16xf32> -> vector<16x16xf32>
    %95 = vector.broadcast %51 : vector<1x16xf32> to vector<16x16xf32>
    %96 = arith.addf %94, %95 : vector<16x16xf32>
    %cst_32 = arith.constant dense<0xFF800000> : vector<16xf32>
    %97 = vector.multi_reduction <maximumf>, %96, %cst_32 [1] : vector<16x16xf32> to vector<16xf32>
    %98 = vector.shape_cast %97 : vector<16xf32> to vector<16x1xf32>
    %99 = vector.broadcast %98 : vector<16x1xf32> to vector<16x16xf32>
    %100 = arith.subf %96, %99 : vector<16x16xf32>
    %101 = math.exp %100 : vector<16x16xf32>
    %cst_33 = arith.constant dense<0.000000e+00> : vector<16xf32>
    %102 = vector.multi_reduction <add>, %101, %cst_33 [1] : vector<16x16xf32> to vector<16xf32>
    %103 = vector.shape_cast %102 : vector<16xf32> to vector<16x1xf32>
    %104 = tpu.reciprocal %103 {approx = true} : vector<16x1xf32> -> vector<16x1xf32>
    %105 = vector.broadcast %104 : vector<16x1xf32> to vector<16x16xf32>
    %106 = arith.mulf %101, %105 : vector<16x16xf32>
    %107 = arith.truncf %106 : vector<16x16xf32> to vector<16x16xbf16>
    %108 = vector.extract_strided_slice %45 {offsets = [0, 64], sizes = [16, 32], strides = [1, 1]} : vector<32x128xbf16> to vector<16x32xbf16>
    %cst_34 = arith.constant dense<0.000000e+00> : vector<16x32xf32>
    %109 = tpu.matmul %107, %108, %cst_34 {dimension_numbers = #tpu.dot_dimension_numbers<[1], [0], [0], [1], [0, 0, 1, 1], [], []>} : vector<16x16xbf16>, vector<16x32xbf16>, vector<16x32xf32> -> vector<16x32xf32>
    %110 = arith.truncf %109 : vector<16x32xf32> to vector<16x32xbf16>
    %c0_35 = arith.constant 0 : index
    %c64 = arith.constant 64 : index
    %111 = vector.load %arg16[%c0_35, %c64] : memref<32x128xbf16, #tpu.memory_space<vmem>>, vector<16x32xbf16>
    tpu.vector_store %arg16[%c0_35, %c64], %110 {strides = array<i32>} : memref<32x128xbf16, #tpu.memory_space<vmem>>, vector<16x32xbf16>,
    %112 = vector.extract_strided_slice %41 {offsets = [0, 96], sizes = [16, 32], strides = [1, 1]} : vector<32x128xbf16> to vector<16x32xbf16>
    %113 = vector.extract_strided_slice %43 {offsets = [0, 96], sizes = [16, 32], strides = [1, 1]} : vector<32x128xbf16> to vector<16x32xbf16>
    %cst_36 = arith.constant dense<0.000000e+00> : vector<16x16xf32>
    %114 = tpu.matmul %112, %113, %cst_36 {dimension_numbers = #tpu.dot_dimension_numbers<[1], [1], [0], [0], [0, 0, 1, 0], [], []>} : vector<16x32xbf16>, vector<16x32xbf16>, vector<16x16xf32> -> vector<16x16xf32>
    %115 = vector.broadcast %51 : vector<1x16xf32> to vector<16x16xf32>
    %116 = arith.addf %114, %115 : vector<16x16xf32>
    %cst_37 = arith.constant dense<0xFF800000> : vector<16xf32>
    %117 = vector.multi_reduction <maximumf>, %116, %cst_37 [1] : vector<16x16xf32> to vector<16xf32>
    %118 = vector.shape_cast %117 : vector<16xf32> to vector<16x1xf32>
    %119 = vector.broadcast %118 : vector<16x1xf32> to vector<16x16xf32>
    %120 = arith.subf %116, %119 : vector<16x16xf32>
    %121 = math.exp %120 : vector<16x16xf32>
    %cst_38 = arith.constant dense<0.000000e+00> : vector<16xf32>
    %122 = vector.multi_reduction <add>, %121, %cst_38 [1] : vector<16x16xf32> to vector<16xf32>
    %123 = vector.shape_cast %122 : vector<16xf32> to vector<16x1xf32>
    %124 = tpu.reciprocal %123 {approx = true} : vector<16x1xf32> -> vector<16x1xf32>
    %125 = vector.broadcast %124 : vector<16x1xf32> to vector<16x16xf32>
    %126 = arith.mulf %121, %125 : vector<16x16xf32>
    %127 = arith.truncf %126 : vector<16x16xf32> to vector<16x16xbf16>
    %128 = vector.extract_strided_slice %45 {offsets = [0, 96], sizes = [16, 32], strides = [1, 1]} : vector<32x128xbf16> to vector<16x32xbf16>
    %cst_39 = arith.constant dense<0.000000e+00> : vector<16x32xf32>
    %129 = tpu.matmul %127, %128, %cst_39 {dimension_numbers = #tpu.dot_dimension_numbers<[1], [0], [0], [1], [0, 0, 1, 1], [], []>} : vector<16x16xbf16>, vector<16x32xbf16>, vector<16x32xf32> -> vector<16x32xf32>
    %130 = arith.truncf %129 : vector<16x32xf32> to vector<16x32xbf16>
    %c0_40 = arith.constant 0 : index
    %c96 = arith.constant 96 : index
    %131 = vector.load %arg16[%c0_40, %c96] : memref<32x128xbf16, #tpu.memory_space<vmem>>, vector<16x32xbf16>
    tpu.vector_store %arg16[%c0_40, %c96], %130 {strides = array<i32>} : memref<32x128xbf16, #tpu.memory_space<vmem>>, vector<16x32xbf16>,
    %132 = vector.extract_strided_slice %50 {offsets = [1, 0], sizes = [1, 16], strides = [1, 1]} : vector<2x16xf32> to vector<1x16xf32>
    %133 = vector.extract_strided_slice %41 {offsets = [16, 0], sizes = [16, 32], strides = [1, 1]} : vector<32x128xbf16> to vector<16x32xbf16>
    %134 = vector.extract_strided_slice %43 {offsets = [16, 0], sizes = [16, 32], strides = [1, 1]} : vector<32x128xbf16> to vector<16x32xbf16>
    %cst_41 = arith.constant dense<0.000000e+00> : vector<16x16xf32>
    %135 = tpu.matmul %133, %134, %cst_41 {dimension_numbers = #tpu.dot_dimension_numbers<[1], [1], [0], [0], [0, 0, 1, 0], [], []>} : vector<16x32xbf16>, vector<16x32xbf16>, vector<16x16xf32> -> vector<16x16xf32>
    %136 = vector.broadcast %132 : vector<1x16xf32> to vector<16x16xf32>
    %137 = arith.addf %135, %136 : vector<16x16xf32>
    %cst_42 = arith.constant dense<0xFF800000> : vector<16xf32>
    %138 = vector.multi_reduction <maximumf>, %137, %cst_42 [1] : vector<16x16xf32> to vector<16xf32>
    %139 = vector.shape_cast %138 : vector<16xf32> to vector<16x1xf32>
    %140 = vector.broadcast %139 : vector<16x1xf32> to vector<16x16xf32>
    %141 = arith.subf %137, %140 : vector<16x16xf32>
    %142 = math.exp %141 : vector<16x16xf32>
    %cst_43 = arith.constant dense<0.000000e+00> : vector<16xf32>
    %143 = vector.multi_reduction <add>, %142, %cst_43 [1] : vector<16x16xf32> to vector<16xf32>
    %144 = vector.shape_cast %143 : vector<16xf32> to vector<16x1xf32>
    %145 = tpu.reciprocal %144 {approx = true} : vector<16x1xf32> -> vector<16x1xf32>
    %146 = vector.broadcast %145 : vector<16x1xf32> to vector<16x16xf32>
    %147 = arith.mulf %142, %146 : vector<16x16xf32>
    %148 = arith.truncf %147 : vector<16x16xf32> to vector<16x16xbf16>
    %149 = vector.extract_strided_slice %45 {offsets = [16, 0], sizes = [16, 32], strides = [1, 1]} : vector<32x128xbf16> to vector<16x32xbf16>
    %cst_44 = arith.constant dense<0.000000e+00> : vector<16x32xf32>
    %150 = tpu.matmul %148, %149, %cst_44 {dimension_numbers = #tpu.dot_dimension_numbers<[1], [0], [0], [1], [0, 0, 1, 1], [], []>} : vector<16x16xbf16>, vector<16x32xbf16>, vector<16x32xf32> -> vector<16x32xf32>
    %151 = arith.truncf %150 : vector<16x32xf32> to vector<16x32xbf16>
    %c16 = arith.constant 16 : index
    %c0_45 = arith.constant 0 : index
    %152 = vector.load %arg16[%c16, %c0_45] : memref<32x128xbf16, #tpu.memory_space<vmem>>, vector<16x32xbf16>
    tpu.vector_store %arg16[%c16, %c0_45], %151 {strides = array<i32>} : memref<32x128xbf16, #tpu.memory_space<vmem>>, vector<16x32xbf16>,
    %153 = vector.extract_strided_slice %41 {offsets = [16, 32], sizes = [16, 32], strides = [1, 1]} : vector<32x128xbf16> to vector<16x32xbf16>
    %154 = vector.extract_strided_slice %43 {offsets = [16, 32], sizes = [16, 32], strides = [1, 1]} : vector<32x128xbf16> to vector<16x32xbf16>
    %cst_46 = arith.constant dense<0.000000e+00> : vector<16x16xf32>
    %155 = tpu.matmul %153, %154, %cst_46 {dimension_numbers = #tpu.dot_dimension_numbers<[1], [1], [0], [0], [0, 0, 1, 0], [], []>} : vector<16x32xbf16>, vector<16x32xbf16>, vector<16x16xf32> -> vector<16x16xf32>
    %156 = vector.broadcast %132 : vector<1x16xf32> to vector<16x16xf32>
    %157 = arith.addf %155, %156 : vector<16x16xf32>
    %cst_47 = arith.constant dense<0xFF800000> : vector<16xf32>
    %158 = vector.multi_reduction <maximumf>, %157, %cst_47 [1] : vector<16x16xf32> to vector<16xf32>
    %159 = vector.shape_cast %158 : vector<16xf32> to vector<16x1xf32>
    %160 = vector.broadcast %159 : vector<16x1xf32> to vector<16x16xf32>
    %161 = arith.subf %157, %160 : vector<16x16xf32>
    %162 = math.exp %161 : vector<16x16xf32>
    %cst_48 = arith.constant dense<0.000000e+00> : vector<16xf32>
    %163 = vector.multi_reduction <add>, %162, %cst_48 [1] : vector<16x16xf32> to vector<16xf32>
    %164 = vector.shape_cast %163 : vector<16xf32> to vector<16x1xf32>
    %165 = tpu.reciprocal %164 {approx = true} : vector<16x1xf32> -> vector<16x1xf32>
    %166 = vector.broadcast %165 : vector<16x1xf32> to vector<16x16xf32>
    %167 = arith.mulf %162, %166 : vector<16x16xf32>
    %168 = arith.truncf %167 : vector<16x16xf32> to vector<16x16xbf16>
    %169 = vector.extract_strided_slice %45 {offsets = [16, 32], sizes = [16, 32], strides = [1, 1]} : vector<32x128xbf16> to vector<16x32xbf16>
    %cst_49 = arith.constant dense<0.000000e+00> : vector<16x32xf32>
    %170 = tpu.matmul %168, %169, %cst_49 {dimension_numbers = #tpu.dot_dimension_numbers<[1], [0], [0], [1], [0, 0, 1, 1], [], []>} : vector<16x16xbf16>, vector<16x32xbf16>, vector<16x32xf32> -> vector<16x32xf32>
    %171 = arith.truncf %170 : vector<16x32xf32> to vector<16x32xbf16>
    %c16_50 = arith.constant 16 : index
    %c32_51 = arith.constant 32 : index
    %172 = vector.load %arg16[%c16_50, %c32_51] : memref<32x128xbf16, #tpu.memory_space<vmem>>, vector<16x32xbf16>
    tpu.vector_store %arg16[%c16_50, %c32_51], %171 {strides = array<i32>} : memref<32x128xbf16, #tpu.memory_space<vmem>>, vector<16x32xbf16>,
    %173 = vector.extract_strided_slice %41 {offsets = [16, 64], sizes = [16, 32], strides = [1, 1]} : vector<32x128xbf16> to vector<16x32xbf16>
    %174 = vector.extract_strided_slice %43 {offsets = [16, 64], sizes = [16, 32], strides = [1, 1]} : vector<32x128xbf16> to vector<16x32xbf16>
    %cst_52 = arith.constant dense<0.000000e+00> : vector<16x16xf32>
    %175 = tpu.matmul %173, %174, %cst_52 {dimension_numbers = #tpu.dot_dimension_numbers<[1], [1], [0], [0], [0, 0, 1, 0], [], []>} : vector<16x32xbf16>, vector<16x32xbf16>, vector<16x16xf32> -> vector<16x16xf32>
    %176 = vector.broadcast %132 : vector<1x16xf32> to vector<16x16xf32>
    %177 = arith.addf %175, %176 : vector<16x16xf32>
    %cst_53 = arith.constant dense<0xFF800000> : vector<16xf32>
    %178 = vector.multi_reduction <maximumf>, %177, %cst_53 [1] : vector<16x16xf32> to vector<16xf32>
    %179 = vector.shape_cast %178 : vector<16xf32> to vector<16x1xf32>
    %180 = vector.broadcast %179 : vector<16x1xf32> to vector<16x16xf32>
    %181 = arith.subf %177, %180 : vector<16x16xf32>
    %182 = math.exp %181 : vector<16x16xf32>
    %cst_54 = arith.constant dense<0.000000e+00> : vector<16xf32>
    %183 = vector.multi_reduction <add>, %182, %cst_54 [1] : vector<16x16xf32> to vector<16xf32>
    %184 = vector.shape_cast %183 : vector<16xf32> to vector<16x1xf32>
    %185 = tpu.reciprocal %184 {approx = true} : vector<16x1xf32> -> vector<16x1xf32>
    %186 = vector.broadcast %185 : vector<16x1xf32> to vector<16x16xf32>
    %187 = arith.mulf %182, %186 : vector<16x16xf32>
    %188 = arith.truncf %187 : vector<16x16xf32> to vector<16x16xbf16>
    %189 = vector.extract_strided_slice %45 {offsets = [16, 64], sizes = [16, 32], strides = [1, 1]} : vector<32x128xbf16> to vector<16x32xbf16>
    %cst_55 = arith.constant dense<0.000000e+00> : vector<16x32xf32>
    %190 = tpu.matmul %188, %189, %cst_55 {dimension_numbers = #tpu.dot_dimension_numbers<[1], [0], [0], [1], [0, 0, 1, 1], [], []>} : vector<16x16xbf16>, vector<16x32xbf16>, vector<16x32xf32> -> vector<16x32xf32>
    %191 = arith.truncf %190 : vector<16x32xf32> to vector<16x32xbf16>
    %c16_56 = arith.constant 16 : index
    %c64_57 = arith.constant 64 : index
    %192 = vector.load %arg16[%c16_56, %c64_57] : memref<32x128xbf16, #tpu.memory_space<vmem>>, vector<16x32xbf16>
    tpu.vector_store %arg16[%c16_56, %c64_57], %191 {strides = array<i32>} : memref<32x128xbf16, #tpu.memory_space<vmem>>, vector<16x32xbf16>,
    %193 = vector.extract_strided_slice %41 {offsets = [16, 96], sizes = [16, 32], strides = [1, 1]} : vector<32x128xbf16> to vector<16x32xbf16>
    %194 = vector.extract_strided_slice %43 {offsets = [16, 96], sizes = [16, 32], strides = [1, 1]} : vector<32x128xbf16> to vector<16x32xbf16>
    %cst_58 = arith.constant dense<0.000000e+00> : vector<16x16xf32>
    %195 = tpu.matmul %193, %194, %cst_58 {dimension_numbers = #tpu.dot_dimension_numbers<[1], [1], [0], [0], [0, 0, 1, 0], [], []>} : vector<16x32xbf16>, vector<16x32xbf16>, vector<16x16xf32> -> vector<16x16xf32>
    %196 = vector.broadcast %132 : vector<1x16xf32> to vector<16x16xf32>
    %197 = arith.addf %195, %196 : vector<16x16xf32>
    %cst_59 = arith.constant dense<0xFF800000> : vector<16xf32>
    %198 = vector.multi_reduction <maximumf>, %197, %cst_59 [1] : vector<16x16xf32> to vector<16xf32>
    %199 = vector.shape_cast %198 : vector<16xf32> to vector<16x1xf32>
    %200 = vector.broadcast %199 : vector<16x1xf32> to vector<16x16xf32>
    %201 = arith.subf %197, %200 : vector<16x16xf32>
    %202 = math.exp %201 : vector<16x16xf32>
    %cst_60 = arith.constant dense<0.000000e+00> : vector<16xf32>
    %203 = vector.multi_reduction <add>, %202, %cst_60 [1] : vector<16x16xf32> to vector<16xf32>
    %204 = vector.shape_cast %203 : vector<16xf32> to vector<16x1xf32>
    %205 = tpu.reciprocal %204 {approx = true} : vector<16x1xf32> -> vector<16x1xf32>
    %206 = vector.broadcast %205 : vector<16x1xf32> to vector<16x16xf32>
    %207 = arith.mulf %202, %206 : vector<16x16xf32>
    %208 = arith.truncf %207 : vector<16x16xf32> to vector<16x16xbf16>
    %209 = vector.extract_strided_slice %45 {offsets = [16, 96], sizes = [16, 32], strides = [1, 1]} : vector<32x128xbf16> to vector<16x32xbf16>
    %cst_61 = arith.constant dense<0.000000e+00> : vector<16x32xf32>
    %210 = tpu.matmul %208, %209, %cst_61 {dimension_numbers = #tpu.dot_dimension_numbers<[1], [0], [0], [1], [0, 0, 1, 1], [], []>} : vector<16x16xbf16>, vector<16x32xbf16>, vector<16x32xf32> -> vector<16x32xf32>
    %211 = arith.truncf %210 : vector<16x32xf32> to vector<16x32xbf16>
    %c16_62 = arith.constant 16 : index
    %c96_63 = arith.constant 96 : index
    %212 = vector.load %arg16[%c16_62, %c96_63] : memref<32x128xbf16, #tpu.memory_space<vmem>>, vector<16x32xbf16>
    tpu.vector_store %arg16[%c16_62, %c96_63], %211 {strides = array<i32>} : memref<32x128xbf16, #tpu.memory_space<vmem>>, vector<16x32xbf16>,
    %c0_64 = arith.constant 0 : index
    %c0_65 = arith.constant 0 : index
    %213 = vector.load %arg16[%c0_64, %c0_65] : memref<32x128xbf16, #tpu.memory_space<vmem>>, vector<32x128xbf16>
    %c0_66 = arith.constant 0 : index
    %c0_67 = arith.constant 0 : index
    %214 = vector.load %arg7[%c0_66, %c0_67] : memref<128x128xbf16, #tpu.memory_space<vmem>>, vector<128x128xbf16>
    %cst_68 = arith.constant dense<0.000000e+00> : vector<32x128xf32>
    %215 = tpu.matmul %213, %214, %cst_68 {dimension_numbers = #tpu.dot_dimension_numbers<[1], [0], [0], [1], [0, 0, 1, 1], [], []>} : vector<32x128xbf16>, vector<128x128xbf16>, vector<32x128xf32> -> vector<32x128xf32>
    %c0_69 = arith.constant 0 : index
    %c0_70 = arith.constant 0 : index
    %216 = vector.load %arg8[%c0_69, %c0_70] : memref<1x128xf32, #tpu.memory_space<vmem>>, vector<1x128xf32>
    %217 = vector.shape_cast %216 : vector<1x128xf32> to vector<128xf32>
    %218 = vector.shape_cast %217 : vector<128xf32> to vector<1x128xf32>
    %219 = vector.broadcast %218 : vector<1x128xf32> to vector<32x128xf32>
    %220 = arith.addf %215, %219 : vector<32x128xf32>
    %221 = arith.addf %1, %220 : vector<32x128xf32>
    %c0_71 = arith.constant 0 : index
    %c0_72 = arith.constant 0 : index
    %222 = vector.load %arg9[%c0_71, %c0_72] : memref<1x128xf32, #tpu.memory_space<vmem>>, vector<1x128xf32>
    %223 = vector.shape_cast %222 : vector<1x128xf32> to vector<128xf32>
    %c0_73 = arith.constant 0 : index
    %c0_74 = arith.constant 0 : index
    %224 = vector.load %arg10[%c0_73, %c0_74] : memref<1x128xf32, #tpu.memory_space<vmem>>, vector<1x128xf32>
    %225 = vector.shape_cast %224 : vector<1x128xf32> to vector<128xf32>
    %cst_75 = arith.constant dense<0.000000e+00> : vector<32xf32>
    %226 = vector.multi_reduction <add>, %221, %cst_75 [1] : vector<32x128xf32> to vector<32xf32>
    %227 = vector.shape_cast %226 : vector<32xf32> to vector<32x1xf32>
    %cst_76 = arith.constant 1.280000e+02 : f32
    %228 = vector.broadcast %cst_76 : f32 to vector<32x1xf32>
    %229 = arith.divf %227, %228 : vector<32x1xf32>
    %230 = arith.mulf %221, %221 : vector<32x128xf32>
    %cst_77 = arith.constant dense<0.000000e+00> : vector<32xf32>
    %231 = vector.multi_reduction <add>, %230, %cst_77 [1] : vector<32x128xf32> to vector<32xf32>
    %232 = vector.shape_cast %231 : vector<32xf32> to vector<32x1xf32>
    %cst_78 = arith.constant 1.280000e+02 : f32
    %233 = vector.broadcast %cst_78 : f32 to vector<32x1xf32>
    %234 = arith.divf %232, %233 : vector<32x1xf32>
    %235 = arith.mulf %229, %229 : vector<32x1xf32>
    %236 = arith.subf %234, %235 : vector<32x1xf32>
    %237 = vector.broadcast %229 : vector<32x1xf32> to vector<32x128xf32>
    %238 = arith.subf %221, %237 : vector<32x128xf32>
    %cst_79 = arith.constant 9.99999974E-6 : f32
    %239 = vector.broadcast %cst_79 : f32 to vector<32x1xf32>
    %240 = arith.addf %236, %239 : vector<32x1xf32>
    %241 = math.rsqrt %240 : vector<32x1xf32>
    %242 = vector.broadcast %241 : vector<32x1xf32> to vector<32x128xf32>
    %243 = arith.mulf %238, %242 : vector<32x128xf32>
    %244 = vector.shape_cast %223 : vector<128xf32> to vector<1x128xf32>
    %245 = vector.broadcast %244 : vector<1x128xf32> to vector<32x128xf32>
    %246 = arith.mulf %243, %245 : vector<32x128xf32>
    %247 = vector.shape_cast %225 : vector<128xf32> to vector<1x128xf32>
    %248 = vector.broadcast %247 : vector<1x128xf32> to vector<32x128xf32>
    %249 = arith.addf %246, %248 : vector<32x128xf32>
    %250 = arith.truncf %249 : vector<32x128xf32> to vector<32x128xbf16>
    %c0_80 = arith.constant 0 : index
    %c0_81 = arith.constant 0 : index
    %251 = vector.load %arg11[%c0_80, %c0_81] : memref<128x512xbf16, #tpu.memory_space<vmem>>, vector<128x512xbf16>
    %cst_82 = arith.constant dense<0.000000e+00> : vector<32x512xf32>
    %252 = tpu.matmul %250, %251, %cst_82 {dimension_numbers = #tpu.dot_dimension_numbers<[1], [0], [0], [1], [0, 0, 1, 1], [], []>} : vector<32x128xbf16>, vector<128x512xbf16>, vector<32x512xf32> -> vector<32x512xf32>
    %c0_83 = arith.constant 0 : index
    %c0_84 = arith.constant 0 : index
    %253 = vector.load %arg12[%c0_83, %c0_84] : memref<1x512xf32, #tpu.memory_space<vmem>>, vector<1x512xf32>
    %254 = vector.shape_cast %253 : vector<1x512xf32> to vector<512xf32>
    %255 = vector.shape_cast %254 : vector<512xf32> to vector<1x512xf32>
    %256 = vector.broadcast %255 : vector<1x512xf32> to vector<32x512xf32>
    %257 = arith.addf %252, %256 : vector<32x512xf32>
    %cst_85 = arith.constant 0.000000e+00 : f32
    %258 = vector.broadcast %cst_85 : f32 to vector<32x512xf32>
    %259 = arith.maximumf %257, %258 : vector<32x512xf32>
    %260 = arith.truncf %259 : vector<32x512xf32> to vector<32x512xbf16>
    %c0_86 = arith.constant 0 : index
    %c0_87 = arith.constant 0 : index
    %261 = vector.load %arg13[%c0_86, %c0_87] : memref<512x128xbf16, #tpu.memory_space<vmem>>, vector<512x128xbf16>
    %cst_88 = arith.constant dense<0.000000e+00> : vector<32x128xf32>
    %262 = tpu.matmul %260, %261, %cst_88 {dimension_numbers = #tpu.dot_dimension_numbers<[1], [0], [0], [1], [0, 0, 1, 1], [], []>} : vector<32x512xbf16>, vector<512x128xbf16>, vector<32x128xf32> -> vector<32x128xf32>
    %c0_89 = arith.constant 0 : index
    %c0_90 = arith.constant 0 : index
    %263 = vector.load %arg14[%c0_89, %c0_90] : memref<1x128xf32, #tpu.memory_space<vmem>>, vector<1x128xf32>
    %264 = vector.shape_cast %263 : vector<1x128xf32> to vector<128xf32>
    %265 = vector.shape_cast %264 : vector<128xf32> to vector<1x128xf32>
    %266 = vector.broadcast %265 : vector<1x128xf32> to vector<32x128xf32>
    %267 = arith.addf %262, %266 : vector<32x128xf32>
    %268 = arith.addf %221, %267 : vector<32x128xf32>
    %269 = vector.shape_cast %268 : vector<32x128xf32> to vector<2x16x128xf32>
    %c0_91 = arith.constant 0 : index
    %c0_92 = arith.constant 0 : index
    %c0_93 = arith.constant 0 : index
    %270 = vector.load %arg15[%c0_91, %c0_92, %c0_93] : memref<2x16x128xf32, #tpu.memory_space<vmem>>, vector<2x16x128xf32>
    tpu.vector_store %arg15[%c0_91, %c0_92, %c0_93], %269 {strides = array<i32>} : memref<2x16x128xf32, #tpu.memory_space<vmem>>, vector<2x16x128xf32>,
    return
  }
  func.func @transform_0(%arg0: i32) -> (i32, i32, i32) {
    %c0_i32 = arith.constant 0 : i32
    %c0_i32_0 = arith.constant 0 : i32
    %c0_i32_1 = arith.constant 0 : i32
    return %arg0, %c0_i32, %c0_i32_0 : i32, i32, i32
  }
  func.func @transform_1(%arg0: i32) -> (i32, i32) {
    %c0_i32 = arith.constant 0 : i32
    %c0_i32_0 = arith.constant 0 : i32
    return %arg0, %c0_i32 : i32, i32
  }
  func.func @transform_2(%arg0: i32) -> (i32, i32) {
    %c0_i32 = arith.constant 0 : i32
    %c0_i32_0 = arith.constant 0 : i32
    %c0_i32_1 = arith.constant 0 : i32
    return %c0_i32, %c0_i32_0 : i32, i32
  }
  func.func @transform_3(%arg0: i32) -> (i32, i32) {
    %c0_i32 = arith.constant 0 : i32
    %c0_i32_0 = arith.constant 0 : i32
    %c0_i32_1 = arith.constant 0 : i32
    return %c0_i32, %c0_i32_0 : i32, i32
  }
  func.func @transform_4(%arg0: i32) -> (i32, i32) {
    %c0_i32 = arith.constant 0 : i32
    %c0_i32_0 = arith.constant 0 : i32
    %c0_i32_1 = arith.constant 0 : i32
    return %c0_i32, %c0_i32_0 : i32, i32
  }
  func.func @transform_5(%arg0: i32) -> (i32, i32) {
    %c0_i32 = arith.constant 0 : i32
    %c0_i32_0 = arith.constant 0 : i32
    %c0_i32_1 = arith.constant 0 : i32
    return %c0_i32, %c0_i32_0 : i32, i32
  }
  func.func @transform_6(%arg0: i32) -> (i32, i32) {
    %c0_i32 = arith.constant 0 : i32
    %c0_i32_0 = arith.constant 0 : i32
    %c0_i32_1 = arith.constant 0 : i32
    return %c0_i32, %c0_i32_0 : i32, i32
  }
  func.func @transform_7(%arg0: i32) -> (i32, i32) {
    %c0_i32 = arith.constant 0 : i32
    %c0_i32_0 = arith.constant 0 : i32
    %c0_i32_1 = arith.constant 0 : i32
    return %c0_i32, %c0_i32_0 : i32, i32
  }
  func.func @transform_8(%arg0: i32) -> (i32, i32) {
    %c0_i32 = arith.constant 0 : i32
    %c0_i32_0 = arith.constant 0 : i32
    %c0_i32_1 = arith.constant 0 : i32
    return %c0_i32, %c0_i32_0 : i32, i32
  }
  func.func @transform_9(%arg0: i32) -> (i32, i32) {
    %c0_i32 = arith.constant 0 : i32
    %c0_i32_0 = arith.constant 0 : i32
    %c0_i32_1 = arith.constant 0 : i32
    return %c0_i32, %c0_i32_0 : i32, i32
  }
  func.func @transform_10(%arg0: i32) -> (i32, i32) {
    %c0_i32 = arith.constant 0 : i32
    %c0_i32_0 = arith.constant 0 : i32
    %c0_i32_1 = arith.constant 0 : i32
    return %c0_i32, %c0_i32_0 : i32, i32
  }
  func.func @transform_11(%arg0: i32) -> (i32, i32) {
    %c0_i32 = arith.constant 0 : i32
    %c0_i32_0 = arith.constant 0 : i32
    %c0_i32_1 = arith.constant 0 : i32
    return %c0_i32, %c0_i32_0 : i32, i32
  }
  func.func @transform_12(%arg0: i32) -> (i32, i32) {
    %c0_i32 = arith.constant 0 : i32
    %c0_i32_0 = arith.constant 0 : i32
    %c0_i32_1 = arith.constant 0 : i32
    return %c0_i32, %c0_i32_0 : i32, i32
  }
  func.func @transform_13(%arg0: i32) -> (i32, i32) {
    %c0_i32 = arith.constant 0 : i32
    %c0_i32_0 = arith.constant 0 : i32
    %c0_i32_1 = arith.constant 0 : i32
    return %c0_i32, %c0_i32_0 : i32, i32
  }
  func.func @transform_14(%arg0: i32) -> (i32, i32, i32) {
    %c0_i32 = arith.constant 0 : i32
    %c0_i32_0 = arith.constant 0 : i32
    %c0_i32_1 = arith.constant 0 : i32
    return %arg0, %c0_i32, %c0_i32_0 : i32, i32, i32
  }
}

</mosaic_0001>

<llo_original>
// kernel: tpu_custom_call.1
$region0: #{tpu_custom_call.1}
  #allocation0 [shape = 'u32[]', space=smem, size = 0x4, offset = 0x4, fixed_abs, tag = 'smem constant byte address 0x4 - core index']
  #allocation1 [shape = 'u32[144,128]{1,0:T(1,128)}', space=vmem, size = 0x12000, scoped, tag = 'internal scratch']
  #allocation2 [shape = 'bf16[32,128]{1,0:T(8,128)(2,1)}', space=vmem, size = 0x2000, scoped, tag = 'scratch operand']
  %s0 = inlined_call_operand.hbm [shape: f32[2,16,128], index: 0, kind: input, shape index: {}]
  %s1 = inlined_call_operand.hbm [shape: f32[2,16], index: 1, kind: input, shape index: {}]
  %s2 = inlined_call_operand.hbm [shape: f32[1,128], index: 2, kind: input, shape index: {}]
  %s3 = inlined_call_operand.hbm [shape: f32[1,128], index: 3, kind: input, shape index: {}]
  %s4 = inlined_call_operand.hbm [shape: bf16[128,384], index: 4, kind: input, shape index: {}]
  %s5 = inlined_call_operand.vmem [shape: f32[1,384], index: 5, kind: input, shape index: {}]
  %s6 = inlined_call_operand.hbm [shape: bf16[128,128], index: 6, kind: input, shape index: {}]
  %s7 = inlined_call_operand.vmem [shape: f32[1,128], index: 7, kind: input, shape index: {}]
  %s8 = inlined_call_operand.vmem [shape: f32[1,128], index: 8, kind: input, shape index: {}]
  %s9 = inlined_call_operand.vmem [shape: f32[1,128], index: 9, kind: input, shape index: {}]
  %s10 = inlined_call_operand.hbm [shape: bf16[128,512], index: 10, kind: input, shape index: {}]
  %s11 = inlined_call_operand.vmem [shape: f32[1,512], index: 11, kind: input, shape index: {}]
  %s12 = inlined_call_operand.hbm [shape: bf16[512,128], index: 12, kind: input, shape index: {}]
  %s13 = inlined_call_operand.vmem [shape: f32[1,128], index: 13, kind: input, shape index: {}]
  %s14 = inlined_call_operand.hbm [shape: f32[2,16,128], index: 14, kind: output, shape index: {}]
  %s15 = sld [smem:[#allocation0]]
  $region98: #{tpu_custom_call.1} parent=0
    _
  %s17 = ssub.s32 1, %s15
  %s18 = scalar_select 0, %s17, %s15
  $region1: #{tpu_custom_call.1} parent=0
    #allocation3 [shape = 'u8[16384]{0}', space=vmem, size = 0x4000, scoped, tag = 'input window, operand 0, single buffered']
    #allocation4 [shape = 's32[1]{0}', space=sflag, size = 0x4, scoped, tag = 'scoped memory for tpu_custom_call.1']
    #allocation5 [shape = 's32[1]{0}', space=sflag, size = 0x4, scoped, tag = 'scoped memory for tpu_custom_call.1']
    #allocation6 [shape = 'u8[1024]{0}', space=vmem, size = 0x400, scoped, tag = 'input window, operand 1, single buffered']
    #allocation7 [shape = 's32[1]{0}', space=sflag, size = 0x4, scoped, tag = 'scoped memory for tpu_custom_call.1']
    #allocation8 [shape = 'u8[512]{0}', space=vmem, size = 0x400, scoped, tag = 'input window, operand 2, single buffered']
    #allocation9 [shape = 'u8[512]{0}', space=vmem, size = 0x400, scoped, tag = 'input window, operand 3, single buffered']
    #allocation10 [shape = 's32[1]{0}', space=sflag, size = 0x4, scoped, tag = 'scoped memory for tpu_custom_call.1']
    #allocation11 [shape = 'u8[98304]{0}', space=vmem, size = 0x18000, scoped, tag = 'input window, operand 4, single buffered']
    #allocation12 [shape = 'u8[32768]{0}', space=vmem, size = 0x8000, scoped, tag = 'input window, operand 6, single buffered']
    #allocation13 [shape = 's32[1]{0}', space=sflag, size = 0x4, scoped, tag = 'scoped memory for tpu_custom_call.1']
    #allocation14 [shape = 'u8[131072]{0}', space=vmem, size = 0x20000, scoped, tag = 'input window, operand 10, single buffered']
    #allocation15 [shape = 'u8[131072]{0}', space=vmem, size = 0x20000, scoped, tag = 'input window, operand 12, single buffered']
    #allocation16 [shape = 's32[1]{0}', space=sflag, size = 0x4, scoped, tag = 'scoped memory for tpu_custom_call.1']
    #allocation17 [shape = 'u8[16384]{0}', space=vmem, size = 0x4000, scoped, tag = 'output window, operand 0, single buffered']
    %19 = vsyncpa [#allocation4], 0
    %20 = vsyncpa [#allocation7], 0
    %21 = vsyncpa [#allocation10], 0
    %22 = vsyncpa [#allocation13], 0
    %23 = vsyncpa [#allocation16], 0
    %24 = vsyncpa [#allocation5], 0
    // Predicated region
    $region2: #{tpu_custom_call.1} parent=1 // pred_check
      _
    $region3: #{tpu_custom_call.1} parent=1 // pred_check_branch
      %26 = sbr.rel (0) target = $region5
    $region4: #{tpu_custom_call.1} parent=1 // pred_region
      %s28 = ssub.s32 512, 512
      %29 = vsyncadd [#allocation4], %s28
      %s30 = sshll.u32 [#allocation3], 4
      %s31 = int_to_ptr.vmem [resolvable:$true] %s30
      %36 = dma.hbm_to_vmem [thread:$0]  %s0, 512, %s31, [#allocation4], 128, 128, 8
    $region5: #{tpu_custom_call.1} parent=1 // pred_fallthru
      _
    // Predicated region
    $region6: #{tpu_custom_call.1} parent=1 // pred_check
      _
    $region7: #{tpu_custom_call.1} parent=1 // pred_check_branch
      %38 = sbr.rel (0) target = $region9
    $region8: #{tpu_custom_call.1} parent=1 // pred_region
      %s40 = ssub.s32 32, 32
      %41 = vsyncadd [#allocation7], %s40
      %s43 = sshll.u32 [#allocation6], 4
      %s44 = int_to_ptr.vmem [resolvable:$true] %s43
      %46 = dma.hbm_to_vmem [thread:$0]  %s1, 32, %s44, [#allocation7]
    $region9: #{tpu_custom_call.1} parent=1 // pred_fallthru
      _
    // Predicated region
    $region10: #{tpu_custom_call.1} parent=1 // pred_check
      _
    $region11: #{tpu_custom_call.1} parent=1 // pred_check_branch
      %48 = sbr.rel (0) target = $region13
    $region12: #{tpu_custom_call.1} parent=1 // pred_region
      %s50 = ssub.s32 16, 16
      %51 = vsyncadd [#allocation7], %s50
      %s53 = sshll.u32 [#allocation8], 4
      %s54 = int_to_ptr.vmem [resolvable:$true] %s53
      %56 = dma.hbm_to_vmem [thread:$0]  %s2, 16, %s54, [#allocation7]
    $region13: #{tpu_custom_call.1} parent=1 // pred_fallthru
      _
    // Predicated region
    $region14: #{tpu_custom_call.1} parent=1 // pred_check
      _
    $region15: #{tpu_custom_call.1} parent=1 // pred_check_branch
      %58 = sbr.rel (0) target = $region17
    $region16: #{tpu_custom_call.1} parent=1 // pred_region
      %s60 = ssub.s32 16, 16
      %61 = vsyncadd [#allocation10], %s60
      %s63 = sshll.u32 [#allocation9], 4
      %s64 = int_to_ptr.vmem [resolvable:$true] %s63
      %66 = dma.hbm_to_vmem [thread:$0]  %s3, 16, %s64, [#allocation10]
    $region17: #{tpu_custom_call.1} parent=1 // pred_fallthru
      _
    // Predicated region
    $region18: #{tpu_custom_call.1} parent=1 // pred_check
      _
    $region19: #{tpu_custom_call.1} parent=1 // pred_check_branch
      %68 = sbr.rel (0) target = $region21
    $region20: #{tpu_custom_call.1} parent=1 // pred_region
      %s70 = ssub.s32 3072, 3072
      %71 = vsyncadd [#allocation10], %s70
      %s72 = sshll.u32 [#allocation11], 4
      %s73 = int_to_ptr.vmem [resolvable:$true] %s72
      %78 = dma.hbm_to_vmem [thread:$0]  %s4, 3072, %s73, [#allocation10], 192, 192, 12
    $region21: #{tpu_custom_call.1} parent=1 // pred_fallthru
      _
    // Predicated region
    $region22: #{tpu_custom_call.1} parent=1 // pred_check
      _
    $region23: #{tpu_custom_call.1} parent=1 // pred_check_branch
      %80 = sbr.rel (0) target = $region25
    $region24: #{tpu_custom_call.1} parent=1 // pred_region
      _
    $region25: #{tpu_custom_call.1} parent=1 // pred_fallthru
      _
    // Predicated region
    $region26: #{tpu_custom_call.1} parent=1 // pred_check
      _
    $region27: #{tpu_custom_call.1} parent=1 // pred_check_branch
      %82 = sbr.rel (0) target = $region29
    $region28: #{tpu_custom_call.1} parent=1 // pred_region
      %s84 = ssub.s32 1024, 1024
      %85 = vsyncadd [#allocation13], %s84
      %s86 = sshll.u32 [#allocation12], 4
      %s87 = int_to_ptr.vmem [resolvable:$true] %s86
      %92 = dma.hbm_to_vmem [thread:$0]  %s6, 1024, %s87, [#allocation13], 64, 64, 4
    $region29: #{tpu_custom_call.1} parent=1 // pred_fallthru
      _
    // Predicated region
    $region30: #{tpu_custom_call.1} parent=1 // pred_check
      _
    $region31: #{tpu_custom_call.1} parent=1 // pred_check_branch
      %94 = sbr.rel (0) target = $region33
    $region32: #{tpu_custom_call.1} parent=1 // pred_region
      _
    $region33: #{tpu_custom_call.1} parent=1 // pred_fallthru
      _
    // Predicated region
    $region34: #{tpu_custom_call.1} parent=1 // pred_check
      _
    $region35: #{tpu_custom_call.1} parent=1 // pred_check_branch
      %96 = sbr.rel (0) target = $region37
    $region36: #{tpu_custom_call.1} parent=1 // pred_region
      _
    $region37: #{tpu_custom_call.1} parent=1 // pred_fallthru
      _
    // Predicated region
    $region38: #{tpu_custom_call.1} parent=1 // pred_check
      _
    $region39: #{tpu_custom_call.1} parent=1 // pred_check_branch
      %98 = sbr.rel (0) target = $region41
    $region40: #{tpu_custom_call.1} parent=1 // pred_region
      _
    $region41: #{tpu_custom_call.1} parent=1 // pred_fallthru
      _
    // Predicated region
    $region42: #{tpu_custom_call.1} parent=1 // pred_check
      _
    $region43: #{tpu_custom_call.1} parent=1 // pred_check_branch
      %100 = sbr.rel (0) target = $region45
    $region44: #{tpu_custom_call.1} parent=1 // pred_region
      %s102 = ssub.s32 4096, 4096
      %103 = vsyncadd [#allocation13], %s102
      %s104 = sshll.u32 [#allocation14], 4
      %s105 = int_to_ptr.vmem [resolvable:$true] %s104
      %110 = dma.hbm_to_vmem [thread:$0]  %s10, 4096, %s105, [#allocation13], 256, 256, 16
    $region45: #{tpu_custom_call.1} parent=1 // pred_fallthru
      _
    // Predicated region
    $region46: #{tpu_custom_call.1} parent=1 // pred_check
      _
    $region47: #{tpu_custom_call.1} parent=1 // pred_check_branch
      %112 = sbr.rel (0) target = $region49
    $region48: #{tpu_custom_call.1} parent=1 // pred_region
      _
    $region49: #{tpu_custom_call.1} parent=1 // pred_fallthru
      _
    // Predicated region
    $region50: #{tpu_custom_call.1} parent=1 // pred_check
      _
    $region51: #{tpu_custom_call.1} parent=1 // pred_check_branch
      %114 = sbr.rel (0) target = $region53
    $region52: #{tpu_custom_call.1} parent=1 // pred_region
      %s116 = ssub.s32 4096, 4096
      %117 = vsyncadd [#allocation16], %s116
      %s118 = sshll.u32 [#allocation15], 4
      %s119 = int_to_ptr.vmem [resolvable:$true] %s118
      %124 = dma.hbm_to_vmem [thread:$0]  %s12, 4096, %s119, [#allocation16], 64, 64, 4
    $region53: #{tpu_custom_call.1} parent=1 // pred_fallthru
      _
    // Predicated region
    $region54: #{tpu_custom_call.1} parent=1 // pred_check
      _
    $region55: #{tpu_custom_call.1} parent=1 // pred_check_branch
      %126 = sbr.rel (0) target = $region57
    $region56: #{tpu_custom_call.1} parent=1 // pred_region
      _
    $region57: #{tpu_custom_call.1} parent=1 // pred_fallthru
      _
    // Predicated region
    $region58: #{tpu_custom_call.1} parent=1 // pred_check
      _
    $region59: #{tpu_custom_call.1} parent=1 // pred_check_branch
      %128 = sbr.rel (0) target = $region61
    $region60: #{tpu_custom_call.1} parent=1 // pred_region
      %129 = dma.done [#allocation4], 512
    $region61: #{tpu_custom_call.1} parent=1 // pred_fallthru
      _
    // Predicated region
    $region62: #{tpu_custom_call.1} parent=1 // pred_check
      _
    $region63: #{tpu_custom_call.1} parent=1 // pred_check_branch
      %131 = sbr.rel (0) target = $region65
    $region64: #{tpu_custom_call.1} parent=1 // pred_region
      %132 = dma.done [#allocation7], 32
    $region65: #{tpu_custom_call.1} parent=1 // pred_fallthru
      _
    // Predicated region
    $region66: #{tpu_custom_call.1} parent=1 // pred_check
      _
    $region67: #{tpu_custom_call.1} parent=1 // pred_check_branch
      %134 = sbr.rel (0) target = $region69
    $region68: #{tpu_custom_call.1} parent=1 // pred_region
      %135 = dma.done [#allocation7], 16
    $region69: #{tpu_custom_call.1} parent=1 // pred_fallthru
      _
    // Predicated region
    $region70: #{tpu_custom_call.1} parent=1 // pred_check
      _
    $region71: #{tpu_custom_call.1} parent=1 // pred_check_branch
      %137 = sbr.rel (0) target = $region73
    $region72: #{tpu_custom_call.1} parent=1 // pred_region
      %138 = dma.done [#allocation10], 16
    $region73: #{tpu_custom_call.1} parent=1 // pred_fallthru
      _
    // Predicated region
    $region74: #{tpu_custom_call.1} parent=1 // pred_check
      _
    $region75: #{tpu_custom_call.1} parent=1 // pred_check_branch
      %140 = sbr.rel (0) target = $region77
    $region76: #{tpu_custom_call.1} parent=1 // pred_region
      %141 = dma.done [#allocation10], 3072
    $region77: #{tpu_custom_call.1} parent=1 // pred_fallthru
      _
    // Predicated region
    $region78: #{tpu_custom_call.1} parent=1 // pred_check
      _
    $region79: #{tpu_custom_call.1} parent=1 // pred_check_branch
      %143 = sbr.rel (0) target = $region81
    $region80: #{tpu_custom_call.1} parent=1 // pred_region
      %144 = dma.done [#allocation13], 1024
    $region81: #{tpu_custom_call.1} parent=1 // pred_fallthru
      _
    // Predicated region
    $region82: #{tpu_custom_call.1} parent=1 // pred_check
      _
    $region83: #{tpu_custom_call.1} parent=1 // pred_check_branch
      %146 = sbr.rel (0) target = $region85
    $region84: #{tpu_custom_call.1} parent=1 // pred_region
      %147 = dma.done [#allocation13], 4096
    $region85: #{tpu_custom_call.1} parent=1 // pred_fallthru
      _
    // Predicated region
    $region86: #{tpu_custom_call.1} parent=1 // pred_check
      _
    $region87: #{tpu_custom_call.1} parent=1 // pred_check_branch
      %149 = sbr.rel (0) target = $region89
    $region88: #{tpu_custom_call.1} parent=1 // pred_region
      %150 = dma.done [#allocation16], 4096
    $region89: #{tpu_custom_call.1} parent=1 // pred_fallthru
      _
    %v152 = vld [vmem:[#allocation3] sm:$0xff]
    %v153 = vld [vmem:[#allocation3 + $0x8] sm:$0xff]
    %v154 = vld [vmem:[#allocation3 + $0x10] sm:$0xff]
    %v155 = vld [vmem:[#allocation3 + $0x18] sm:$0xff]
    %v156 = vld [vmem:[#allocation8] sm:$0x1]
    %v157 = vld [vmem:[#allocation9] sm:$0x1]
    %158 = vadd.xlane.f32.xlu0 %v152
    %v159 = vpop.xlane.xlu0 %158
    %160 = vadd.xlane.f32.xlu0 %v153
    %v161 = vpop.xlane.xlu0 %160
    %162 = vadd.xlane.f32.xlu0 %v154
    %v163 = vpop.xlane.xlu0 %162
    %164 = vadd.xlane.f32.xlu0 %v155
    %v165 = vpop.xlane.xlu0 %164
    %v166 = vrcp.pop 128.0
    %v167 = vmul.f32 %v159, %v166
    %v168 = vmul.f32 %v161, %v166
    %v169 = vmul.f32 %v163, %v166
    %v170 = vmul.f32 %v165, %v166
    %v171 = vmul.f32 %v152, %v152
    %v172 = vmul.f32 %v153, %v153
    %v173 = vmul.f32 %v154, %v154
    %v174 = vmul.f32 %v155, %v155
    %175 = vadd.xlane.f32.xlu0 %v171
    %v176 = vpop.xlane.xlu0 %175
    %177 = vadd.xlane.f32.xlu0 %v172
    %v178 = vpop.xlane.xlu0 %177
    %179 = vadd.xlane.f32.xlu0 %v173
    %v180 = vpop.xlane.xlu0 %179
    %181 = vadd.xlane.f32.xlu0 %v174
    %v182 = vpop.xlane.xlu0 %181
    %v183 = vmul.f32 %v176, %v166
    %v184 = vmul.f32 %v178, %v166
    %v185 = vmul.f32 %v180, %v166
    %v186 = vmul.f32 %v182, %v166
    %v187 = vmul.f32 %v167, %v167
    %v188 = vmul.f32 %v168, %v168
    %v189 = vmul.f32 %v169, %v169
    %v190 = vmul.f32 %v170, %v170
    %v191 = vsub.f32 %v183, %v187
    %v192 = vsub.f32 %v184, %v188
    %v193 = vsub.f32 %v185, %v189
    %v194 = vsub.f32 %v186, %v190
    %v195 = vsub.f32 %v152, %v167
    %v196 = vsub.f32 %v153, %v168
    %v197 = vsub.f32 %v154, %v169
    %v198 = vsub.f32 %v155, %v170
    %v199 = vadd.f32 %v191, 1e-05
    %v200 = vadd.f32 %v192, 1e-05
    %v201 = vadd.f32 %v193, 1e-05
    %v202 = vadd.f32 %v194, 1e-05
    %v203 = vrsqrt.pop %v199
    %v204 = vrsqrt.pop %v200
    %v205 = vrsqrt.pop %v201
    %v206 = vrsqrt.pop %v202
    %v207 = vmul.f32 %v195, %v203
    %v208 = vmul.f32 %v196, %v204
    %v209 = vmul.f32 %v197, %v205
    %v210 = vmul.f32 %v198, %v206
    %v212 = vlaneseq
    %v213 = vshrl.u32 %v212, 7
    %v214 = vsub.s32 0, %v213
    %v215 = vrot.slane %v156, %v214
    %v217 = vmul.f32 %v207, %v215
    %v218 = vmul.f32 %v208, %v215
    %v219 = vmul.f32 %v209, %v215
    %v220 = vmul.f32 %v210, %v215
    %v222 = vlaneseq
    %v223 = vshrl.u32 %v222, 7
    %v224 = vsub.s32 0, %v223
    %v225 = vrot.slane %v157, %v224
    %v227 = vadd.f32 %v217, %v225
    %v228 = vadd.f32 %v218, %v225
    %v229 = vadd.f32 %v219, %v225
    %v230 = vadd.f32 %v220, %v225
    %v231 = vpack.c.bf16 %v228, %v227
    %v232 = vpack.c.bf16 %v230, %v229
    %v233 = vld [vmem:[#allocation11] sm:$0xff]
    %v234 = vld [vmem:[#allocation11 + $0x8] sm:$0xf]
    %v235 = vld [vmem:[#allocation11 + $0xc] sm:$0xff]
    %v236 = vld [vmem:[#allocation11 + $0x14] sm:$0xf]
    %v237 = vld [vmem:[#allocation11 + $0x18] sm:$0xff]
    %v238 = vld [vmem:[#allocation11 + $0x20] sm:$0xf]
    %v239 = vld [vmem:[#allocation11 + $0x24] sm:$0xff]
    %v240 = vld [vmem:[#allocation11 + $0x2c] sm:$0xf]
    %v241 = vld [vmem:[#allocation11 + $0x30] sm:$0xff]
    %v242 = vld [vmem:[#allocation11 + $0x38] sm:$0xf]
    %v243 = vld [vmem:[#allocation11 + $0x3c] sm:$0xff]
    %v244 = vld [vmem:[#allocation11 + $0x44] sm:$0xf]
    %v245 = vld [vmem:[#allocation11 + $0x48] sm:$0xff]
    %v246 = vld [vmem:[#allocation11 + $0x50] sm:$0xf]
    %v247 = vld [vmem:[#allocation11 + $0x54] sm:$0xff]
    %v248 = vld [vmem:[#allocation11 + $0x5c] sm:$0xf]
    %v249 = vld [vmem:[#allocation11 + $0x60] sm:$0xff]
    %v250 = vld [vmem:[#allocation11 + $0x68] sm:$0xf]
    %v251 = vld [vmem:[#allocation11 + $0x6c] sm:$0xff]
    %v252 = vld [vmem:[#allocation11 + $0x74] sm:$0xf]
    %v253 = vld [vmem:[#allocation11 + $0x78] sm:$0xff]
    %v254 = vld [vmem:[#allocation11 + $0x80] sm:$0xf]
    %v255 = vld [vmem:[#allocation11 + $0x84] sm:$0xff]
    %v256 = vld [vmem:[#allocation11 + $0x8c] sm:$0xf]
    %v257 = vld [vmem:[#allocation11 + $0x90] sm:$0xff]
    %v258 = vld [vmem:[#allocation11 + $0x98] sm:$0xf]
    %v259 = vld [vmem:[#allocation11 + $0x9c] sm:$0xff]
    %v260 = vld [vmem:[#allocation11 + $0xa4] sm:$0xf]
    %v261 = vld [vmem:[#allocation11 + $0xa8] sm:$0xff]
    %v262 = vld [vmem:[#allocation11 + $0xb0] sm:$0xf]
    %v263 = vld [vmem:[#allocation11 + $0xb4] sm:$0xff]
    %v264 = vld [vmem:[#allocation11 + $0xbc] sm:$0xf]
    %v265 = vld [vmem:[%s5] sm:$0x7]
    %v267 = vlaneseq
    %v268 = vshrl.u32 %v267, 7
    %v269 = vsub.s32 0, %v268
    %v270 = vrot.slane %v265, %v269
    %v271 = vlaneseq
    %v272 = vshrl.u32 %v271, 7
    %v273 = vsub.s32 1, %v272
    %v274 = vrot.slane %v265, %v273
    %v275 = vlaneseq
    %v276 = vshrl.u32 %v275, 7
    %v277 = vsub.s32 2, %v276
    %v278 = vrot.slane %v265, %v277
    %v314 = vunpack.c.l.b16 %v233
    %v315 = vunpack.c.h.b16 %v233
    %v316 = vunpack.c.l.b16 %v234
    %v317 = vunpack.c.l.b16 %v235
    %v318 = vunpack.c.h.b16 %v235
    %v319 = vunpack.c.l.b16 %v236
    %v320 = vunpack.c.l.b16 %v237
    %v321 = vunpack.c.h.b16 %v237
    %v322 = vunpack.c.l.b16 %v238
    %v323 = vunpack.c.l.b16 %v239
    %v324 = vunpack.c.h.b16 %v239
    %v325 = vunpack.c.l.b16 %v240
    %v326 = vunpack.c.l.b16 %v241
    %v327 = vunpack.c.h.b16 %v241
    %v328 = vunpack.c.l.b16 %v242
    %v329 = vunpack.c.l.b16 %v243
    %v330 = vunpack.c.h.b16 %v243
    %v331 = vunpack.c.l.b16 %v244
    %v332 = vunpack.c.l.b16 %v245
    %v333 = vunpack.c.h.b16 %v245
    %v334 = vunpack.c.l.b16 %v246
    %v335 = vunpack.c.l.b16 %v247
    %v336 = vunpack.c.h.b16 %v247
    %v337 = vunpack.c.l.b16 %v248
    %v338 = vunpack.c.l.b16 %v249
    %v339 = vunpack.c.h.b16 %v249
    %v340 = vunpack.c.l.b16 %v250
    %v341 = vunpack.c.l.b16 %v251
    %v342 = vunpack.c.h.b16 %v251
    %v343 = vunpack.c.l.b16 %v252
    %v344 = vunpack.c.l.b16 %v253
    %v345 = vunpack.c.h.b16 %v253
    %v346 = vunpack.c.l.b16 %v254
    %v347 = vunpack.c.l.b16 %v255
    %v348 = vunpack.c.h.b16 %v255
    %v349 = vunpack.c.l.b16 %v256
    %v350 = vunpack.c.l.b16 %v257
    %v351 = vunpack.c.h.b16 %v257
    %v352 = vunpack.c.l.b16 %v258
    %v353 = vunpack.c.l.b16 %v259
    %v354 = vunpack.c.h.b16 %v259
    %v355 = vunpack.c.l.b16 %v260
    %v356 = vunpack.c.l.b16 %v261
    %v357 = vunpack.c.h.b16 %v261
    %v358 = vunpack.c.l.b16 %v262
    %v359 = vunpack.c.l.b16 %v263
    %v360 = vunpack.c.h.b16 %v263
    %v361 = vunpack.c.l.b16 %v264
    %v362 = vpack.c.b16 %v317, %v314
    %v363 = vpack.c.b16 %v318, %v315
    %v364 = vpack.c.b16 %v319, %v316
    %v365 = vpack.c.b16 %v323, %v320
    %v366 = vpack.c.b16 %v324, %v321
    %v367 = vpack.c.b16 %v325, %v322
    %v368 = vpack.c.b16 %v329, %v326
    %v369 = vpack.c.b16 %v330, %v327
    %v370 = vpack.c.b16 %v331, %v328
    %v371 = vpack.c.b16 %v335, %v332
    %v372 = vpack.c.b16 %v336, %v333
    %v373 = vpack.c.b16 %v337, %v334
    %v374 = vpack.c.b16 %v341, %v338
    %v375 = vpack.c.b16 %v342, %v339
    %v376 = vpack.c.b16 %v343, %v340
    %v377 = vpack.c.b16 %v347, %v344
    %v378 = vpack.c.b16 %v348, %v345
    %v379 = vpack.c.b16 %v349, %v346
    %v380 = vpack.c.b16 %v353, %v350
    %v381 = vpack.c.b16 %v354, %v351
    %v382 = vpack.c.b16 %v355, %v352
    %v383 = vpack.c.b16 %v359, %v356
    %v384 = vpack.c.b16 %v360, %v357
    %v385 = vpack.c.b16 %v361, %v358
    %410 = vmatprep.subr.bf16.mxu0 %v384
    %411 = vmatpush1.bf16.msra.mxu0 %v383
    %412 = vmatprep.subr.bf16.mxu0 %v381
    %413 = vmatpush1.bf16.msra.mxu0 %v380
    %414 = vmatprep.subr.bf16.mxu0 %v378
    %415 = vmatpush1.bf16.msra.mxu0 %v377
    %416 = vmatprep.subr.bf16.mxu0 %v375
    %417 = vmatpush1.bf16.msra.mxu0 %v374
    %418 = vmatprep.subr.bf16.mxu0 %v372
    %419 = vmatpush1.bf16.msra.mxu0 %v371
    %420 = vmatprep.subr.bf16.mxu0 %v369
    %421 = vmatpush1.bf16.msra.mxu0 %v368
    %422 = vmatprep.subr.bf16.mxu0 %v366
    %423 = vmatpush1.bf16.msra.mxu0 %v365
    %424 = vmatprep.subr.bf16.mxu0 %v363
    %425 = vmatpush1.bf16.msra.mxu0 %v362
    %426 = vmatprep.subr.bf16.mxu0 0
    %427 = vmatpush2.bf16.msra.mxu0 0
    %428 = vmatprep.subr.bf16.mxu0 0
    %429 = vmatpush2.bf16.msra.mxu0 0
    %430 = vmatprep.subr.bf16.mxu0 0
    %431 = vmatpush2.bf16.msra.mxu0 0
    %432 = vmatprep.subr.bf16.mxu0 0
    %433 = vmatpush2.bf16.msra.mxu0 0
    %434 = vmatprep.subr.bf16.mxu0 0
    %435 = vmatpush2.bf16.msra.mxu0 0
    %436 = vmatprep.subr.bf16.mxu0 0
    %437 = vmatpush2.bf16.msra.mxu0 0
    %438 = vmatprep.subr.bf16.mxu0 0
    %439 = vmatpush2.bf16.msra.mxu0 0
    %440 = vmatprep.subr.bf16.mxu0 0
    %441 = vmatpush2.bf16.msra.mxu0 0
    %442 = vmatprep.mubr.bf16.mxu0 0
    %443 = vmatmul.mubr.bf16.gmra.mxu0 %v231
    %v444 = vpop.f32.mrf.mxu0
    %v445 = vadd.f32 %v270, %v444
    %v446 = vpop.f32.mrf.mxu0
    %v447 = vadd.f32 %v274, %v446
    %v448 = vpop.f32.mrf.mxu0
    %v449 = vadd.f32 %v270, %v448
    %v450 = vpop.f32.mrf.mxu0
    %v451 = vadd.f32 %v274, %v450
    %452 = vmatprep.mubr.bf16.mxu0 0
    %453 = vmatmul.mubr.bf16.gmra.mxu0 %v232
    %v454 = vpop.f32.mrf.mxu0
    %v455 = vadd.f32 %v270, %v454
    %v456 = vpop.f32.mrf.mxu0
    %v457 = vadd.f32 %v274, %v456
    %v458 = vpop.f32.mrf.mxu0
    %v459 = vadd.f32 %v270, %v458
    %v460 = vpop.f32.mrf.mxu0
    %v461 = vadd.f32 %v274, %v460
    %462 = vdwg.mxu0
    %463 = vmatprep.subr.bf16.mxu0 0
    %464 = vmatpush1.bf16.msra.mxu0 %v385
    %465 = vmatprep.subr.bf16.mxu0 0
    %466 = vmatpush1.bf16.msra.mxu0 %v382
    %467 = vmatprep.subr.bf16.mxu0 0
    %468 = vmatpush1.bf16.msra.mxu0 %v379
    %469 = vmatprep.subr.bf16.mxu0 0
    %470 = vmatpush1.bf16.msra.mxu0 %v376
    %471 = vmatprep.subr.bf16.mxu0 0
    %472 = vmatpush1.bf16.msra.mxu0 %v373
    %473 = vmatprep.subr.bf16.mxu0 0
    %474 = vmatpush1.bf16.msra.mxu0 %v370
    %475 = vmatprep.subr.bf16.mxu0 0
    %476 = vmatpush1.bf16.msra.mxu0 %v367
    %477 = vmatprep.subr.bf16.mxu0 0
    %478 = vmatpush1.bf16.msra.mxu0 %v364
    %479 = vmatprep.subr.bf16.mxu0 0
    %480 = vmatpush2.bf16.msra.mxu0 0
    %481 = vmatprep.subr.bf16.mxu0 0
    %482 = vmatpush2.bf16.msra.mxu0 0
    %483 = vmatprep.subr.bf16.mxu0 0
    %484 = vmatpush2.bf16.msra.mxu0 0
    %485 = vmatprep.subr.bf16.mxu0 0
    %486 = vmatpush2.bf16.msra.mxu0 0
    %487 = vmatprep.subr.bf16.mxu0 0
    %488 = vmatpush2.bf16.msra.mxu0 0
    %489 = vmatprep.subr.bf16.mxu0 0
    %490 = vmatpush2.bf16.msra.mxu0 0
    %491 = vmatprep.subr.bf16.mxu0 0
    %492 = vmatpush2.bf16.msra.mxu0 0
    %493 = vmatprep.subr.bf16.mxu0 0
    %494 = vmatpush2.bf16.msra.mxu0 0
    %495 = vmatprep.mubr.bf16.mxu0 0
    %496 = vmatmul.mubr.bf16.gmra.mxu0 %v231
    %v497 = vpop.f32.mrf.mxu0
    %v498 = vadd.f32 %v278, %v497
    %v499 = vpop.f32.mrf.mxu0
    %v500 = vpop.f32.mrf.mxu0
    %v501 = vadd.f32 %v278, %v500
    %v502 = vpop.f32.mrf.mxu0
    %503 = vmatprep.mubr.bf16.mxu0 0
    %504 = vmatmul.mubr.bf16.gmra.mxu0 %v232
    %v505 = vpop.f32.mrf.mxu0
    %v506 = vadd.f32 %v278, %v505
    %v507 = vpop.f32.mrf.mxu0
    %v508 = vpop.f32.mrf.mxu0
    %v509 = vadd.f32 %v278, %v508
    %v510 = vpop.f32.mrf.mxu0
    %511 = vdwg.mxu0
    %v512 = vmul.f32 %v445, 0.17677669
    %v513 = vmul.f32 %v449, 0.17677669
    %v514 = vmul.f32 %v455, 0.17677669
    %v515 = vmul.f32 %v459, 0.17677669
    %v516 = vpack.c.bf16 %v513, %v512
    %v517 = vpack.c.bf16 %v515, %v514
    %v518 = vpack.c.bf16 %v451, %v447
    %v519 = vpack.c.bf16 %v461, %v457
    %v520 = vpack.c.bf16 %v501, %v498
    %v521 = vpack.c.bf16 %v509, %v506
    %v522 = vld [vmem:[#allocation6] sm:$0x3]
    %v523 = vsub.f32 %v522, 1.0
    %v524 = vmul.f32 %v523, 1e+09
    %v525 = vlaneseq
    %v526 = vshrl.u32 %v525, 7
    %v527 = vsub.s32 0, %v526
    %v528 = vrot.slane %v524, %v527
    %vm529 = vcmask 261120
    %v531 = vsel %vm529, %v516, 0
    %v534 = vsel %vm529, %v518, 0
    %536 = vmatprep.subr.bf16.mxu0 0
    %537 = vmatpush1.bf16.xpose.msra.mxu0 0
    %538 = vmatprep.subr.bf16.mxu0 0
    %539 = vmatpush1.bf16.xpose.msra.mxu0 0
    %540 = vmatprep.subr.bf16.mxu0 0
    %541 = vmatpush1.bf16.xpose.msra.mxu0 0
    %542 = vmatprep.subr.bf16.mxu0 0
    %543 = vmatpush1.bf16.xpose.msra.mxu0 0
    %544 = vmatprep.subr.bf16.mxu0 0
    %545 = vmatpush1.bf16.xpose.msra.mxu0 0
    %546 = vmatprep.subr.bf16.mxu0 0
    %547 = vmatpush1.bf16.xpose.msra.mxu0 0
    %548 = vmatprep.subr.bf16.mxu0 0
    %549 = vmatpush1.bf16.xpose.msra.mxu0 0
    %550 = vmatprep.subr.bf16.mxu0 0
    %551 = vmatpush1.bf16.xpose.msra.mxu0 %v534
    %552 = vmatprep.subr.bf16.mxu0 0
    %553 = vmatpush2.bf16.xpose.msra.mxu0 0
    %554 = vmatprep.subr.bf16.mxu0 0
    %555 = vmatpush2.bf16.xpose.msra.mxu0 0
    %556 = vmatprep.subr.bf16.mxu0 0
    %557 = vmatpush2.bf16.xpose.msra.mxu0 0
    %558 = vmatprep.subr.bf16.mxu0 0
    %559 = vmatpush2.bf16.xpose.msra.mxu0 0
    %560 = vmatprep.subr.bf16.mxu0 0
    %561 = vmatpush2.bf16.xpose.msra.mxu0 0
    %562 = vmatprep.subr.bf16.mxu0 0
    %563 = vmatpush2.bf16.xpose.msra.mxu0 0
    %564 = vmatprep.subr.bf16.mxu0 0
    %565 = vmatpush2.bf16.xpose.msra.mxu0 0
    %566 = vmatprep.subr.bf16.mxu0 0
    %567 = vmatpush2.bf16.xpose.msra.mxu0 0
    %568 = vmatprep.mubr.bf16.mxu0 0
    %569 = vmatmul.mubr.bf16.gmra.mxu0 %v531
    %v570 = vpop.f32.mrf.mxu0
    %v571 = vadd.f32 %v528, %v570
    %v572 = vpop.f32.mrf.mxu0
    %v573 = vpop.f32.mrf.mxu0
    %v574 = vadd.f32 %v528, %v573
    %v575 = vpop.f32.mrf.mxu0
    %576 = vdwg.mxu0
    %vm577 = vcmask 130048
    %v578 = vsel %vm577, %v571, -inf
    %579 = vmax.xlane.f32.xlu0 %v578
    %v580 = vpop.xlane.xlu0 %579
    %v581 = vsel %vm577, %v574, -inf
    %582 = vmax.xlane.f32.xlu0 %v581
    %v583 = vpop.xlane.xlu0 %582
    %v584 = vsub.f32 %v571, %v580
    %v585 = vsub.f32 %v574, %v583
    %v586 = vmul.f32 %v584, 1.442695
    %v587 = vpow.pop %v586
    %v588 = vmul.f32 %v585, 1.442695
    %v589 = vpow.pop %v588
    %v590 = vsel %vm577, %v587, 0.0
    %591 = vadd.xlane.f32.xlu0 %v590
    %v592 = vpop.xlane.xlu0 %591
    %v593 = vsel %vm577, %v589, 0.0
    %594 = vadd.xlane.f32.xlu0 %v593
    %v595 = vpop.xlane.xlu0 %594
    %v596 = vrcp.pop %v592
    %v597 = vrcp.pop %v595
    %v598 = vmul.f32 %v587, %v596
    %v599 = vmul.f32 %v589, %v597
    %v600 = vpack.c.bf16 %v599, %v598
    %v602 = vsel %vm577, %v600, 0
    %604 = vmatprep.subr.bf16.mxu0 0
    %605 = vmatpush1.bf16.msra.mxu0 0
    %606 = vmatprep.subr.bf16.mxu0 0
    %607 = vmatpush1.bf16.msra.mxu0 0
    %608 = vmatprep.subr.bf16.mxu0 0
    %609 = vmatpush1.bf16.msra.mxu0 0
    %610 = vmatprep.subr.bf16.mxu0 0
    %611 = vmatpush1.bf16.msra.mxu0 0
    %612 = vmatprep.subr.bf16.mxu0 0
    %613 = vmatpush1.bf16.msra.mxu0 0
    %614 = vmatprep.subr.bf16.mxu0 0
    %615 = vmatpush1.bf16.msra.mxu0 0
    %616 = vmatprep.subr.bf16.mxu0 0
    %617 = vmatpush1.bf16.msra.mxu0 0
    %618 = vmatprep.subr.bf16.mxu0 0
    %619 = vmatpush1.bf16.msra.mxu0 %v520
    %620 = vmatprep.subr.bf16.mxu0 0
    %621 = vmatpush2.bf16.msra.mxu0 0
    %622 = vmatprep.subr.bf16.mxu0 0
    %623 = vmatpush2.bf16.msra.mxu0 0
    %624 = vmatprep.subr.bf16.mxu0 0
    %625 = vmatpush2.bf16.msra.mxu0 0
    %626 = vmatprep.subr.bf16.mxu0 0
    %627 = vmatpush2.bf16.msra.mxu0 0
    %628 = vmatprep.subr.bf16.mxu0 0
    %629 = vmatpush2.bf16.msra.mxu0 0
    %630 = vmatprep.subr.bf16.mxu0 0
    %631 = vmatpush2.bf16.msra.mxu0 0
    %632 = vmatprep.subr.bf16.mxu0 0
    %633 = vmatpush2.bf16.msra.mxu0 0
    %634 = vmatprep.subr.bf16.mxu0 0
    %635 = vmatpush2.bf16.msra.mxu0 0
    %636 = vmatprep.mubr.bf16.mxu0 0
    %637 = vmatmul.mubr.bf16.gmra.mxu0 %v602
    %v638 = vpop.f32.mrf.mxu0
    %v639 = vadd.f32 0.0, %v638
    %v640 = vpop.f32.mrf.mxu0
    %v641 = vpop.f32.mrf.mxu0
    %v642 = vadd.f32 0.0, %v641
    %v643 = vpop.f32.mrf.mxu0
    %644 = vdwg.mxu0
    %v645 = vpack.c.bf16 %v642, %v639
    %v647 = vunpack.c.l.b16 %v645
    %v648 = vunpack.c.h.b16 %v645
    %v649 = vpack.c.b16 %v647, %v647
    %v650 = vpack.c.b16 %v648, %v648
    %vm653 = vcmask 257024
    %654 = vst.msk [vmem:[#allocation2] sm:$0xf] %vm653, %v649
    %655 = vst.msk [vmem:[#allocation2 + $0x4] sm:$0xf] %vm653, %v650
    %657 = vrot.lane.b32.xlu0 %v516, 96
    %v658 = vpop.permute.xlu0 %657
    %660 = vrot.lane.b32.xlu0 %v518, 96
    %v661 = vpop.permute.xlu0 %660
    %v663 = vsel %vm529, %v658, 0
    %v666 = vsel %vm529, %v661, 0
    %668 = vmatprep.subr.bf16.mxu0 0
    %669 = vmatpush1.bf16.xpose.msra.mxu0 0
    %670 = vmatprep.subr.bf16.mxu0 0
    %671 = vmatpush1.bf16.xpose.msra.mxu0 0
    %672 = vmatprep.subr.bf16.mxu0 0
    %673 = vmatpush1.bf16.xpose.msra.mxu0 0
    %674 = vmatprep.subr.bf16.mxu0 0
    %675 = vmatpush1.bf16.xpose.msra.mxu0 0
    %676 = vmatprep.subr.bf16.mxu0 0
    %677 = vmatpush1.bf16.xpose.msra.mxu0 0
    %678 = vmatprep.subr.bf16.mxu0 0
    %679 = vmatpush1.bf16.xpose.msra.mxu0 0
    %680 = vmatprep.subr.bf16.mxu0 0
    %681 = vmatpush1.bf16.xpose.msra.mxu0 0
    %682 = vmatprep.subr.bf16.mxu0 0
    %683 = vmatpush1.bf16.xpose.msra.mxu0 %v666
    %684 = vmatprep.subr.bf16.mxu0 0
    %685 = vmatpush2.bf16.xpose.msra.mxu0 0
    %686 = vmatprep.subr.bf16.mxu0 0
    %687 = vmatpush2.bf16.xpose.msra.mxu0 0
    %688 = vmatprep.subr.bf16.mxu0 0
    %689 = vmatpush2.bf16.xpose.msra.mxu0 0
    %690 = vmatprep.subr.bf16.mxu0 0
    %691 = vmatpush2.bf16.xpose.msra.mxu0 0
    %692 = vmatprep.subr.bf16.mxu0 0
    %693 = vmatpush2.bf16.xpose.msra.mxu0 0
    %694 = vmatprep.subr.bf16.mxu0 0
    %695 = vmatpush2.bf16.xpose.msra.mxu0 0
    %696 = vmatprep.subr.bf16.mxu0 0
    %697 = vmatpush2.bf16.xpose.msra.mxu0 0
    %698 = vmatprep.subr.bf16.mxu0 0
    %699 = vmatpush2.bf16.xpose.msra.mxu0 0
    %700 = vmatprep.mubr.bf16.mxu0 0
    %701 = vmatmul.mubr.bf16.gmra.mxu0 %v663
    %v702 = vpop.f32.mrf.mxu0
    %v703 = vadd.f32 %v528, %v702
    %v704 = vpop.f32.mrf.mxu0
    %v705 = vpop.f32.mrf.mxu0
    %v706 = vadd.f32 %v528, %v705
    %v707 = vpop.f32.mrf.mxu0
    %708 = vdwg.mxu0
    %v709 = vsel %vm577, %v703, -inf
    %710 = vmax.xlane.f32.xlu0 %v709
    %v711 = vpop.xlane.xlu0 %710
    %v712 = vsel %vm577, %v706, -inf
    %713 = vmax.xlane.f32.xlu0 %v712
    %v714 = vpop.xlane.xlu0 %713
    %v715 = vsub.f32 %v703, %v711
    %v716 = vsub.f32 %v706, %v714
    %v717 = vmul.f32 %v715, 1.442695
    %v718 = vpow.pop %v717
    %v719 = vmul.f32 %v716, 1.442695
    %v720 = vpow.pop %v719
    %v721 = vsel %vm577, %v718, 0.0
    %722 = vadd.xlane.f32.xlu0 %v721
    %v723 = vpop.xlane.xlu0 %722
    %v724 = vsel %vm577, %v720, 0.0
    %725 = vadd.xlane.f32.xlu0 %v724
    %v726 = vpop.xlane.xlu0 %725
    %v727 = vrcp.pop %v723
    %v728 = vrcp.pop %v726
    %v729 = vmul.f32 %v718, %v727
    %v730 = vmul.f32 %v720, %v728
    %v731 = vpack.c.bf16 %v730, %v729
    %733 = vrot.lane.b32.xlu0 %v520, 96
    %v734 = vpop.permute.xlu0 %733
    %v737 = vsel %vm577, %v731, 0
    %739 = vmatprep.subr.bf16.mxu0 0
    %740 = vmatpush1.bf16.msra.mxu0 0
    %741 = vmatprep.subr.bf16.mxu0 0
    %742 = vmatpush1.bf16.msra.mxu0 0
    %743 = vmatprep.subr.bf16.mxu0 0
    %744 = vmatpush1.bf16.msra.mxu0 0
    %745 = vmatprep.subr.bf16.mxu0 0
    %746 = vmatpush1.bf16.msra.mxu0 0
    %747 = vmatprep.subr.bf16.mxu0 0
    %748 = vmatpush1.bf16.msra.mxu0 0
    %749 = vmatprep.subr.bf16.mxu0 0
    %750 = vmatpush1.bf16.msra.mxu0 0
    %751 = vmatprep.subr.bf16.mxu0 0
    %752 = vmatpush1.bf16.msra.mxu0 0
    %753 = vmatprep.subr.bf16.mxu0 0
    %754 = vmatpush1.bf16.msra.mxu0 %v734
    %755 = vmatprep.subr.bf16.mxu0 0
    %756 = vmatpush2.bf16.msra.mxu0 0
    %757 = vmatprep.subr.bf16.mxu0 0
    %758 = vmatpush2.bf16.msra.mxu0 0
    %759 = vmatprep.subr.bf16.mxu0 0
    %760 = vmatpush2.bf16.msra.mxu0 0
    %761 = vmatprep.subr.bf16.mxu0 0
    %762 = vmatpush2.bf16.msra.mxu0 0
    %763 = vmatprep.subr.bf16.mxu0 0
    %764 = vmatpush2.bf16.msra.mxu0 0
    %765 = vmatprep.subr.bf16.mxu0 0
    %766 = vmatpush2.bf16.msra.mxu0 0
    %767 = vmatprep.subr.bf16.mxu0 0
    %768 = vmatpush2.bf16.msra.mxu0 0
    %769 = vmatprep.subr.bf16.mxu0 0
    %770 = vmatpush2.bf16.msra.mxu0 0
    %771 = vmatprep.mubr.bf16.mxu0 0
    %772 = vmatmul.mubr.bf16.gmra.mxu0 %v737
    %v773 = vpop.f32.mrf.mxu0
    %v774 = vadd.f32 0.0, %v773
    %v775 = vpop.f32.mrf.mxu0
    %v776 = vpop.f32.mrf.mxu0
    %v777 = vadd.f32 0.0, %v776
    %v778 = vpop.f32.mrf.mxu0
    %779 = vdwg.mxu0
    %v780 = vpack.c.bf16 %v777, %v774
    %v782 = vunpack.c.l.b16 %v780
    %v783 = vunpack.c.h.b16 %v780
    %v784 = vpack.c.b16 %v782, %v782
    %v785 = vpack.c.b16 %v783, %v783
    %786 = vrot.lane.b32.xlu0 %v784, 32
    %v787 = vpop.permute.xlu0 %786
    %788 = vrot.lane.b32.xlu0 %v785, 32
    %v789 = vpop.permute.xlu0 %788
    %vm792 = vcmask 519424
    %793 = vst.msk [vmem:[#allocation2] sm:$0xf] %vm792, %v787
    %794 = vst.msk [vmem:[#allocation2 + $0x4] sm:$0xf] %vm792, %v789
    %795 = vrot.lane.b32.xlu0 %v516, 64
    %v796 = vpop.permute.xlu0 %795
    %797 = vrot.lane.b32.xlu0 %v518, 64
    %v798 = vpop.permute.xlu0 %797
    %v800 = vsel %vm529, %v796, 0
    %v803 = vsel %vm529, %v798, 0
    %805 = vmatprep.subr.bf16.mxu0 0
    %806 = vmatpush1.bf16.xpose.msra.mxu0 0
    %807 = vmatprep.subr.bf16.mxu0 0
    %808 = vmatpush1.bf16.xpose.msra.mxu0 0
    %809 = vmatprep.subr.bf16.mxu0 0
    %810 = vmatpush1.bf16.xpose.msra.mxu0 0
    %811 = vmatprep.subr.bf16.mxu0 0
    %812 = vmatpush1.bf16.xpose.msra.mxu0 0
    %813 = vmatprep.subr.bf16.mxu0 0
    %814 = vmatpush1.bf16.xpose.msra.mxu0 0
    %815 = vmatprep.subr.bf16.mxu0 0
    %816 = vmatpush1.bf16.xpose.msra.mxu0 0
    %817 = vmatprep.subr.bf16.mxu0 0
    %818 = vmatpush1.bf16.xpose.msra.mxu0 0
    %819 = vmatprep.subr.bf16.mxu0 0
    %820 = vmatpush1.bf16.xpose.msra.mxu0 %v803
    %821 = vmatprep.subr.bf16.mxu0 0
    %822 = vmatpush2.bf16.xpose.msra.mxu0 0
    %823 = vmatprep.subr.bf16.mxu0 0
    %824 = vmatpush2.bf16.xpose.msra.mxu0 0
    %825 = vmatprep.subr.bf16.mxu0 0
    %826 = vmatpush2.bf16.xpose.msra.mxu0 0
    %827 = vmatprep.subr.bf16.mxu0 0
    %828 = vmatpush2.bf16.xpose.msra.mxu0 0
    %829 = vmatprep.subr.bf16.mxu0 0
    %830 = vmatpush2.bf16.xpose.msra.mxu0 0
    %831 = vmatprep.subr.bf16.mxu0 0
    %832 = vmatpush2.bf16.xpose.msra.mxu0 0
    %833 = vmatprep.subr.bf16.mxu0 0
    %834 = vmatpush2.bf16.xpose.msra.mxu0 0
    %835 = vmatprep.subr.bf16.mxu0 0
    %836 = vmatpush2.bf16.xpose.msra.mxu0 0
    %837 = vmatprep.mubr.bf16.mxu0 0
    %838 = vmatmul.mubr.bf16.gmra.mxu0 %v800
    %v839 = vpop.f32.mrf.mxu0
    %v840 = vadd.f32 %v528, %v839
    %v841 = vpop.f32.mrf.mxu0
    %v842 = vpop.f32.mrf.mxu0
    %v843 = vadd.f32 %v528, %v842
    %v844 = vpop.f32.mrf.mxu0
    %845 = vdwg.mxu0
    %v846 = vsel %vm577, %v840, -inf
    %847 = vmax.xlane.f32.xlu0 %v846
    %v848 = vpop.xlane.xlu0 %847
    %v849 = vsel %vm577, %v843, -inf
    %850 = vmax.xlane.f32.xlu0 %v849
    %v851 = vpop.xlane.xlu0 %850
    %v852 = vsub.f32 %v840, %v848
    %v853 = vsub.f32 %v843, %v851
    %v854 = vmul.f32 %v852, 1.442695
    %v855 = vpow.pop %v854
    %v856 = vmul.f32 %v853, 1.442695
    %v857 = vpow.pop %v856
    %v858 = vsel %vm577, %v855, 0.0
    %859 = vadd.xlane.f32.xlu0 %v858
    %v860 = vpop.xlane.xlu0 %859
    %v861 = vsel %vm577, %v857, 0.0
    %862 = vadd.xlane.f32.xlu0 %v861
    %v863 = vpop.xlane.xlu0 %862
    %v864 = vrcp.pop %v860
    %v865 = vrcp.pop %v863
    %v866 = vmul.f32 %v855, %v864
    %v867 = vmul.f32 %v857, %v865
    %v868 = vpack.c.bf16 %v867, %v866
    %869 = vrot.lane.b32.xlu0 %v520, 64
    %v870 = vpop.permute.xlu0 %869
    %v873 = vsel %vm577, %v868, 0
    %875 = vmatprep.subr.bf16.mxu0 0
    %876 = vmatpush1.bf16.msra.mxu0 0
    %877 = vmatprep.subr.bf16.mxu0 0
    %878 = vmatpush1.bf16.msra.mxu0 0
    %879 = vmatprep.subr.bf16.mxu0 0
    %880 = vmatpush1.bf16.msra.mxu0 0
    %881 = vmatprep.subr.bf16.mxu0 0
    %882 = vmatpush1.bf16.msra.mxu0 0
    %883 = vmatprep.subr.bf16.mxu0 0
    %884 = vmatpush1.bf16.msra.mxu0 0
    %885 = vmatprep.subr.bf16.mxu0 0
    %886 = vmatpush1.bf16.msra.mxu0 0
    %887 = vmatprep.subr.bf16.mxu0 0
    %888 = vmatpush1.bf16.msra.mxu0 0
    %889 = vmatprep.subr.bf16.mxu0 0
    %890 = vmatpush1.bf16.msra.mxu0 %v870
    %891 = vmatprep.subr.bf16.mxu0 0
    %892 = vmatpush2.bf16.msra.mxu0 0
    %893 = vmatprep.subr.bf16.mxu0 0
    %894 = vmatpush2.bf16.msra.mxu0 0
    %895 = vmatprep.subr.bf16.mxu0 0
    %896 = vmatpush2.bf16.msra.mxu0 0
    %897 = vmatprep.subr.bf16.mxu0 0
    %898 = vmatpush2.bf16.msra.mxu0 0
    %899 = vmatprep.subr.bf16.mxu0 0
    %900 = vmatpush2.bf16.msra.mxu0 0
    %901 = vmatprep.subr.bf16.mxu0 0
    %902 = vmatpush2.bf16.msra.mxu0 0
    %903 = vmatprep.subr.bf16.mxu0 0
    %904 = vmatpush2.bf16.msra.mxu0 0
    %905 = vmatprep.subr.bf16.mxu0 0
    %906 = vmatpush2.bf16.msra.mxu0 0
    %907 = vmatprep.mubr.bf16.mxu0 0
    %908 = vmatmul.mubr.bf16.gmra.mxu0 %v873
    %v909 = vpop.f32.mrf.mxu0
    %v910 = vadd.f32 0.0, %v909
    %v911 = vpop.f32.mrf.mxu0
    %v912 = vpop.f32.mrf.mxu0
    %v913 = vadd.f32 0.0, %v912
    %v914 = vpop.f32.mrf.mxu0
    %915 = vdwg.mxu0
    %v916 = vpack.c.bf16 %v913, %v910
    %v918 = vunpack.c.l.b16 %v916
    %v919 = vunpack.c.h.b16 %v916
    %v920 = vpack.c.b16 %v918, %v918
    %v921 = vpack.c.b16 %v919, %v919
    %922 = vrot.lane.b32.xlu0 %v920, 64
    %v923 = vpop.permute.xlu0 %922
    %924 = vrot.lane.b32.xlu0 %v921, 64
    %v925 = vpop.permute.xlu0 %924
    %vm928 = vcmask 781824
    %929 = vst.msk [vmem:[#allocation2] sm:$0xf] %vm928, %v923
    %930 = vst.msk [vmem:[#allocation2 + $0x4] sm:$0xf] %vm928, %v925
    %931 = vrot.lane.b32.xlu0 %v516, 32
    %v932 = vpop.permute.xlu0 %931
    %933 = vrot.lane.b32.xlu0 %v518, 32
    %v934 = vpop.permute.xlu0 %933
    %v936 = vsel %vm529, %v932, 0
    %v939 = vsel %vm529, %v934, 0
    %941 = vmatprep.subr.bf16.mxu0 0
    %942 = vmatpush1.bf16.xpose.msra.mxu0 0
    %943 = vmatprep.subr.bf16.mxu0 0
    %944 = vmatpush1.bf16.xpose.msra.mxu0 0
    %945 = vmatprep.subr.bf16.mxu0 0
    %946 = vmatpush1.bf16.xpose.msra.mxu0 0
    %947 = vmatprep.subr.bf16.mxu0 0
    %948 = vmatpush1.bf16.xpose.msra.mxu0 0
    %949 = vmatprep.subr.bf16.mxu0 0
    %950 = vmatpush1.bf16.xpose.msra.mxu0 0
    %951 = vmatprep.subr.bf16.mxu0 0
    %952 = vmatpush1.bf16.xpose.msra.mxu0 0
    %953 = vmatprep.subr.bf16.mxu0 0
    %954 = vmatpush1.bf16.xpose.msra.mxu0 0
    %955 = vmatprep.subr.bf16.mxu0 0
    %956 = vmatpush1.bf16.xpose.msra.mxu0 %v939
    %957 = vmatprep.subr.bf16.mxu0 0
    %958 = vmatpush2.bf16.xpose.msra.mxu0 0
    %959 = vmatprep.subr.bf16.mxu0 0
    %960 = vmatpush2.bf16.xpose.msra.mxu0 0
    %961 = vmatprep.subr.bf16.mxu0 0
    %962 = vmatpush2.bf16.xpose.msra.mxu0 0
    %963 = vmatprep.subr.bf16.mxu0 0
    %964 = vmatpush2.bf16.xpose.msra.mxu0 0
    %965 = vmatprep.subr.bf16.mxu0 0
    %966 = vmatpush2.bf16.xpose.msra.mxu0 0
    %967 = vmatprep.subr.bf16.mxu0 0
    %968 = vmatpush2.bf16.xpose.msra.mxu0 0
    %969 = vmatprep.subr.bf16.mxu0 0
    %970 = vmatpush2.bf16.xpose.msra.mxu0 0
    %971 = vmatprep.subr.bf16.mxu0 0
    %972 = vmatpush2.bf16.xpose.msra.mxu0 0
    %973 = vmatprep.mubr.bf16.mxu0 0
    %974 = vmatmul.mubr.bf16.gmra.mxu0 %v936
    %v975 = vpop.f32.mrf.mxu0
    %v976 = vadd.f32 %v528, %v975
    %v977 = vpop.f32.mrf.mxu0
    %v978 = vpop.f32.mrf.mxu0
    %v979 = vadd.f32 %v528, %v978
    %v980 = vpop.f32.mrf.mxu0
    %981 = vdwg.mxu0
    %v982 = vsel %vm577, %v976, -inf
    %983 = vmax.xlane.f32.xlu0 %v982
    %v984 = vpop.xlane.xlu0 %983
    %v985 = vsel %vm577, %v979, -inf
    %986 = vmax.xlane.f32.xlu0 %v985
    %v987 = vpop.xlane.xlu0 %986
    %v988 = vsub.f32 %v976, %v984
    %v989 = vsub.f32 %v979, %v987
    %v990 = vmul.f32 %v988, 1.442695
    %v991 = vpow.pop %v990
    %v992 = vmul.f32 %v989, 1.442695
    %v993 = vpow.pop %v992
    %v994 = vsel %vm577, %v991, 0.0
    %995 = vadd.xlane.f32.xlu0 %v994
    %v996 = vpop.xlane.xlu0 %995
    %v997 = vsel %vm577, %v993, 0.0
    %998 = vadd.xlane.f32.xlu0 %v997
    %v999 = vpop.xlane.xlu0 %998
    %v1000 = vrcp.pop %v996
    %v1001 = vrcp.pop %v999
    %v1002 = vmul.f32 %v991, %v1000
    %v1003 = vmul.f32 %v993, %v1001
    %v1004 = vpack.c.bf16 %v1003, %v1002
    %1005 = vrot.lane.b32.xlu0 %v520, 32
    %v1006 = vpop.permute.xlu0 %1005
    %v1009 = vsel %vm577, %v1004, 0
    %1011 = vmatprep.subr.bf16.mxu0 0
    %1012 = vmatpush1.bf16.msra.mxu0 0
    %1013 = vmatprep.subr.bf16.mxu0 0
    %1014 = vmatpush1.bf16.msra.mxu0 0
    %1015 = vmatprep.subr.bf16.mxu0 0
    %1016 = vmatpush1.bf16.msra.mxu0 0
    %1017 = vmatprep.subr.bf16.mxu0 0
    %1018 = vmatpush1.bf16.msra.mxu0 0
    %1019 = vmatprep.subr.bf16.mxu0 0
    %1020 = vmatpush1.bf16.msra.mxu0 0
    %1021 = vmatprep.subr.bf16.mxu0 0
    %1022 = vmatpush1.bf16.msra.mxu0 0
    %1023 = vmatprep.subr.bf16.mxu0 0
    %1024 = vmatpush1.bf16.msra.mxu0 0
    %1025 = vmatprep.subr.bf16.mxu0 0
    %1026 = vmatpush1.bf16.msra.mxu0 %v1006
    %1027 = vmatprep.subr.bf16.mxu0 0
    %1028 = vmatpush2.bf16.msra.mxu0 0
    %1029 = vmatprep.subr.bf16.mxu0 0
    %1030 = vmatpush2.bf16.msra.mxu0 0
    %1031 = vmatprep.subr.bf16.mxu0 0
    %1032 = vmatpush2.bf16.msra.mxu0 0
    %1033 = vmatprep.subr.bf16.mxu0 0
    %1034 = vmatpush2.bf16.msra.mxu0 0
    %1035 = vmatprep.subr.bf16.mxu0 0
    %1036 = vmatpush2.bf16.msra.mxu0 0
    %1037 = vmatprep.subr.bf16.mxu0 0
    %1038 = vmatpush2.bf16.msra.mxu0 0
    %1039 = vmatprep.subr.bf16.mxu0 0
    %1040 = vmatpush2.bf16.msra.mxu0 0
    %1041 = vmatprep.subr.bf16.mxu0 0
    %1042 = vmatpush2.bf16.msra.mxu0 0
    %1043 = vmatprep.mubr.bf16.mxu0 0
    %1044 = vmatmul.mubr.bf16.gmra.mxu0 %v1009
    %v1045 = vpop.f32.mrf.mxu0
    %v1046 = vadd.f32 0.0, %v1045
    %v1047 = vpop.f32.mrf.mxu0
    %v1048 = vpop.f32.mrf.mxu0
    %v1049 = vadd.f32 0.0, %v1048
    %v1050 = vpop.f32.mrf.mxu0
    %1051 = vdwg.mxu0
    %v1052 = vpack.c.bf16 %v1049, %v1046
    %v1054 = vunpack.c.l.b16 %v1052
    %v1055 = vunpack.c.h.b16 %v1052
    %v1056 = vpack.c.b16 %v1054, %v1054
    %v1057 = vpack.c.b16 %v1055, %v1055
    %1058 = vrot.lane.b32.xlu0 %v1056, 96
    %v1059 = vpop.permute.xlu0 %1058
    %1060 = vrot.lane.b32.xlu0 %v1057, 96
    %v1061 = vpop.permute.xlu0 %1060
    %vm1064 = vcmask 1044224
    %1065 = vst.msk [vmem:[#allocation2] sm:$0xf] %vm1064, %v1059
    %1066 = vst.msk [vmem:[#allocation2 + $0x4] sm:$0xf] %vm1064, %v1061
    %v1067 = vlaneseq
    %v1068 = vshrl.u32 %v1067, 7
    %v1069 = vsub.s32 1, %v1068
    %v1070 = vrot.slane %v524, %v1069
    %v1072 = vsel %vm529, %v517, 0
    %v1075 = vsel %vm529, %v519, 0
    %1077 = vmatprep.subr.bf16.mxu0 0
    %1078 = vmatpush1.bf16.xpose.msra.mxu0 0
    %1079 = vmatprep.subr.bf16.mxu0 0
    %1080 = vmatpush1.bf16.xpose.msra.mxu0 0
    %1081 = vmatprep.subr.bf16.mxu0 0
    %1082 = vmatpush1.bf16.xpose.msra.mxu0 0
    %1083 = vmatprep.subr.bf16.mxu0 0
    %1084 = vmatpush1.bf16.xpose.msra.mxu0 0
    %1085 = vmatprep.subr.bf16.mxu0 0
    %1086 = vmatpush1.bf16.xpose.msra.mxu0 0
    %1087 = vmatprep.subr.bf16.mxu0 0
    %1088 = vmatpush1.bf16.xpose.msra.mxu0 0
    %1089 = vmatprep.subr.bf16.mxu0 0
    %1090 = vmatpush1.bf16.xpose.msra.mxu0 0
    %1091 = vmatprep.subr.bf16.mxu0 0
    %1092 = vmatpush1.bf16.xpose.msra.mxu0 %v1075
    %1093 = vmatprep.subr.bf16.mxu0 0
    %1094 = vmatpush2.bf16.xpose.msra.mxu0 0
    %1095 = vmatprep.subr.bf16.mxu0 0
    %1096 = vmatpush2.bf16.xpose.msra.mxu0 0
    %1097 = vmatprep.subr.bf16.mxu0 0
    %1098 = vmatpush2.bf16.xpose.msra.mxu0 0
    %1099 = vmatprep.subr.bf16.mxu0 0
    %1100 = vmatpush2.bf16.xpose.msra.mxu0 0
    %1101 = vmatprep.subr.bf16.mxu0 0
    %1102 = vmatpush2.bf16.xpose.msra.mxu0 0
    %1103 = vmatprep.subr.bf16.mxu0 0
    %1104 = vmatpush2.bf16.xpose.msra.mxu0 0
    %1105 = vmatprep.subr.bf16.mxu0 0
    %1106 = vmatpush2.bf16.xpose.msra.mxu0 0
    %1107 = vmatprep.subr.bf16.mxu0 0
    %1108 = vmatpush2.bf16.xpose.msra.mxu0 0
    %1109 = vmatprep.mubr.bf16.mxu0 0
    %1110 = vmatmul.mubr.bf16.gmra.mxu0 %v1072
    %v1111 = vpop.f32.mrf.mxu0
    %v1112 = vadd.f32 %v1070, %v1111
    %v1113 = vpop.f32.mrf.mxu0
    %v1114 = vpop.f32.mrf.mxu0
    %v1115 = vadd.f32 %v1070, %v1114
    %v1116 = vpop.f32.mrf.mxu0
    %1117 = vdwg.mxu0
    %v1118 = vsel %vm577, %v1112, -inf
    %1119 = vmax.xlane.f32.xlu0 %v1118
    %v1120 = vpop.xlane.xlu0 %1119
    %v1121 = vsel %vm577, %v1115, -inf
    %1122 = vmax.xlane.f32.xlu0 %v1121
    %v1123 = vpop.xlane.xlu0 %1122
    %v1124 = vsub.f32 %v1112, %v1120
    %v1125 = vsub.f32 %v1115, %v1123
    %v1126 = vmul.f32 %v1124, 1.442695
    %v1127 = vpow.pop %v1126
    %v1128 = vmul.f32 %v1125, 1.442695
    %v1129 = vpow.pop %v1128
    %v1130 = vsel %vm577, %v1127, 0.0
    %1131 = vadd.xlane.f32.xlu0 %v1130
    %v1132 = vpop.xlane.xlu0 %1131
    %v1133 = vsel %vm577, %v1129, 0.0
    %1134 = vadd.xlane.f32.xlu0 %v1133
    %v1135 = vpop.xlane.xlu0 %1134
    %v1136 = vrcp.pop %v1132
    %v1137 = vrcp.pop %v1135
    %v1138 = vmul.f32 %v1127, %v1136
    %v1139 = vmul.f32 %v1129, %v1137
    %v1140 = vpack.c.bf16 %v1139, %v1138
    %v1142 = vsel %vm577, %v1140, 0
    %1144 = vmatprep.subr.bf16.mxu0 0
    %1145 = vmatpush1.bf16.msra.mxu0 0
    %1146 = vmatprep.subr.bf16.mxu0 0
    %1147 = vmatpush1.bf16.msra.mxu0 0
    %1148 = vmatprep.subr.bf16.mxu0 0
    %1149 = vmatpush1.bf16.msra.mxu0 0
    %1150 = vmatprep.subr.bf16.mxu0 0
    %1151 = vmatpush1.bf16.msra.mxu0 0
    %1152 = vmatprep.subr.bf16.mxu0 0
    %1153 = vmatpush1.bf16.msra.mxu0 0
    %1154 = vmatprep.subr.bf16.mxu0 0
    %1155 = vmatpush1.bf16.msra.mxu0 0
    %1156 = vmatprep.subr.bf16.mxu0 0
    %1157 = vmatpush1.bf16.msra.mxu0 0
    %1158 = vmatprep.subr.bf16.mxu0 0
    %1159 = vmatpush1.bf16.msra.mxu0 %v521
    %1160 = vmatprep.subr.bf16.mxu0 0
    %1161 = vmatpush2.bf16.msra.mxu0 0
    %1162 = vmatprep.subr.bf16.mxu0 0
    %1163 = vmatpush2.bf16.msra.mxu0 0
    %1164 = vmatprep.subr.bf16.mxu0 0
    %1165 = vmatpush2.bf16.msra.mxu0 0
    %1166 = vmatprep.subr.bf16.mxu0 0
    %1167 = vmatpush2.bf16.msra.mxu0 0
    %1168 = vmatprep.subr.bf16.mxu0 0
    %1169 = vmatpush2.bf16.msra.mxu0 0
    %1170 = vmatprep.subr.bf16.mxu0 0
    %1171 = vmatpush2.bf16.msra.mxu0 0
    %1172 = vmatprep.subr.bf16.mxu0 0
    %1173 = vmatpush2.bf16.msra.mxu0 0
    %1174 = vmatprep.subr.bf16.mxu0 0
    %1175 = vmatpush2.bf16.msra.mxu0 0
    %1176 = vmatprep.mubr.bf16.mxu0 0
    %1177 = vmatmul.mubr.bf16.gmra.mxu0 %v1142
    %v1178 = vpop.f32.mrf.mxu0
    %v1179 = vadd.f32 0.0, %v1178
    %v1180 = vpop.f32.mrf.mxu0
    %v1181 = vpop.f32.mrf.mxu0
    %v1182 = vadd.f32 0.0, %v1181
    %v1183 = vpop.f32.mrf.mxu0
    %1184 = vdwg.mxu0
    %v1185 = vpack.c.bf16 %v1182, %v1179
    %v1187 = vunpack.c.l.b16 %v1185
    %v1188 = vunpack.c.h.b16 %v1185
    %v1189 = vpack.c.b16 %v1187, %v1187
    %v1190 = vpack.c.b16 %v1188, %v1188
    %1193 = vst.msk [vmem:[#allocation2 + $0x8] sm:$0xf] %vm653, %v1189
    %1194 = vst.msk [vmem:[#allocation2 + $0xc] sm:$0xf] %vm653, %v1190
    %1196 = vrot.lane.b32.xlu0 %v517, 96
    %v1197 = vpop.permute.xlu0 %1196
    %1199 = vrot.lane.b32.xlu0 %v519, 96
    %v1200 = vpop.permute.xlu0 %1199
    %v1202 = vsel %vm529, %v1197, 0
    %v1205 = vsel %vm529, %v1200, 0
    %1207 = vmatprep.subr.bf16.mxu0 0
    %1208 = vmatpush1.bf16.xpose.msra.mxu0 0
    %1209 = vmatprep.subr.bf16.mxu0 0
    %1210 = vmatpush1.bf16.xpose.msra.mxu0 0
    %1211 = vmatprep.subr.bf16.mxu0 0
    %1212 = vmatpush1.bf16.xpose.msra.mxu0 0
    %1213 = vmatprep.subr.bf16.mxu0 0
    %1214 = vmatpush1.bf16.xpose.msra.mxu0 0
    %1215 = vmatprep.subr.bf16.mxu0 0
    %1216 = vmatpush1.bf16.xpose.msra.mxu0 0
    %1217 = vmatprep.subr.bf16.mxu0 0
    %1218 = vmatpush1.bf16.xpose.msra.mxu0 0
    %1219 = vmatprep.subr.bf16.mxu0 0
    %1220 = vmatpush1.bf16.xpose.msra.mxu0 0
    %1221 = vmatprep.subr.bf16.mxu0 0
    %1222 = vmatpush1.bf16.xpose.msra.mxu0 %v1205
    %1223 = vmatprep.subr.bf16.mxu0 0
    %1224 = vmatpush2.bf16.xpose.msra.mxu0 0
    %1225 = vmatprep.subr.bf16.mxu0 0
    %1226 = vmatpush2.bf16.xpose.msra.mxu0 0
    %1227 = vmatprep.subr.bf16.mxu0 0
    %1228 = vmatpush2.bf16.xpose.msra.mxu0 0
    %1229 = vmatprep.subr.bf16.mxu0 0
    %1230 = vmatpush2.bf16.xpose.msra.mxu0 0
    %1231 = vmatprep.subr.bf16.mxu0 0
    %1232 = vmatpush2.bf16.xpose.msra.mxu0 0
    %1233 = vmatprep.subr.bf16.mxu0 0
    %1234 = vmatpush2.bf16.xpose.msra.mxu0 0
    %1235 = vmatprep.subr.bf16.mxu0 0
    %1236 = vmatpush2.bf16.xpose.msra.mxu0 0
    %1237 = vmatprep.subr.bf16.mxu0 0
    %1238 = vmatpush2.bf16.xpose.msra.mxu0 0
    %1239 = vmatprep.mubr.bf16.mxu0 0
    %1240 = vmatmul.mubr.bf16.gmra.mxu0 %v1202
    %v1241 = vpop.f32.mrf.mxu0
    %v1242 = vadd.f32 %v1070, %v1241
    %v1243 = vpop.f32.mrf.mxu0
    %v1244 = vpop.f32.mrf.mxu0
    %v1245 = vadd.f32 %v1070, %v1244
    %v1246 = vpop.f32.mrf.mxu0
    %1247 = vdwg.mxu0
    %v1248 = vsel %vm577, %v1242, -inf
    %1249 = vmax.xlane.f32.xlu0 %v1248
    %v1250 = vpop.xlane.xlu0 %1249
    %v1251 = vsel %vm577, %v1245, -inf
    %1252 = vmax.xlane.f32.xlu0 %v1251
    %v1253 = vpop.xlane.xlu0 %1252
    %v1254 = vsub.f32 %v1242, %v1250
    %v1255 = vsub.f32 %v1245, %v1253
    %v1256 = vmul.f32 %v1254, 1.442695
    %v1257 = vpow.pop %v1256
    %v1258 = vmul.f32 %v1255, 1.442695
    %v1259 = vpow.pop %v1258
    %v1260 = vsel %vm577, %v1257, 0.0
    %1261 = vadd.xlane.f32.xlu0 %v1260
    %v1262 = vpop.xlane.xlu0 %1261
    %v1263 = vsel %vm577, %v1259, 0.0
    %1264 = vadd.xlane.f32.xlu0 %v1263
    %v1265 = vpop.xlane.xlu0 %1264
    %v1266 = vrcp.pop %v1262
    %v1267 = vrcp.pop %v1265
    %v1268 = vmul.f32 %v1257, %v1266
    %v1269 = vmul.f32 %v1259, %v1267
    %v1270 = vpack.c.bf16 %v1269, %v1268
    %1272 = vrot.lane.b32.xlu0 %v521, 96
    %v1273 = vpop.permute.xlu0 %1272
    %v1276 = vsel %vm577, %v1270, 0
    %1278 = vmatprep.subr.bf16.mxu0 0
    %1279 = vmatpush1.bf16.msra.mxu0 0
    %1280 = vmatprep.subr.bf16.mxu0 0
    %1281 = vmatpush1.bf16.msra.mxu0 0
    %1282 = vmatprep.subr.bf16.mxu0 0
    %1283 = vmatpush1.bf16.msra.mxu0 0
    %1284 = vmatprep.subr.bf16.mxu0 0
    %1285 = vmatpush1.bf16.msra.mxu0 0
    %1286 = vmatprep.subr.bf16.mxu0 0
    %1287 = vmatpush1.bf16.msra.mxu0 0
    %1288 = vmatprep.subr.bf16.mxu0 0
    %1289 = vmatpush1.bf16.msra.mxu0 0
    %1290 = vmatprep.subr.bf16.mxu0 0
    %1291 = vmatpush1.bf16.msra.mxu0 0
    %1292 = vmatprep.subr.bf16.mxu0 0
    %1293 = vmatpush1.bf16.msra.mxu0 %v1273
    %1294 = vmatprep.subr.bf16.mxu0 0
    %1295 = vmatpush2.bf16.msra.mxu0 0
    %1296 = vmatprep.subr.bf16.mxu0 0
    %1297 = vmatpush2.bf16.msra.mxu0 0
    %1298 = vmatprep.subr.bf16.mxu0 0
    %1299 = vmatpush2.bf16.msra.mxu0 0
    %1300 = vmatprep.subr.bf16.mxu0 0
    %1301 = vmatpush2.bf16.msra.mxu0 0
    %1302 = vmatprep.subr.bf16.mxu0 0
    %1303 = vmatpush2.bf16.msra.mxu0 0
    %1304 = vmatprep.subr.bf16.mxu0 0
    %1305 = vmatpush2.bf16.msra.mxu0 0
    %1306 = vmatprep.subr.bf16.mxu0 0
    %1307 = vmatpush2.bf16.msra.mxu0 0
    %1308 = vmatprep.subr.bf16.mxu0 0
    %1309 = vmatpush2.bf16.msra.mxu0 0
    %1310 = vmatprep.mubr.bf16.mxu0 0
    %1311 = vmatmul.mubr.bf16.gmra.mxu0 %v1276
    %v1312 = vpop.f32.mrf.mxu0
    %v1313 = vadd.f32 0.0, %v1312
    %v1314 = vpop.f32.mrf.mxu0
    %v1315 = vpop.f32.mrf.mxu0
    %v1316 = vadd.f32 0.0, %v1315
    %v1317 = vpop.f32.mrf.mxu0
    %1318 = vdwg.mxu0
    %v1319 = vpack.c.bf16 %v1316, %v1313
    %v1321 = vunpack.c.l.b16 %v1319
    %v1322 = vunpack.c.h.b16 %v1319
    %v1323 = vpack.c.b16 %v1321, %v1321
    %v1324 = vpack.c.b16 %v1322, %v1322
    %1325 = vrot.lane.b32.xlu0 %v1323, 32
    %v1326 = vpop.permute.xlu0 %1325
    %1327 = vrot.lane.b32.xlu0 %v1324, 32
    %v1328 = vpop.permute.xlu0 %1327
    %1331 = vst.msk [vmem:[#allocation2 + $0x8] sm:$0xf] %vm792, %v1326
    %1332 = vst.msk [vmem:[#allocation2 + $0xc] sm:$0xf] %vm792, %v1328
    %1333 = vrot.lane.b32.xlu0 %v517, 64
    %v1334 = vpop.permute.xlu0 %1333
    %1335 = vrot.lane.b32.xlu0 %v519, 64
    %v1336 = vpop.permute.xlu0 %1335
    %v1338 = vsel %vm529, %v1334, 0
    %v1341 = vsel %vm529, %v1336, 0
    %1343 = vmatprep.subr.bf16.mxu0 0
    %1344 = vmatpush1.bf16.xpose.msra.mxu0 0
    %1345 = vmatprep.subr.bf16.mxu0 0
    %1346 = vmatpush1.bf16.xpose.msra.mxu0 0
    %1347 = vmatprep.subr.bf16.mxu0 0
    %1348 = vmatpush1.bf16.xpose.msra.mxu0 0
    %1349 = vmatprep.subr.bf16.mxu0 0
    %1350 = vmatpush1.bf16.xpose.msra.mxu0 0
    %1351 = vmatprep.subr.bf16.mxu0 0
    %1352 = vmatpush1.bf16.xpose.msra.mxu0 0
    %1353 = vmatprep.subr.bf16.mxu0 0
    %1354 = vmatpush1.bf16.xpose.msra.mxu0 0
    %1355 = vmatprep.subr.bf16.mxu0 0
    %1356 = vmatpush1.bf16.xpose.msra.mxu0 0
    %1357 = vmatprep.subr.bf16.mxu0 0
    %1358 = vmatpush1.bf16.xpose.msra.mxu0 %v1341
    %1359 = vmatprep.subr.bf16.mxu0 0
    %1360 = vmatpush2.bf16.xpose.msra.mxu0 0
    %1361 = vmatprep.subr.bf16.mxu0 0
    %1362 = vmatpush2.bf16.xpose.msra.mxu0 0
    %1363 = vmatprep.subr.bf16.mxu0 0
    %1364 = vmatpush2.bf16.xpose.msra.mxu0 0
    %1365 = vmatprep.subr.bf16.mxu0 0
    %1366 = vmatpush2.bf16.xpose.msra.mxu0 0
    %1367 = vmatprep.subr.bf16.mxu0 0
    %1368 = vmatpush2.bf16.xpose.msra.mxu0 0
    %1369 = vmatprep.subr.bf16.mxu0 0
    %1370 = vmatpush2.bf16.xpose.msra.mxu0 0
    %1371 = vmatprep.subr.bf16.mxu0 0
    %1372 = vmatpush2.bf16.xpose.msra.mxu0 0
    %1373 = vmatprep.subr.bf16.mxu0 0
    %1374 = vmatpush2.bf16.xpose.msra.mxu0 0
    %1375 = vmatprep.mubr.bf16.mxu0 0
    %1376 = vmatmul.mubr.bf16.gmra.mxu0 %v1338
    %v1377 = vpop.f32.mrf.mxu0
    %v1378 = vadd.f32 %v1070, %v1377
    %v1379 = vpop.f32.mrf.mxu0
    %v1380 = vpop.f32.mrf.mxu0
    %v1381 = vadd.f32 %v1070, %v1380
    %v1382 = vpop.f32.mrf.mxu0
    %1383 = vdwg.mxu0
    %v1384 = vsel %vm577, %v1378, -inf
    %1385 = vmax.xlane.f32.xlu0 %v1384
    %v1386 = vpop.xlane.xlu0 %1385
    %v1387 = vsel %vm577, %v1381, -inf
    %1388 = vmax.xlane.f32.xlu0 %v1387
    %v1389 = vpop.xlane.xlu0 %1388
    %v1390 = vsub.f32 %v1378, %v1386
    %v1391 = vsub.f32 %v1381, %v1389
    %v1392 = vmul.f32 %v1390, 1.442695
    %v1393 = vpow.pop %v1392
    %v1394 = vmul.f32 %v1391, 1.442695
    %v1395 = vpow.pop %v1394
    %v1396 = vsel %vm577, %v1393, 0.0
    %1397 = vadd.xlane.f32.xlu0 %v1396
    %v1398 = vpop.xlane.xlu0 %1397
    %v1399 = vsel %vm577, %v1395, 0.0
    %1400 = vadd.xlane.f32.xlu0 %v1399
    %v1401 = vpop.xlane.xlu0 %1400
    %v1402 = vrcp.pop %v1398
    %v1403 = vrcp.pop %v1401
    %v1404 = vmul.f32 %v1393, %v1402
    %v1405 = vmul.f32 %v1395, %v1403
    %v1406 = vpack.c.bf16 %v1405, %v1404
    %1407 = vrot.lane.b32.xlu0 %v521, 64
    %v1408 = vpop.permute.xlu0 %1407
    %v1411 = vsel %vm577, %v1406, 0
    %1413 = vmatprep.subr.bf16.mxu0 0
    %1414 = vmatpush1.bf16.msra.mxu0 0
    %1415 = vmatprep.subr.bf16.mxu0 0
    %1416 = vmatpush1.bf16.msra.mxu0 0
    %1417 = vmatprep.subr.bf16.mxu0 0
    %1418 = vmatpush1.bf16.msra.mxu0 0
    %1419 = vmatprep.subr.bf16.mxu0 0
    %1420 = vmatpush1.bf16.msra.mxu0 0
    %1421 = vmatprep.subr.bf16.mxu0 0
    %1422 = vmatpush1.bf16.msra.mxu0 0
    %1423 = vmatprep.subr.bf16.mxu0 0
    %1424 = vmatpush1.bf16.msra.mxu0 0
    %1425 = vmatprep.subr.bf16.mxu0 0
    %1426 = vmatpush1.bf16.msra.mxu0 0
    %1427 = vmatprep.subr.bf16.mxu0 0
    %1428 = vmatpush1.bf16.msra.mxu0 %v1408
    %1429 = vmatprep.subr.bf16.mxu0 0
    %1430 = vmatpush2.bf16.msra.mxu0 0
    %1431 = vmatprep.subr.bf16.mxu0 0
    %1432 = vmatpush2.bf16.msra.mxu0 0
    %1433 = vmatprep.subr.bf16.mxu0 0
    %1434 = vmatpush2.bf16.msra.mxu0 0
    %1435 = vmatprep.subr.bf16.mxu0 0
    %1436 = vmatpush2.bf16.msra.mxu0 0
    %1437 = vmatprep.subr.bf16.mxu0 0
    %1438 = vmatpush2.bf16.msra.mxu0 0
    %1439 = vmatprep.subr.bf16.mxu0 0
    %1440 = vmatpush2.bf16.msra.mxu0 0
    %1441 = vmatprep.subr.bf16.mxu0 0
    %1442 = vmatpush2.bf16.msra.mxu0 0
    %1443 = vmatprep.subr.bf16.mxu0 0
    %1444 = vmatpush2.bf16.msra.mxu0 0
    %1445 = vmatprep.mubr.bf16.mxu0 0
    %1446 = vmatmul.mubr.bf16.gmra.mxu0 %v1411
    %v1447 = vpop.f32.mrf.mxu0
    %v1448 = vadd.f32 0.0, %v1447
    %v1449 = vpop.f32.mrf.mxu0
    %v1450 = vpop.f32.mrf.mxu0
    %v1451 = vadd.f32 0.0, %v1450
    %v1452 = vpop.f32.mrf.mxu0
    %1453 = vdwg.mxu0
    %v1454 = vpack.c.bf16 %v1451, %v1448
    %v1456 = vunpack.c.l.b16 %v1454
    %v1457 = vunpack.c.h.b16 %v1454
    %v1458 = vpack.c.b16 %v1456, %v1456
    %v1459 = vpack.c.b16 %v1457, %v1457
    %1460 = vrot.lane.b32.xlu0 %v1458, 64
    %v1461 = vpop.permute.xlu0 %1460
    %1462 = vrot.lane.b32.xlu0 %v1459, 64
    %v1463 = vpop.permute.xlu0 %1462
    %1466 = vst.msk [vmem:[#allocation2 + $0x8] sm:$0xf] %vm928, %v1461
    %1467 = vst.msk [vmem:[#allocation2 + $0xc] sm:$0xf] %vm928, %v1463
    %1468 = vrot.lane.b32.xlu0 %v517, 32
    %v1469 = vpop.permute.xlu0 %1468
    %1470 = vrot.lane.b32.xlu0 %v519, 32
    %v1471 = vpop.permute.xlu0 %1470
    %v1473 = vsel %vm529, %v1469, 0
    %v1476 = vsel %vm529, %v1471, 0
    %1478 = vmatprep.subr.bf16.mxu0 0
    %1479 = vmatpush1.bf16.xpose.msra.mxu0 0
    %1480 = vmatprep.subr.bf16.mxu0 0
    %1481 = vmatpush1.bf16.xpose.msra.mxu0 0
    %1482 = vmatprep.subr.bf16.mxu0 0
    %1483 = vmatpush1.bf16.xpose.msra.mxu0 0
    %1484 = vmatprep.subr.bf16.mxu0 0
    %1485 = vmatpush1.bf16.xpose.msra.mxu0 0
    %1486 = vmatprep.subr.bf16.mxu0 0
    %1487 = vmatpush1.bf16.xpose.msra.mxu0 0
    %1488 = vmatprep.subr.bf16.mxu0 0
    %1489 = vmatpush1.bf16.xpose.msra.mxu0 0
    %1490 = vmatprep.subr.bf16.mxu0 0
    %1491 = vmatpush1.bf16.xpose.msra.mxu0 0
    %1492 = vmatprep.subr.bf16.mxu0 0
    %1493 = vmatpush1.bf16.xpose.msra.mxu0 %v1476
    %1494 = vmatprep.subr.bf16.mxu0 0
    %1495 = vmatpush2.bf16.xpose.msra.mxu0 0
    %1496 = vmatprep.subr.bf16.mxu0 0
    %1497 = vmatpush2.bf16.xpose.msra.mxu0 0
    %1498 = vmatprep.subr.bf16.mxu0 0
    %1499 = vmatpush2.bf16.xpose.msra.mxu0 0
    %1500 = vmatprep.subr.bf16.mxu0 0
    %1501 = vmatpush2.bf16.xpose.msra.mxu0 0
    %1502 = vmatprep.subr.bf16.mxu0 0
    %1503 = vmatpush2.bf16.xpose.msra.mxu0 0
    %1504 = vmatprep.subr.bf16.mxu0 0
    %1505 = vmatpush2.bf16.xpose.msra.mxu0 0
    %1506 = vmatprep.subr.bf16.mxu0 0
    %1507 = vmatpush2.bf16.xpose.msra.mxu0 0
    %1508 = vmatprep.subr.bf16.mxu0 0
    %1509 = vmatpush2.bf16.xpose.msra.mxu0 0
    %1510 = vmatprep.mubr.bf16.mxu0 0
    %1511 = vmatmul.mubr.bf16.gmra.mxu0 %v1473
    %v1512 = vpop.f32.mrf.mxu0
    %v1513 = vadd.f32 %v1070, %v1512
    %v1514 = vpop.f32.mrf.mxu0
    %v1515 = vpop.f32.mrf.mxu0
    %v1516 = vadd.f32 %v1070, %v1515
    %v1517 = vpop.f32.mrf.mxu0
    %1518 = vdwg.mxu0
    %v1519 = vsel %vm577, %v1513, -inf
    %1520 = vmax.xlane.f32.xlu0 %v1519
    %v1521 = vpop.xlane.xlu0 %1520
    %v1522 = vsel %vm577, %v1516, -inf
    %1523 = vmax.xlane.f32.xlu0 %v1522
    %v1524 = vpop.xlane.xlu0 %1523
    %v1525 = vsub.f32 %v1513, %v1521
    %v1526 = vsub.f32 %v1516, %v1524
    %v1527 = vmul.f32 %v1525, 1.442695
    %v1528 = vpow.pop %v1527
    %v1529 = vmul.f32 %v1526, 1.442695
    %v1530 = vpow.pop %v1529
    %v1531 = vsel %vm577, %v1528, 0.0
    %1532 = vadd.xlane.f32.xlu0 %v1531
    %v1533 = vpop.xlane.xlu0 %1532
    %v1534 = vsel %vm577, %v1530, 0.0
    %1535 = vadd.xlane.f32.xlu0 %v1534
    %v1536 = vpop.xlane.xlu0 %1535
    %v1537 = vrcp.pop %v1533
    %v1538 = vrcp.pop %v1536
    %v1539 = vmul.f32 %v1528, %v1537
    %v1540 = vmul.f32 %v1530, %v1538
    %v1541 = vpack.c.bf16 %v1540, %v1539
    %1542 = vrot.lane.b32.xlu0 %v521, 32
    %v1543 = vpop.permute.xlu0 %1542
    %v1546 = vsel %vm577, %v1541, 0
    %1548 = vmatprep.subr.bf16.mxu0 0
    %1549 = vmatpush1.bf16.msra.mxu0 0
    %1550 = vmatprep.subr.bf16.mxu0 0
    %1551 = vmatpush1.bf16.msra.mxu0 0
    %1552 = vmatprep.subr.bf16.mxu0 0
    %1553 = vmatpush1.bf16.msra.mxu0 0
    %1554 = vmatprep.subr.bf16.mxu0 0
    %1555 = vmatpush1.bf16.msra.mxu0 0
    %1556 = vmatprep.subr.bf16.mxu0 0
    %1557 = vmatpush1.bf16.msra.mxu0 0
    %1558 = vmatprep.subr.bf16.mxu0 0
    %1559 = vmatpush1.bf16.msra.mxu0 0
    %1560 = vmatprep.subr.bf16.mxu0 0
    %1561 = vmatpush1.bf16.msra.mxu0 0
    %1562 = vmatprep.subr.bf16.mxu0 0
    %1563 = vmatpush1.bf16.msra.mxu0 %v1543
    %1564 = vmatprep.subr.bf16.mxu0 0
    %1565 = vmatpush2.bf16.msra.mxu0 0
    %1566 = vmatprep.subr.bf16.mxu0 0
    %1567 = vmatpush2.bf16.msra.mxu0 0
    %1568 = vmatprep.subr.bf16.mxu0 0
    %1569 = vmatpush2.bf16.msra.mxu0 0
    %1570 = vmatprep.subr.bf16.mxu0 0
    %1571 = vmatpush2.bf16.msra.mxu0 0
    %1572 = vmatprep.subr.bf16.mxu0 0
    %1573 = vmatpush2.bf16.msra.mxu0 0
    %1574 = vmatprep.subr.bf16.mxu0 0
    %1575 = vmatpush2.bf16.msra.mxu0 0
    %1576 = vmatprep.subr.bf16.mxu0 0
    %1577 = vmatpush2.bf16.msra.mxu0 0
    %1578 = vmatprep.subr.bf16.mxu0 0
    %1579 = vmatpush2.bf16.msra.mxu0 0
    %1580 = vmatprep.mubr.bf16.mxu0 0
    %1581 = vmatmul.mubr.bf16.gmra.mxu0 %v1546
    %v1582 = vpop.f32.mrf.mxu0
    %v1583 = vadd.f32 0.0, %v1582
    %v1584 = vpop.f32.mrf.mxu0
    %v1585 = vpop.f32.mrf.mxu0
    %v1586 = vadd.f32 0.0, %v1585
    %v1587 = vpop.f32.mrf.mxu0
    %1588 = vdwg.mxu0
    %v1589 = vpack.c.bf16 %v1586, %v1583
    %v1591 = vunpack.c.l.b16 %v1589
    %v1592 = vunpack.c.h.b16 %v1589
    %v1593 = vpack.c.b16 %v1591, %v1591
    %v1594 = vpack.c.b16 %v1592, %v1592
    %1595 = vrot.lane.b32.xlu0 %v1593, 96
    %v1596 = vpop.permute.xlu0 %1595
    %1597 = vrot.lane.b32.xlu0 %v1594, 96
    %v1598 = vpop.permute.xlu0 %1597
    %1601 = vst.msk [vmem:[#allocation2 + $0x8] sm:$0xf] %vm1064, %v1596
    %1602 = vst.msk [vmem:[#allocation2 + $0xc] sm:$0xf] %vm1064, %v1598
    %v1603 = vld [vmem:[#allocation2] sm:$0xf]
    %v1604 = vld [vmem:[#allocation2 + $0x4] sm:$0xf]
    %v1605 = vld [vmem:[#allocation2 + $0x8] sm:$0xf]
    %v1606 = vld [vmem:[#allocation2 + $0xc] sm:$0xf]
    %v1607 = vld [vmem:[#allocation12] sm:$0xf]
    %v1608 = vld [vmem:[#allocation12 + $0x4] sm:$0xf]
    %v1609 = vld [vmem:[#allocation12 + $0x8] sm:$0xf]
    %v1610 = vld [vmem:[#allocation12 + $0xc] sm:$0xf]
    %v1611 = vld [vmem:[#allocation12 + $0x10] sm:$0xf]
    %v1612 = vld [vmem:[#allocation12 + $0x14] sm:$0xf]
    %v1613 = vld [vmem:[#allocation12 + $0x18] sm:$0xf]
    %v1614 = vld [vmem:[#allocation12 + $0x1c] sm:$0xf]
    %v1615 = vld [vmem:[#allocation12 + $0x20] sm:$0xf]
    %v1616 = vld [vmem:[#allocation12 + $0x24] sm:$0xf]
    %v1617 = vld [vmem:[#allocation12 + $0x28] sm:$0xf]
    %v1618 = vld [vmem:[#allocation12 + $0x2c] sm:$0xf]
    %v1619 = vld [vmem:[#allocation12 + $0x30] sm:$0xf]
    %v1620 = vld [vmem:[#allocation12 + $0x34] sm:$0xf]
    %v1621 = vld [vmem:[#allocation12 + $0x38] sm:$0xf]
    %v1622 = vld [vmem:[#allocation12 + $0x3c] sm:$0xf]
    %v1623 = vld [vmem:[%s7] sm:$0x1]
    %v1625 = vlaneseq
    %v1626 = vshrl.u32 %v1625, 7
    %v1627 = vsub.s32 0, %v1626
    %v1628 = vrot.slane %v1623, %v1627
    %v1634 = vunpack.c.l.b16 %v1603
    %v1635 = vunpack.c.l.b16 %v1604
    %v1636 = vunpack.c.l.b16 %v1605
    %v1637 = vunpack.c.l.b16 %v1606
    %v1638 = vpack.c.b16 %v1635, %v1634
    %v1639 = vpack.c.b16 %v1637, %v1636
    %v1658 = vunpack.c.l.b16 %v1607
    %v1659 = vunpack.c.l.b16 %v1608
    %v1660 = vunpack.c.l.b16 %v1609
    %v1661 = vunpack.c.l.b16 %v1610
    %v1662 = vunpack.c.l.b16 %v1611
    %v1663 = vunpack.c.l.b16 %v1612
    %v1664 = vunpack.c.l.b16 %v1613
    %v1665 = vunpack.c.l.b16 %v1614
    %v1666 = vunpack.c.l.b16 %v1615
    %v1667 = vunpack.c.l.b16 %v1616
    %v1668 = vunpack.c.l.b16 %v1617
    %v1669 = vunpack.c.l.b16 %v1618
    %v1670 = vunpack.c.l.b16 %v1619
    %v1671 = vunpack.c.l.b16 %v1620
    %v1672 = vunpack.c.l.b16 %v1621
    %v1673 = vunpack.c.l.b16 %v1622
    %v1674 = vpack.c.b16 %v1659, %v1658
    %v1675 = vpack.c.b16 %v1661, %v1660
    %v1676 = vpack.c.b16 %v1663, %v1662
    %v1677 = vpack.c.b16 %v1665, %v1664
    %v1678 = vpack.c.b16 %v1667, %v1666
    %v1679 = vpack.c.b16 %v1669, %v1668
    %v1680 = vpack.c.b16 %v1671, %v1670
    %v1681 = vpack.c.b16 %v1673, %v1672
    %1690 = vmatprep.subr.bf16.mxu0 0
    %1691 = vmatpush1.bf16.msra.mxu0 %v1681
    %1692 = vmatprep.subr.bf16.mxu0 0
    %1693 = vmatpush1.bf16.msra.mxu0 %v1680
    %1694 = vmatprep.subr.bf16.mxu0 0
    %1695 = vmatpush1.bf16.msra.mxu0 %v1679
    %1696 = vmatprep.subr.bf16.mxu0 0
    %1697 = vmatpush1.bf16.msra.mxu0 %v1678
    %1698 = vmatprep.subr.bf16.mxu0 0
    %1699 = vmatpush1.bf16.msra.mxu0 %v1677
    %1700 = vmatprep.subr.bf16.mxu0 0
    %1701 = vmatpush1.bf16.msra.mxu0 %v1676
    %1702 = vmatprep.subr.bf16.mxu0 0
    %1703 = vmatpush1.bf16.msra.mxu0 %v1675
    %1704 = vmatprep.subr.bf16.mxu0 0
    %1705 = vmatpush1.bf16.msra.mxu0 %v1674
    %1706 = vmatprep.subr.bf16.mxu0 0
    %1707 = vmatpush2.bf16.msra.mxu0 0
    %1708 = vmatprep.subr.bf16.mxu0 0
    %1709 = vmatpush2.bf16.msra.mxu0 0
    %1710 = vmatprep.subr.bf16.mxu0 0
    %1711 = vmatpush2.bf16.msra.mxu0 0
    %1712 = vmatprep.subr.bf16.mxu0 0
    %1713 = vmatpush2.bf16.msra.mxu0 0
    %1714 = vmatprep.subr.bf16.mxu0 0
    %1715 = vmatpush2.bf16.msra.mxu0 0
    %1716 = vmatprep.subr.bf16.mxu0 0
    %1717 = vmatpush2.bf16.msra.mxu0 0
    %1718 = vmatprep.subr.bf16.mxu0 0
    %1719 = vmatpush2.bf16.msra.mxu0 0
    %1720 = vmatprep.subr.bf16.mxu0 0
    %1721 = vmatpush2.bf16.msra.mxu0 0
    %1722 = vmatprep.mubr.bf16.mxu0 0
    %1723 = vmatmul.mubr.bf16.gmra.mxu0 %v1638
    %v1724 = vpop.f32.mrf.mxu0
    %v1725 = vadd.f32 %v1628, %v1724
    %v1726 = vpop.f32.mrf.mxu0
    %v1727 = vpop.f32.mrf.mxu0
    %v1728 = vadd.f32 %v1628, %v1727
    %v1729 = vpop.f32.mrf.mxu0
    %1730 = vmatprep.mubr.bf16.mxu0 0
    %1731 = vmatmul.mubr.bf16.gmra.mxu0 %v1639
    %v1732 = vpop.f32.mrf.mxu0
    %v1733 = vadd.f32 %v1628, %v1732
    %v1734 = vpop.f32.mrf.mxu0
    %v1735 = vpop.f32.mrf.mxu0
    %v1736 = vadd.f32 %v1628, %v1735
    %v1737 = vpop.f32.mrf.mxu0
    %1738 = vdwg.mxu0
    %v1739 = vadd.f32 %v152, %v1725
    %v1740 = vadd.f32 %v153, %v1728
    %v1741 = vadd.f32 %v154, %v1733
    %v1742 = vadd.f32 %v155, %v1736
    %v1743 = vld [vmem:[%s8] sm:$0x1]
    %v1744 = vld [vmem:[%s9] sm:$0x1]
    %1745 = vadd.xlane.f32.xlu0 %v1739
    %v1746 = vpop.xlane.xlu0 %1745
    %1747 = vadd.xlane.f32.xlu0 %v1740
    %v1748 = vpop.xlane.xlu0 %1747
    %1749 = vadd.xlane.f32.xlu0 %v1741
    %v1750 = vpop.xlane.xlu0 %1749
    %1751 = vadd.xlane.f32.xlu0 %v1742
    %v1752 = vpop.xlane.xlu0 %1751
    %v1753 = vmul.f32 %v1746, %v166
    %v1754 = vmul.f32 %v1748, %v166
    %v1755 = vmul.f32 %v1750, %v166
    %v1756 = vmul.f32 %v1752, %v166
    %v1757 = vmul.f32 %v1739, %v1739
    %v1758 = vmul.f32 %v1740, %v1740
    %v1759 = vmul.f32 %v1741, %v1741
    %v1760 = vmul.f32 %v1742, %v1742
    %1761 = vadd.xlane.f32.xlu0 %v1757
    %v1762 = vpop.xlane.xlu0 %1761
    %1763 = vadd.xlane.f32.xlu0 %v1758
    %v1764 = vpop.xlane.xlu0 %1763
    %1765 = vadd.xlane.f32.xlu0 %v1759
    %v1766 = vpop.xlane.xlu0 %1765
    %1767 = vadd.xlane.f32.xlu0 %v1760
    %v1768 = vpop.xlane.xlu0 %1767
    %v1769 = vmul.f32 %v1762, %v166
    %v1770 = vmul.f32 %v1764, %v166
    %v1771 = vmul.f32 %v1766, %v166
    %v1772 = vmul.f32 %v1768, %v166
    %v1773 = vmul.f32 %v1753, %v1753
    %v1774 = vmul.f32 %v1754, %v1754
    %v1775 = vmul.f32 %v1755, %v1755
    %v1776 = vmul.f32 %v1756, %v1756
    %v1777 = vsub.f32 %v1769, %v1773
    %v1778 = vsub.f32 %v1770, %v1774
    %v1779 = vsub.f32 %v1771, %v1775
    %v1780 = vsub.f32 %v1772, %v1776
    %v1781 = vsub.f32 %v1739, %v1753
    %v1782 = vsub.f32 %v1740, %v1754
    %v1783 = vsub.f32 %v1741, %v1755
    %v1784 = vsub.f32 %v1742, %v1756
    %v1785 = vadd.f32 %v1777, 1e-05
    %v1786 = vadd.f32 %v1778, 1e-05
    %v1787 = vadd.f32 %v1779, 1e-05
    %v1788 = vadd.f32 %v1780, 1e-05
    %v1789 = vrsqrt.pop %v1785
    %v1790 = vrsqrt.pop %v1786
    %v1791 = vrsqrt.pop %v1787
    %v1792 = vrsqrt.pop %v1788
    %v1793 = vmul.f32 %v1781, %v1789
    %v1794 = vmul.f32 %v1782, %v1790
    %v1795 = vmul.f32 %v1783, %v1791
    %v1796 = vmul.f32 %v1784, %v1792
    %v1798 = vlaneseq
    %v1799 = vshrl.u32 %v1798, 7
    %v1800 = vsub.s32 0, %v1799
    %v1801 = vrot.slane %v1743, %v1800
    %v1803 = vmul.f32 %v1793, %v1801
    %v1804 = vmul.f32 %v1794, %v1801
    %v1805 = vmul.f32 %v1795, %v1801
    %v1806 = vmul.f32 %v1796, %v1801
    %v1808 = vlaneseq
    %v1809 = vshrl.u32 %v1808, 7
    %v1810 = vsub.s32 0, %v1809
    %v1811 = vrot.slane %v1744, %v1810
    %v1813 = vadd.f32 %v1803, %v1811
    %v1814 = vadd.f32 %v1804, %v1811
    %v1815 = vadd.f32 %v1805, %v1811
    %v1816 = vadd.f32 %v1806, %v1811
    %v1817 = vpack.c.bf16 %v1814, %v1813
    %v1818 = vpack.c.bf16 %v1816, %v1815
    %v1819 = vld [vmem:[#allocation14] sm:$0xff]
    %v1820 = vld [vmem:[#allocation14 + $0x8] sm:$0xff]
    %v1821 = vld [vmem:[#allocation14 + $0x10] sm:$0xff]
    %v1822 = vld [vmem:[#allocation14 + $0x18] sm:$0xff]
    %v1823 = vld [vmem:[#allocation14 + $0x20] sm:$0xff]
    %v1824 = vld [vmem:[#allocation14 + $0x28] sm:$0xff]
    %v1825 = vld [vmem:[#allocation14 + $0x30] sm:$0xff]
    %v1826 = vld [vmem:[#allocation14 + $0x38] sm:$0xff]
    %v1827 = vld [vmem:[#allocation14 + $0x40] sm:$0xff]
    %v1828 = vld [vmem:[#allocation14 + $0x48] sm:$0xff]
    %v1829 = vld [vmem:[#allocation14 + $0x50] sm:$0xff]
    %v1830 = vld [vmem:[#allocation14 + $0x58] sm:$0xff]
    %v1831 = vld [vmem:[#allocation14 + $0x60] sm:$0xff]
    %v1832 = vld [vmem:[#allocation14 + $0x68] sm:$0xff]
    %v1833 = vld [vmem:[#allocation14 + $0x70] sm:$0xff]
    %v1834 = vld [vmem:[#allocation14 + $0x78] sm:$0xff]
    %v1835 = vld [vmem:[#allocation14 + $0x80] sm:$0xff]
    %v1836 = vld [vmem:[#allocation14 + $0x88] sm:$0xff]
    %v1837 = vld [vmem:[#allocation14 + $0x90] sm:$0xff]
    %v1838 = vld [vmem:[#allocation14 + $0x98] sm:$0xff]
    %v1839 = vld [vmem:[#allocation14 + $0xa0] sm:$0xff]
    %v1840 = vld [vmem:[#allocation14 + $0xa8] sm:$0xff]
    %v1841 = vld [vmem:[#allocation14 + $0xb0] sm:$0xff]
    %v1842 = vld [vmem:[#allocation14 + $0xb8] sm:$0xff]
    %v1843 = vld [vmem:[#allocation14 + $0xc0] sm:$0xff]
    %v1844 = vld [vmem:[#allocation14 + $0xc8] sm:$0xff]
    %v1845 = vld [vmem:[#allocation14 + $0xd0] sm:$0xff]
    %v1846 = vld [vmem:[#allocation14 + $0xd8] sm:$0xff]
    %v1847 = vld [vmem:[#allocation14 + $0xe0] sm:$0xff]
    %v1848 = vld [vmem:[#allocation14 + $0xe8] sm:$0xff]
    %v1849 = vld [vmem:[#allocation14 + $0xf0] sm:$0xff]
    %v1850 = vld [vmem:[#allocation14 + $0xf8] sm:$0xff]
    %v1851 = vld [vmem:[%s11] sm:$0xf]
    %v1853 = vlaneseq
    %v1854 = vshrl.u32 %v1853, 7
    %v1855 = vsub.s32 0, %v1854
    %v1856 = vrot.slane %v1851, %v1855
    %v1857 = vlaneseq
    %v1858 = vshrl.u32 %v1857, 7
    %v1859 = vsub.s32 1, %v1858
    %v1860 = vrot.slane %v1851, %v1859
    %v1861 = vlaneseq
    %v1862 = vshrl.u32 %v1861, 7
    %v1863 = vsub.s32 2, %v1862
    %v1864 = vrot.slane %v1851, %v1863
    %v1865 = vlaneseq
    %v1866 = vshrl.u32 %v1865, 7
    %v1867 = vsub.s32 3, %v1866
    %v1868 = vrot.slane %v1851, %v1867
    %v1905 = vunpack.c.l.b16 %v1819
    %v1906 = vunpack.c.h.b16 %v1819
    %v1907 = vunpack.c.l.b16 %v1820
    %v1908 = vunpack.c.h.b16 %v1820
    %v1909 = vunpack.c.l.b16 %v1821
    %v1910 = vunpack.c.h.b16 %v1821
    %v1911 = vunpack.c.l.b16 %v1822
    %v1912 = vunpack.c.h.b16 %v1822
    %v1913 = vunpack.c.l.b16 %v1823
    %v1914 = vunpack.c.h.b16 %v1823
    %v1915 = vunpack.c.l.b16 %v1824
    %v1916 = vunpack.c.h.b16 %v1824
    %v1917 = vunpack.c.l.b16 %v1825
    %v1918 = vunpack.c.h.b16 %v1825
    %v1919 = vunpack.c.l.b16 %v1826
    %v1920 = vunpack.c.h.b16 %v1826
    %v1921 = vunpack.c.l.b16 %v1827
    %v1922 = vunpack.c.h.b16 %v1827
    %v1923 = vunpack.c.l.b16 %v1828
    %v1924 = vunpack.c.h.b16 %v1828
    %v1925 = vunpack.c.l.b16 %v1829
    %v1926 = vunpack.c.h.b16 %v1829
    %v1927 = vunpack.c.l.b16 %v1830
    %v1928 = vunpack.c.h.b16 %v1830
    %v1929 = vunpack.c.l.b16 %v1831
    %v1930 = vunpack.c.h.b16 %v1831
    %v1931 = vunpack.c.l.b16 %v1832
    %v1932 = vunpack.c.h.b16 %v1832
    %v1933 = vunpack.c.l.b16 %v1833
    %v1934 = vunpack.c.h.b16 %v1833
    %v1935 = vunpack.c.l.b16 %v1834
    %v1936 = vunpack.c.h.b16 %v1834
    %v1937 = vunpack.c.l.b16 %v1835
    %v1938 = vunpack.c.h.b16 %v1835
    %v1939 = vunpack.c.l.b16 %v1836
    %v1940 = vunpack.c.h.b16 %v1836
    %v1941 = vunpack.c.l.b16 %v1837
    %v1942 = vunpack.c.h.b16 %v1837
    %v1943 = vunpack.c.l.b16 %v1838
    %v1944 = vunpack.c.h.b16 %v1838
    %v1945 = vunpack.c.l.b16 %v1839
    %v1946 = vunpack.c.h.b16 %v1839
    %v1947 = vunpack.c.l.b16 %v1840
    %v1948 = vunpack.c.h.b16 %v1840
    %v1949 = vunpack.c.l.b16 %v1841
    %v1950 = vunpack.c.h.b16 %v1841
    %v1951 = vunpack.c.l.b16 %v1842
    %v1952 = vunpack.c.h.b16 %v1842
    %v1953 = vunpack.c.l.b16 %v1843
    %v1954 = vunpack.c.h.b16 %v1843
    %v1955 = vunpack.c.l.b16 %v1844
    %v1956 = vunpack.c.h.b16 %v1844
    %v1957 = vunpack.c.l.b16 %v1845
    %v1958 = vunpack.c.h.b16 %v1845
    %v1959 = vunpack.c.l.b16 %v1846
    %v1960 = vunpack.c.h.b16 %v1846
    %v1961 = vunpack.c.l.b16 %v1847
    %v1962 = vunpack.c.h.b16 %v1847
    %v1963 = vunpack.c.l.b16 %v1848
    %v1964 = vunpack.c.h.b16 %v1848
    %v1965 = vunpack.c.l.b16 %v1849
    %v1966 = vunpack.c.h.b16 %v1849
    %v1967 = vunpack.c.l.b16 %v1850
    %v1968 = vunpack.c.h.b16 %v1850
    %v1969 = vpack.c.b16 %v1909, %v1905
    %v1970 = vpack.c.b16 %v1910, %v1906
    %v1971 = vpack.c.b16 %v1911, %v1907
    %v1972 = vpack.c.b16 %v1912, %v1908
    %v1973 = vpack.c.b16 %v1917, %v1913
    %v1974 = vpack.c.b16 %v1918, %v1914
    %v1975 = vpack.c.b16 %v1919, %v1915
    %v1976 = vpack.c.b16 %v1920, %v1916
    %v1977 = vpack.c.b16 %v1925, %v1921
    %v1978 = vpack.c.b16 %v1926, %v1922
    %v1979 = vpack.c.b16 %v1927, %v1923
    %v1980 = vpack.c.b16 %v1928, %v1924
    %v1981 = vpack.c.b16 %v1933, %v1929
    %v1982 = vpack.c.b16 %v1934, %v1930
    %v1983 = vpack.c.b16 %v1935, %v1931
    %v1984 = vpack.c.b16 %v1936, %v1932
    %v1985 = vpack.c.b16 %v1941, %v1937
    %v1986 = vpack.c.b16 %v1942, %v1938
    %v1987 = vpack.c.b16 %v1943, %v1939
    %v1988 = vpack.c.b16 %v1944, %v1940
    %v1989 = vpack.c.b16 %v1949, %v1945
    %v1990 = vpack.c.b16 %v1950, %v1946
    %v1991 = vpack.c.b16 %v1951, %v1947
    %v1992 = vpack.c.b16 %v1952, %v1948
    %v1993 = vpack.c.b16 %v1957, %v1953
    %v1994 = vpack.c.b16 %v1958, %v1954
    %v1995 = vpack.c.b16 %v1959, %v1955
    %v1996 = vpack.c.b16 %v1960, %v1956
    %v1997 = vpack.c.b16 %v1965, %v1961
    %v1998 = vpack.c.b16 %v1966, %v1962
    %v1999 = vpack.c.b16 %v1967, %v1963
    %v2000 = vpack.c.b16 %v1968, %v1964
    %2033 = vmatprep.subr.bf16.mxu0 %v1998
    %2034 = vmatpush1.bf16.msra.mxu0 %v1997
    %2035 = vmatprep.subr.bf16.mxu0 %v1994
    %2036 = vmatpush1.bf16.msra.mxu0 %v1993
    %2037 = vmatprep.subr.bf16.mxu0 %v1990
    %2038 = vmatpush1.bf16.msra.mxu0 %v1989
    %2039 = vmatprep.subr.bf16.mxu0 %v1986
    %2040 = vmatpush1.bf16.msra.mxu0 %v1985
    %2041 = vmatprep.subr.bf16.mxu0 %v1982
    %2042 = vmatpush1.bf16.msra.mxu0 %v1981
    %2043 = vmatprep.subr.bf16.mxu0 %v1978
    %2044 = vmatpush1.bf16.msra.mxu0 %v1977
    %2045 = vmatprep.subr.bf16.mxu0 %v1974
    %2046 = vmatpush1.bf16.msra.mxu0 %v1973
    %2047 = vmatprep.subr.bf16.mxu0 %v1970
    %2048 = vmatpush1.bf16.msra.mxu0 %v1969
    %2049 = vmatprep.subr.bf16.mxu0 0
    %2050 = vmatpush2.bf16.msra.mxu0 0
    %2051 = vmatprep.subr.bf16.mxu0 0
    %2052 = vmatpush2.bf16.msra.mxu0 0
    %2053 = vmatprep.subr.bf16.mxu0 0
    %2054 = vmatpush2.bf16.msra.mxu0 0
    %2055 = vmatprep.subr.bf16.mxu0 0
    %2056 = vmatpush2.bf16.msra.mxu0 0
    %2057 = vmatprep.subr.bf16.mxu0 0
    %2058 = vmatpush2.bf16.msra.mxu0 0
    %2059 = vmatprep.subr.bf16.mxu0 0
    %2060 = vmatpush2.bf16.msra.mxu0 0
    %2061 = vmatprep.subr.bf16.mxu0 0
    %2062 = vmatpush2.bf16.msra.mxu0 0
    %2063 = vmatprep.subr.bf16.mxu0 0
    %2064 = vmatpush2.bf16.msra.mxu0 0
    %2065 = vmatprep.mubr.bf16.mxu0 0
    %2066 = vmatmul.mubr.bf16.gmra.mxu0 %v1817
    %v2067 = vpop.f32.mrf.mxu0
    %v2068 = vadd.f32 %v1856, %v2067
    %v2069 = vpop.f32.mrf.mxu0
    %v2070 = vadd.f32 %v1860, %v2069
    %v2071 = vpop.f32.mrf.mxu0
    %v2072 = vadd.f32 %v1856, %v2071
    %v2073 = vpop.f32.mrf.mxu0
    %v2074 = vadd.f32 %v1860, %v2073
    %2075 = vmatprep.mubr.bf16.mxu0 0
    %2076 = vmatmul.mubr.bf16.gmra.mxu0 %v1818
    %v2077 = vpop.f32.mrf.mxu0
    %v2078 = vadd.f32 %v1856, %v2077
    %v2079 = vpop.f32.mrf.mxu0
    %v2080 = vadd.f32 %v1860, %v2079
    %v2081 = vpop.f32.mrf.mxu0
    %v2082 = vadd.f32 %v1856, %v2081
    %v2083 = vpop.f32.mrf.mxu0
    %v2084 = vadd.f32 %v1860, %v2083
    %2085 = vdwg.mxu0
    %2086 = vmatprep.subr.bf16.mxu0 %v2000
    %2087 = vmatpush1.bf16.msra.mxu0 %v1999
    %2088 = vmatprep.subr.bf16.mxu0 %v1996
    %2089 = vmatpush1.bf16.msra.mxu0 %v1995
    %2090 = vmatprep.subr.bf16.mxu0 %v1992
    %2091 = vmatpush1.bf16.msra.mxu0 %v1991
    %2092 = vmatprep.subr.bf16.mxu0 %v1988
    %2093 = vmatpush1.bf16.msra.mxu0 %v1987
    %2094 = vmatprep.subr.bf16.mxu0 %v1984
    %2095 = vmatpush1.bf16.msra.mxu0 %v1983
    %2096 = vmatprep.subr.bf16.mxu0 %v1980
    %2097 = vmatpush1.bf16.msra.mxu0 %v1979
    %2098 = vmatprep.subr.bf16.mxu0 %v1976
    %2099 = vmatpush1.bf16.msra.mxu0 %v1975
    %2100 = vmatprep.subr.bf16.mxu0 %v1972
    %2101 = vmatpush1.bf16.msra.mxu0 %v1971
    %2102 = vmatprep.subr.bf16.mxu0 0
    %2103 = vmatpush2.bf16.msra.mxu0 0
    %2104 = vmatprep.subr.bf16.mxu0 0
    %2105 = vmatpush2.bf16.msra.mxu0 0
    %2106 = vmatprep.subr.bf16.mxu0 0
    %2107 = vmatpush2.bf16.msra.mxu0 0
    %2108 = vmatprep.subr.bf16.mxu0 0
    %2109 = vmatpush2.bf16.msra.mxu0 0
    %2110 = vmatprep.subr.bf16.mxu0 0
    %2111 = vmatpush2.bf16.msra.mxu0 0
    %2112 = vmatprep.subr.bf16.mxu0 0
    %2113 = vmatpush2.bf16.msra.mxu0 0
    %2114 = vmatprep.subr.bf16.mxu0 0
    %2115 = vmatpush2.bf16.msra.mxu0 0
    %2116 = vmatprep.subr.bf16.mxu0 0
    %2117 = vmatpush2.bf16.msra.mxu0 0
    %2118 = vmatprep.mubr.bf16.mxu0 0
    %2119 = vmatmul.mubr.bf16.gmra.mxu0 %v1817
    %v2120 = vpop.f32.mrf.mxu0
    %v2121 = vadd.f32 %v1864, %v2120
    %v2122 = vpop.f32.mrf.mxu0
    %v2123 = vadd.f32 %v1868, %v2122
    %v2124 = vpop.f32.mrf.mxu0
    %v2125 = vadd.f32 %v1864, %v2124
    %v2126 = vpop.f32.mrf.mxu0
    %v2127 = vadd.f32 %v1868, %v2126
    %2128 = vmatprep.mubr.bf16.mxu0 0
    %2129 = vmatmul.mubr.bf16.gmra.mxu0 %v1818
    %v2130 = vpop.f32.mrf.mxu0
    %v2131 = vadd.f32 %v1864, %v2130
    %v2132 = vpop.f32.mrf.mxu0
    %v2133 = vadd.f32 %v1868, %v2132
    %v2134 = vpop.f32.mrf.mxu0
    %v2135 = vadd.f32 %v1864, %v2134
    %v2136 = vpop.f32.mrf.mxu0
    %v2137 = vadd.f32 %v1868, %v2136
    %2138 = vdwg.mxu0
    %v2139 = vmax.f32 %v2068, 0.0
    %v2140 = vmax.f32 %v2070, 0.0
    %v2141 = vmax.f32 %v2121, 0.0
    %v2142 = vmax.f32 %v2123, 0.0
    %v2143 = vmax.f32 %v2072, 0.0
    %v2144 = vmax.f32 %v2074, 0.0
    %v2145 = vmax.f32 %v2125, 0.0
    %v2146 = vmax.f32 %v2127, 0.0
    %v2147 = vmax.f32 %v2078, 0.0
    %v2148 = vmax.f32 %v2080, 0.0
    %v2149 = vmax.f32 %v2131, 0.0
    %v2150 = vmax.f32 %v2133, 0.0
    %v2151 = vmax.f32 %v2082, 0.0
    %v2152 = vmax.f32 %v2084, 0.0
    %v2153 = vmax.f32 %v2135, 0.0
    %v2154 = vmax.f32 %v2137, 0.0
    %v2155 = vpack.c.bf16 %v2143, %v2139
    %v2156 = vpack.c.bf16 %v2144, %v2140
    %v2157 = vpack.c.bf16 %v2145, %v2141
    %v2158 = vpack.c.bf16 %v2146, %v2142
    %v2159 = vpack.c.bf16 %v2151, %v2147
    %v2160 = vpack.c.bf16 %v2152, %v2148
    %v2161 = vpack.c.bf16 %v2153, %v2149
    %v2162 = vpack.c.bf16 %v2154, %v2150
    %v2163 = vld [vmem:[#allocation15] sm:$0xf]
    %v2164 = vld [vmem:[#allocation15 + $0x4] sm:$0xf]
    %v2165 = vld [vmem:[#allocation15 + $0x8] sm:$0xf]
    %v2166 = vld [vmem:[#allocation15 + $0xc] sm:$0xf]
    %v2167 = vld [vmem:[#allocation15 + $0x10] sm:$0xf]
    %v2168 = vld [vmem:[#allocation15 + $0x14] sm:$0xf]
    %v2169 = vld [vmem:[#allocation15 + $0x18] sm:$0xf]
    %v2170 = vld [vmem:[#allocation15 + $0x1c] sm:$0xf]
    %v2171 = vld [vmem:[#allocation15 + $0x20] sm:$0xf]
    %v2172 = vld [vmem:[#allocation15 + $0x24] sm:$0xf]
    %v2173 = vld [vmem:[#allocation15 + $0x28] sm:$0xf]
    %v2174 = vld [vmem:[#allocation15 + $0x2c] sm:$0xf]
    %v2175 = vld [vmem:[#allocation15 + $0x30] sm:$0xf]
    %v2176 = vld [vmem:[#allocation15 + $0x34] sm:$0xf]
    %v2177 = vld [vmem:[#allocation15 + $0x38] sm:$0xf]
    %v2178 = vld [vmem:[#allocation15 + $0x3c] sm:$0xf]
    %v2179 = vld [vmem:[#allocation15 + $0x40] sm:$0xf]
    %v2180 = vld [vmem:[#allocation15 + $0x44] sm:$0xf]
    %v2181 = vld [vmem:[#allocation15 + $0x48] sm:$0xf]
    %v2182 = vld [vmem:[#allocation15 + $0x4c] sm:$0xf]
    %v2183 = vld [vmem:[#allocation15 + $0x50] sm:$0xf]
    %v2184 = vld [vmem:[#allocation15 + $0x54] sm:$0xf]
    %v2185 = vld [vmem:[#allocation15 + $0x58] sm:$0xf]
    %v2186 = vld [vmem:[#allocation15 + $0x5c] sm:$0xf]
    %v2187 = vld [vmem:[#allocation15 + $0x60] sm:$0xf]
    %v2188 = vld [vmem:[#allocation15 + $0x64] sm:$0xf]
    %v2189 = vld [vmem:[#allocation15 + $0x68] sm:$0xf]
    %v2190 = vld [vmem:[#allocation15 + $0x6c] sm:$0xf]
    %v2191 = vld [vmem:[#allocation15 + $0x70] sm:$0xf]
    %v2192 = vld [vmem:[#allocation15 + $0x74] sm:$0xf]
    %v2193 = vld [vmem:[#allocation15 + $0x78] sm:$0xf]
    %v2194 = vld [vmem:[#allocation15 + $0x7c] sm:$0xf]
    %v2195 = vld [vmem:[#allocation15 + $0x80] sm:$0xf]
    %v2196 = vld [vmem:[#allocation15 + $0x84] sm:$0xf]
    %v2197 = vld [vmem:[#allocation15 + $0x88] sm:$0xf]
    %v2198 = vld [vmem:[#allocation15 + $0x8c] sm:$0xf]
    %v2199 = vld [vmem:[#allocation15 + $0x90] sm:$0xf]
    %v2200 = vld [vmem:[#allocation15 + $0x94] sm:$0xf]
    %v2201 = vld [vmem:[#allocation15 + $0x98] sm:$0xf]
    %v2202 = vld [vmem:[#allocation15 + $0x9c] sm:$0xf]
    %v2203 = vld [vmem:[#allocation15 + $0xa0] sm:$0xf]
    %v2204 = vld [vmem:[#allocation15 + $0xa4] sm:$0xf]
    %v2205 = vld [vmem:[#allocation15 + $0xa8] sm:$0xf]
    %v2206 = vld [vmem:[#allocation15 + $0xac] sm:$0xf]
    %v2207 = vld [vmem:[#allocation15 + $0xb0] sm:$0xf]
    %v2208 = vld [vmem:[#allocation15 + $0xb4] sm:$0xf]
    %v2209 = vld [vmem:[#allocation15 + $0xb8] sm:$0xf]
    %v2210 = vld [vmem:[#allocation15 + $0xbc] sm:$0xf]
    %v2211 = vld [vmem:[#allocation15 + $0xc0] sm:$0xf]
    %v2212 = vld [vmem:[#allocation15 + $0xc4] sm:$0xf]
    %v2213 = vld [vmem:[#allocation15 + $0xc8] sm:$0xf]
    %v2214 = vld [vmem:[#allocation15 + $0xcc] sm:$0xf]
    %v2215 = vld [vmem:[#allocation15 + $0xd0] sm:$0xf]
    %v2216 = vld [vmem:[#allocation15 + $0xd4] sm:$0xf]
    %v2217 = vld [vmem:[#allocation15 + $0xd8] sm:$0xf]
    %v2218 = vld [vmem:[#allocation15 + $0xdc] sm:$0xf]
    %v2219 = vld [vmem:[#allocation15 + $0xe0] sm:$0xf]
    %v2220 = vld [vmem:[#allocation15 + $0xe4] sm:$0xf]
    %v2221 = vld [vmem:[#allocation15 + $0xe8] sm:$0xf]
    %v2222 = vld [vmem:[#allocation15 + $0xec] sm:$0xf]
    %v2223 = vld [vmem:[#allocation15 + $0xf0] sm:$0xf]
    %v2224 = vld [vmem:[#allocation15 + $0xf4] sm:$0xf]
    %v2225 = vld [vmem:[#allocation15 + $0xf8] sm:$0xf]
    %v2226 = vld [vmem:[#allocation15 + $0xfc] sm:$0xf]
    %v2227 = vld [vmem:[%s13] sm:$0x1]
    %v2229 = vlaneseq
    %v2230 = vshrl.u32 %v2229, 7
    %v2231 = vsub.s32 0, %v2230
    %v2232 = vrot.slane %v2227, %v2231
    %v2298 = vunpack.c.l.b16 %v2163
    %v2299 = vunpack.c.l.b16 %v2164
    %v2300 = vunpack.c.l.b16 %v2165
    %v2301 = vunpack.c.l.b16 %v2166
    %v2302 = vunpack.c.l.b16 %v2167
    %v2303 = vunpack.c.l.b16 %v2168
    %v2304 = vunpack.c.l.b16 %v2169
    %v2305 = vunpack.c.l.b16 %v2170
    %v2306 = vunpack.c.l.b16 %v2171
    %v2307 = vunpack.c.l.b16 %v2172
    %v2308 = vunpack.c.l.b16 %v2173
    %v2309 = vunpack.c.l.b16 %v2174
    %v2310 = vunpack.c.l.b16 %v2175
    %v2311 = vunpack.c.l.b16 %v2176
    %v2312 = vunpack.c.l.b16 %v2177
    %v2313 = vunpack.c.l.b16 %v2178
    %v2314 = vunpack.c.l.b16 %v2179
    %v2315 = vunpack.c.l.b16 %v2180
    %v2316 = vunpack.c.l.b16 %v2181
    %v2317 = vunpack.c.l.b16 %v2182
    %v2318 = vunpack.c.l.b16 %v2183
    %v2319 = vunpack.c.l.b16 %v2184
    %v2320 = vunpack.c.l.b16 %v2185
    %v2321 = vunpack.c.l.b16 %v2186
    %v2322 = vunpack.c.l.b16 %v2187
    %v2323 = vunpack.c.l.b16 %v2188
    %v2324 = vunpack.c.l.b16 %v2189
    %v2325 = vunpack.c.l.b16 %v2190
    %v2326 = vunpack.c.l.b16 %v2191
    %v2327 = vunpack.c.l.b16 %v2192
    %v2328 = vunpack.c.l.b16 %v2193
    %v2329 = vunpack.c.l.b16 %v2194
    %v2330 = vunpack.c.l.b16 %v2195
    %v2331 = vunpack.c.l.b16 %v2196
    %v2332 = vunpack.c.l.b16 %v2197
    %v2333 = vunpack.c.l.b16 %v2198
    %v2334 = vunpack.c.l.b16 %v2199
    %v2335 = vunpack.c.l.b16 %v2200
    %v2336 = vunpack.c.l.b16 %v2201
    %v2337 = vunpack.c.l.b16 %v2202
    %v2338 = vunpack.c.l.b16 %v2203
    %v2339 = vunpack.c.l.b16 %v2204
    %v2340 = vunpack.c.l.b16 %v2205
    %v2341 = vunpack.c.l.b16 %v2206
    %v2342 = vunpack.c.l.b16 %v2207
    %v2343 = vunpack.c.l.b16 %v2208
    %v2344 = vunpack.c.l.b16 %v2209
    %v2345 = vunpack.c.l.b16 %v2210
    %v2346 = vunpack.c.l.b16 %v2211
    %v2347 = vunpack.c.l.b16 %v2212
    %v2348 = vunpack.c.l.b16 %v2213
    %v2349 = vunpack.c.l.b16 %v2214
    %v2350 = vunpack.c.l.b16 %v2215
    %v2351 = vunpack.c.l.b16 %v2216
    %v2352 = vunpack.c.l.b16 %v2217
    %v2353 = vunpack.c.l.b16 %v2218
    %v2354 = vunpack.c.l.b16 %v2219
    %v2355 = vunpack.c.l.b16 %v2220
    %v2356 = vunpack.c.l.b16 %v2221
    %v2357 = vunpack.c.l.b16 %v2222
    %v2358 = vunpack.c.l.b16 %v2223
    %v2359 = vunpack.c.l.b16 %v2224
    %v2360 = vunpack.c.l.b16 %v2225
    %v2361 = vunpack.c.l.b16 %v2226
    %v2362 = vpack.c.b16 %v2299, %v2298
    %v2363 = vpack.c.b16 %v2301, %v2300
    %v2364 = vpack.c.b16 %v2303, %v2302
    %v2365 = vpack.c.b16 %v2305, %v2304
    %v2366 = vpack.c.b16 %v2307, %v2306
    %v2367 = vpack.c.b16 %v2309, %v2308
    %v2368 = vpack.c.b16 %v2311, %v2310
    %v2369 = vpack.c.b16 %v2313, %v2312
    %v2370 = vpack.c.b16 %v2315, %v2314
    %v2371 = vpack.c.b16 %v2317, %v2316
    %v2372 = vpack.c.b16 %v2319, %v2318
    %v2373 = vpack.c.b16 %v2321, %v2320
    %v2374 = vpack.c.b16 %v2323, %v2322
    %v2375 = vpack.c.b16 %v2325, %v2324
    %v2376 = vpack.c.b16 %v2327, %v2326
    %v2377 = vpack.c.b16 %v2329, %v2328
    %v2378 = vpack.c.b16 %v2331, %v2330
    %v2379 = vpack.c.b16 %v2333, %v2332
    %v2380 = vpack.c.b16 %v2335, %v2334
    %v2381 = vpack.c.b16 %v2337, %v2336
    %v2382 = vpack.c.b16 %v2339, %v2338
    %v2383 = vpack.c.b16 %v2341, %v2340
    %v2384 = vpack.c.b16 %v2343, %v2342
    %v2385 = vpack.c.b16 %v2345, %v2344
    %v2386 = vpack.c.b16 %v2347, %v2346
    %v2387 = vpack.c.b16 %v2349, %v2348
    %v2388 = vpack.c.b16 %v2351, %v2350
    %v2389 = vpack.c.b16 %v2353, %v2352
    %v2390 = vpack.c.b16 %v2355, %v2354
    %v2391 = vpack.c.b16 %v2357, %v2356
    %v2392 = vpack.c.b16 %v2359, %v2358
    %v2393 = vpack.c.b16 %v2361, %v2360
    %2426 = vmatprep.subr.bf16.mxu0 0
    %2427 = vmatpush1.bf16.msra.mxu0 %v2369
    %2428 = vmatprep.subr.bf16.mxu0 0
    %2429 = vmatpush1.bf16.msra.mxu0 %v2368
    %2430 = vmatprep.subr.bf16.mxu0 0
    %2431 = vmatpush1.bf16.msra.mxu0 %v2367
    %2432 = vmatprep.subr.bf16.mxu0 0
    %2433 = vmatpush1.bf16.msra.mxu0 %v2366
    %2434 = vmatprep.subr.bf16.mxu0 0
    %2435 = vmatpush1.bf16.msra.mxu0 %v2365
    %2436 = vmatprep.subr.bf16.mxu0 0
    %2437 = vmatpush1.bf16.msra.mxu0 %v2364
    %2438 = vmatprep.subr.bf16.mxu0 0
    %2439 = vmatpush1.bf16.msra.mxu0 %v2363
    %2440 = vmatprep.subr.bf16.mxu0 0
    %2441 = vmatpush1.bf16.msra.mxu0 %v2362
    %2442 = vmatprep.subr.bf16.mxu0 0
    %2443 = vmatpush2.bf16.msra.mxu0 %v2377
    %2444 = vmatprep.subr.bf16.mxu0 0
    %2445 = vmatpush2.bf16.msra.mxu0 %v2376
    %2446 = vmatprep.subr.bf16.mxu0 0
    %2447 = vmatpush2.bf16.msra.mxu0 %v2375
    %2448 = vmatprep.subr.bf16.mxu0 0
    %2449 = vmatpush2.bf16.msra.mxu0 %v2374
    %2450 = vmatprep.subr.bf16.mxu0 0
    %2451 = vmatpush2.bf16.msra.mxu0 %v2373
    %2452 = vmatprep.subr.bf16.mxu0 0
    %2453 = vmatpush2.bf16.msra.mxu0 %v2372
    %2454 = vmatprep.subr.bf16.mxu0 0
    %2455 = vmatpush2.bf16.msra.mxu0 %v2371
    %2456 = vmatprep.subr.bf16.mxu0 0
    %2457 = vmatpush2.bf16.msra.mxu0 %v2370
    %2458 = vmatprep.mubr.bf16.mxu0 %v2156
    %2459 = vmatmul.mubr.bf16.gmra.mxu0 %v2155
    %v2460 = vpop.f32.mrf.mxu0
    %v2461 = vadd.f32 %v2232, %v2460
    %v2462 = vpop.f32.mrf.mxu0
    %v2463 = vpop.f32.mrf.mxu0
    %v2464 = vadd.f32 %v2232, %v2463
    %v2465 = vpop.f32.mrf.mxu0
    %2466 = vmatprep.mubr.bf16.mxu0 %v2160
    %2467 = vmatmul.mubr.bf16.gmra.mxu0 %v2159
    %v2468 = vpop.f32.mrf.mxu0
    %v2469 = vadd.f32 %v2232, %v2468
    %v2470 = vpop.f32.mrf.mxu0
    %v2471 = vpop.f32.mrf.mxu0
    %v2472 = vadd.f32 %v2232, %v2471
    %v2473 = vpop.f32.mrf.mxu0
    %2474 = vdwg.mxu0
    %2475 = vmatprep.subr.bf16.mxu0 0
    %2476 = vmatpush1.bf16.msra.mxu0 %v2385
    %2477 = vmatprep.subr.bf16.mxu0 0
    %2478 = vmatpush1.bf16.msra.mxu0 %v2384
    %2479 = vmatprep.subr.bf16.mxu0 0
    %2480 = vmatpush1.bf16.msra.mxu0 %v2383
    %2481 = vmatprep.subr.bf16.mxu0 0
    %2482 = vmatpush1.bf16.msra.mxu0 %v2382
    %2483 = vmatprep.subr.bf16.mxu0 0
    %2484 = vmatpush1.bf16.msra.mxu0 %v2381
    %2485 = vmatprep.subr.bf16.mxu0 0
    %2486 = vmatpush1.bf16.msra.mxu0 %v2380
    %2487 = vmatprep.subr.bf16.mxu0 0
    %2488 = vmatpush1.bf16.msra.mxu0 %v2379
    %2489 = vmatprep.subr.bf16.mxu0 0
    %2490 = vmatpush1.bf16.msra.mxu0 %v2378
    %2491 = vmatprep.subr.bf16.mxu0 0
    %2492 = vmatpush2.bf16.msra.mxu0 %v2393
    %2493 = vmatprep.subr.bf16.mxu0 0
    %2494 = vmatpush2.bf16.msra.mxu0 %v2392
    %2495 = vmatprep.subr.bf16.mxu0 0
    %2496 = vmatpush2.bf16.msra.mxu0 %v2391
    %2497 = vmatprep.subr.bf16.mxu0 0
    %2498 = vmatpush2.bf16.msra.mxu0 %v2390
    %2499 = vmatprep.subr.bf16.mxu0 0
    %2500 = vmatpush2.bf16.msra.mxu0 %v2389
    %2501 = vmatprep.subr.bf16.mxu0 0
    %2502 = vmatpush2.bf16.msra.mxu0 %v2388
    %2503 = vmatprep.subr.bf16.mxu0 0
    %2504 = vmatpush2.bf16.msra.mxu0 %v2387
    %2505 = vmatprep.subr.bf16.mxu0 0
    %2506 = vmatpush2.bf16.msra.mxu0 %v2386
    %2507 = vmatprep.mubr.bf16.mxu0 %v2158
    %2508 = vmatmul.mubr.bf16.gmra.mxu0 %v2157
    %v2509 = vpop.f32.mrf.mxu0
    %v2510 = vadd.f32 %v2461, %v2509
    %v2511 = vpop.f32.mrf.mxu0
    %v2512 = vpop.f32.mrf.mxu0
    %v2513 = vadd.f32 %v2464, %v2512
    %v2514 = vpop.f32.mrf.mxu0
    %2515 = vmatprep.mubr.bf16.mxu0 %v2162
    %2516 = vmatmul.mubr.bf16.gmra.mxu0 %v2161
    %v2517 = vpop.f32.mrf.mxu0
    %v2518 = vadd.f32 %v2469, %v2517
    %v2519 = vpop.f32.mrf.mxu0
    %v2520 = vpop.f32.mrf.mxu0
    %v2521 = vadd.f32 %v2472, %v2520
    %v2522 = vpop.f32.mrf.mxu0
    %2523 = vdwg.mxu0
    %v2524 = vadd.f32 %v1739, %v2510
    %v2525 = vadd.f32 %v1740, %v2513
    %v2526 = vadd.f32 %v1741, %v2518
    %v2527 = vadd.f32 %v1742, %v2521
    %2528 = vst [vmem:[#allocation17] sm:$0xff] %v2524
    %2529 = vst [vmem:[#allocation17 + $0x8] sm:$0xff] %v2525
    %2530 = vst [vmem:[#allocation17 + $0x10] sm:$0xff] %v2526
    %2531 = vst [vmem:[#allocation17 + $0x18] sm:$0xff] %v2527
    // Predicated region
    $region90: #{tpu_custom_call.1} parent=1 // pred_check
      _
    $region91: #{tpu_custom_call.1} parent=1 // pred_check_branch
      %2533 = sbr.rel (0) target = $region93
    $region92: #{tpu_custom_call.1} parent=1 // pred_region
      %s2535 = ssub.s32 512, 512
      %2536 = vsyncadd [#allocation5], %s2535
      %s2537 = sshll.u32 [#allocation17], 4
      %s2538 = int_to_ptr.vmem [resolvable:$true] %s2537
      %2543 = dma.vmem_to_hbm [thread:$0]  %s2538, 512, %s14, [#allocation5], 128, 128, 8
    $region93: #{tpu_custom_call.1} parent=1 // pred_fallthru
      _
    // Predicated region
    $region94: #{tpu_custom_call.1} parent=1 // pred_check
      _
    $region95: #{tpu_custom_call.1} parent=1 // pred_check_branch
      %2545 = sbr.rel (0) target = $region97
    $region96: #{tpu_custom_call.1} parent=1 // pred_region
      %2546 = dma.done [#allocation5], 512
    $region97: #{tpu_custom_call.1} parent=1 // pred_fallthru
      _
    %2547 = vsyncpa [#allocation4], 1
    %2548 = vsyncpa [#allocation7], 1
    %2549 = vsyncpa [#allocation10], 1
    %2550 = vsyncpa [#allocation13], 1
    %2551 = vsyncpa [#allocation16], 1
    %2552 = vsyncpa [#allocation5], 1

</llo_original>
